<compile_context>
chip_gen: v5e
topology: v5e:2x2
jax: 0.10.0
libtpu: 0.0.40
codegen_flags: <defaults>
</compile_context>

<pallas_src>
import functools
import math

import jax
import jax.numpy as jnp
from jax.experimental import pallas as pl
from jax.experimental.pallas import tpu as pltpu

LN_EPS = 1e-5  # torch.nn.LayerNorm default


def _layernorm(x, w, b):
    mean = jnp.mean(x, axis=-1, keepdims=True)
    var = jnp.mean(jnp.square(x - mean), axis=-1, keepdims=True)
    return (x - mean) * jax.lax.rsqrt(var + LN_EPS) * w + b


def _gelu_exact(x):  # PyTorch nn.GELU default (erf-based)
    return 0.5 * x * (1.0 + jax.lax.erf(x * (1.0 / math.sqrt(2.0))))


# ----------------------------------------------------------------------------
# Fused kernel: one grid step == one transformer layer (attention + FF).
# ----------------------------------------------------------------------------
def _transformer_kernel(
        x_ref, qmask_ref,
        a_lnw_ref, a_lnb_ref, wq_ref, wk_ref, wv_ref, wo_ref, bo_ref,
        f_lnw_ref, f_lnb_ref, w1_ref, b1_ref, w2_ref, b2_ref,
        n_lnw_ref, n_lnb_ref,
        o_ref,
        x_acc_ref,
        *, batch, seq, heads, dim_head):
    layer = pl.program_id(0)
    inner = heads * dim_head
    bn = batch * seq

    @pl.when(layer == 0)
    def _load_input():
        x_acc_ref[...] = x_ref[...].astype(jnp.float32)

    x = x_acc_ref[...]                                      # (B*N, D) f32 resident

    # ------------------------- Attention (pre-LN) -------------------------
    xn = _layernorm(x, a_lnw_ref[0], a_lnb_ref[0])
    # w_qkv was split into three (D, inner) weights in the wrapper; the
    # softmax scale is pre-folded into wq.
    q = jnp.dot(xn, wq_ref[0], preferred_element_type=jnp.float32)
    k = jnp.dot(xn, wk_ref[0], preferred_element_type=jnp.float32)
    v = jnp.dot(xn, wv_ref[0], preferred_element_type=jnp.float32)

    q3 = q.reshape(batch, seq, inner)
    k3 = k.reshape(batch, seq, inner)
    v3 = v.reshape(batch, seq, inner)

    # Batch all heads through one block-diagonal-masked matmul:
    #   q_blk[b, h*N+n, :] keeps only head h's features of q[b, n, :],
    #   so scores[b, h*N+n, m] = <q[b,n,head h], k[b,m,head h]>.
    mask = qmask_ref[...]                                   # (H*N, inner) 0/1
    q_blk = jnp.concatenate([q3] * heads, axis=1) * mask    # (B, H*N, inner)
    s = jnp.einsum('bnk,bmk->bnm', q_blk, k3,
                   preferred_element_type=jnp.float32)      # (B, H*N, N)

    s = s - jnp.max(s, axis=-1, keepdims=True)              # stable softmax
    e = jnp.exp(s)
    p = e * pl.reciprocal(jnp.sum(e, axis=-1, keepdims=True), approx=True)

    o_all = jnp.einsum('bnm,bmk->bnk', p, v3,
                       preferred_element_type=jnp.float32)  # (B, H*N, inner)
    # Keep head h's features on head h's rows, then collapse the head groups:
    # the result is already in 'b n (h d)' layout (no per-head concat needed).
    o_heads = (o_all * mask).reshape(batch, heads, seq, inner)
    attn_out = jnp.sum(o_heads, axis=1).reshape(bn, inner)  # (B*N, inner)

    proj = jnp.dot(attn_out, wo_ref[0],
                   preferred_element_type=jnp.float32) + bo_ref[0]
    x = x + proj                                            # residual

    # ------------------------ FeedForward (pre-LN) ------------------------
    xn2 = _layernorm(x, f_lnw_ref[0], f_lnb_ref[0])
    h1 = jnp.dot(xn2, w1_ref[0], preferred_element_type=jnp.float32) + b1_ref[0]
    g = _gelu_exact(h1)
    y = jnp.dot(g, w2_ref[0], preferred_element_type=jnp.float32) + b2_ref[0]
    x = x + y                                               # residual

    x_acc_ref[...] = x

    # Final LayerNorm + the single HBM writeback, only at the last layer.
    @pl.when(layer == pl.num_programs(0) - 1)
    def _store_output():
        o_ref[...] = _layernorm(x, n_lnw_ref[...],
                                n_lnb_ref[...]).astype(o_ref.dtype)

    # TODO(synk): nn.Dropout layers (p=0.0) are identity at inference; omitted.


# ----------------------------------------------------------------------------
# Wrapper
# ----------------------------------------------------------------------------
def _layer_spec(shape):
    """Stacked (depth, *rest) -> per-layer block (1, *rest)."""
    rest = tuple(shape[1:])
    zeros = (0,) * len(rest)
    return pl.BlockSpec((1,) + rest, lambda l, _z=zeros: (l,) + _z)


def _const_spec(shape):
    """Full-array block, same block for every grid step (stays resident)."""
    nd = len(shape)
    return pl.BlockSpec(tuple(shape), lambda l, _nd=nd: (0,) * _nd)


def transformer_forward(x, params, heads, dim_head):
    """x: (B, N, D). Fully fused transformer: one pallas_call, grid=(depth,)."""
    B, N, D = x.shape
    inner = heads * dim_head
    layers = params["layers"]
    depth = len(layers)
    scale = dim_head ** (-0.5)

    # ---- Pack per-layer weights along a leading depth axis (trace-time). ----
    def stack(block, name):
        return jnp.stack([lyr[block][name] for lyr in layers])

    w_qkv = stack("attn", "w_qkv")                    # (depth, D, 3*inner)
    wq = w_qkv[:, :, 0 * inner:1 * inner] * scale     # fold softmax scale into q
    wk = w_qkv[:, :, 1 * inner:2 * inner]
    wv = w_qkv[:, :, 2 * inner:3 * inner]

    a_lnw = stack("attn", "ln_w")[:, None, :]         # (depth, 1, D)
    a_lnb = stack("attn", "ln_b")[:, None, :]
    wo = stack("attn", "w_out")                       # (depth, inner, D)
    bo = stack("attn", "b_out")[:, None, :]           # (depth, 1, D)

    f_lnw = stack("ff", "ln_w")[:, None, :]
    f_lnb = stack("ff", "ln_b")[:, None, :]
    w1 = stack("ff", "w1")                            # (depth, D, mlp)
    b1 = stack("ff", "b1")[:, None, :]                # (depth, 1, mlp)
    w2 = stack("ff", "w2")                            # (depth, mlp, D)
    b2 = stack("ff", "b2")[:, None, :]

    n_lnw = params["norm"]["ln_w"][None, :]           # (1, D)
    n_lnb = params["norm"]["ln_b"][None, :]

    # Block-diagonal head mask: row h*N+n belongs to head h, column h'*dh+f
    # belongs to head h'.
    row_head = jnp.arange(heads * N, dtype=jnp.int32) // N
    col_head = jnp.arange(inner, dtype=jnp.int32) // dim_head
    qmask = (row_head[:, None] == col_head[None, :]).astype(jnp.float32)

    x2 = x.reshape(B * N, D)

    inputs = (x2, qmask, a_lnw, a_lnb, wq, wk, wv, wo, bo,
              f_lnw, f_lnb, w1, b1, w2, b2, n_lnw, n_lnb)
    in_specs = [_const_spec(x2.shape), _const_spec(qmask.shape)]
    in_specs += [_layer_spec(a.shape) for a in (a_lnw, a_lnb, wq, wk, wv, wo,
                                                bo, f_lnw, f_lnb, w1, b1, w2,
                                                b2)]
    in_specs += [_const_spec(n_lnw.shape), _const_spec(n_lnb.shape)]

    kern = functools.partial(_transformer_kernel, batch=B, seq=N,
                             heads=heads, dim_head=dim_head)

    out = pl.pallas_call(
        kern,
        out_shape=jax.ShapeDtypeStruct((B * N, D), x.dtype),
        grid=(depth,),
        in_specs=in_specs,
        out_specs=_const_spec((B * N, D)),
        scratch_shapes=[pltpu.VMEM((B * N, D), jnp.float32)],
        compiler_params=pltpu.CompilerParams(
            # The layer axis carries the residual stream in VMEM scratch, so
            # it must be sequential ("arbitrary"). The whole problem is ~2 KB
            # of activations, so there is no useful parallel axis to shard
            # across v7x's two TensorCores.
            dimension_semantics=("arbitrary",)),
    )(*inputs)
    return out.reshape(B, N, D)


# ----------------------------------------------------------------------------
# Pure-JAX reference (independent formulation) for a numerical sanity check.
# ----------------------------------------------------------------------------
def transformer_reference(x, params, heads, dim_head):
    B, N, D = x.shape
    inner = heads * dim_head
    scale = dim_head ** (-0.5)
    for lyr in params["layers"]:
        a = lyr["attn"]
        xn = _layernorm(x, a["ln_w"], a["ln_b"])
        qkv = xn @ a["w_qkv"]
        q, k, v = jnp.split(qkv, 3, axis=-1)
        def split_heads(t):
            return t.reshape(B, N, heads, dim_head).transpose(0, 2, 1, 3)
        q, k, v = map(split_heads, (q, k, v))
        dots = jnp.einsum('bhnd,bhmd->bhnm', q, k) * scale
        attn = jax.nn.softmax(dots, axis=-1)
        out = jnp.einsum('bhnm,bhmd->bhnd', attn, v)
        out = out.transpose(0, 2, 1, 3).reshape(B, N, inner)
        x = out @ a["w_out"] + a["b_out"] + x
        f = lyr["ff"]
        xn = _layernorm(x, f["ln_w"], f["ln_b"])
        h = xn @ f["w1"] + f["b1"]
        x = _gelu_exact(h) @ f["w2"] + f["b2"] + x
    return _layernorm(x, params["norm"]["ln_w"], params["norm"]["ln_b"])


# ----------------------------------------------------------------------------
# Deterministic parameter initialization (synthetic, not a checkpoint)
# ----------------------------------------------------------------------------
def init_params(key, dim, depth, heads, dim_head, mlp_dim, dtype=jnp.float32):
    inner = heads * dim_head
    layers = []
    for _ in range(depth):
        key, k1, k2, k3, k4 = jax.random.split(key, 5)
        attn = {
            "ln_w": jnp.ones((dim,), dtype),
            "ln_b": jnp.zeros((dim,), dtype),
            "w_qkv": 0.02 * jax.random.normal(k1, (dim, 3 * inner), dtype),
            "w_out": 0.02 * jax.random.normal(k2, (inner, dim), dtype),
            "b_out": jnp.zeros((dim,), dtype),
        }
        ff = {
            "ln_w": jnp.ones((dim,), dtype),
            "ln_b": jnp.zeros((dim,), dtype),
            "w1": 0.02 * jax.random.normal(k3, (dim, mlp_dim), dtype),
            "b1": jnp.zeros((mlp_dim,), dtype),
            "w2": 0.02 * jax.random.normal(k4, (mlp_dim, dim), dtype),
            "b2": jnp.zeros((dim,), dtype),
        }
        layers.append({"attn": attn, "ff": ff})
    norm = {"ln_w": jnp.ones((dim,), dtype), "ln_b": jnp.zeros((dim,), dtype)}
    return {"layers": layers, "norm": norm}


# ----------------------------------------------------------------------------
if __name__ == "__main__":
    jax.config.update("jax_default_matmul_precision", "highest")

    # Small shapes consistent with the module's forward: x is (batch, seq, dim).
    B, N = 2, 8
    dim, depth, heads, dim_head, mlp_dim = 32, 2, 4, 8, 64

    root = jax.random.PRNGKey(0)
    kx, kp = jax.random.split(root)
    x = jax.random.normal(kx, (B, N, dim), jnp.float32)
    params = init_params(kp, dim, depth, heads, dim_head, mlp_dim)

    fwd = jax.jit(functools.partial(transformer_forward,
                                    heads=heads, dim_head=dim_head))
    out = fwd(x, params)
    jax.block_until_ready(out)
    assert out.shape == (B, N, dim) and out.dtype == jnp.float32

    ref = transformer_reference(x, params, heads, dim_head)
    err = float(jnp.max(jnp.abs(out - ref)))
    assert err < 5e-3, f"max abs error vs reference: {err}"

    print("KERNEL_OK")
</pallas_src>

<mosaic_0001>
module attributes {stable_mosaic.version = 11 : i64} {
  func.func @_transformer_kernel(%arg0: i32, %arg1: memref<16x32xf32, #tpu.memory_space<vmem>>, %arg2: memref<32x32xf32, #tpu.memory_space<vmem>>, %arg3: memref<1x1x32xf32, #tpu.memory_space<vmem>>, %arg4: memref<1x1x32xf32, #tpu.memory_space<vmem>>, %arg5: memref<1x32x32xf32, #tpu.memory_space<vmem>>, %arg6: memref<1x32x32xf32, #tpu.memory_space<vmem>>, %arg7: memref<1x32x32xf32, #tpu.memory_space<vmem>>, %arg8: memref<1x32x32xf32, #tpu.memory_space<vmem>>, %arg9: memref<1x1x32xf32, #tpu.memory_space<vmem>>, %arg10: memref<1x1x32xf32, #tpu.memory_space<vmem>>, %arg11: memref<1x1x32xf32, #tpu.memory_space<vmem>>, %arg12: memref<1x32x64xf32, #tpu.memory_space<vmem>>, %arg13: memref<1x1x64xf32, #tpu.memory_space<vmem>>, %arg14: memref<1x64x32xf32, #tpu.memory_space<vmem>>, %arg15: memref<1x1x32xf32, #tpu.memory_space<vmem>>, %arg16: memref<1x32xf32, #tpu.memory_space<vmem>>, %arg17: memref<1x32xf32, #tpu.memory_space<vmem>>, %arg18: memref<16x32xf32, #tpu.memory_space<vmem>>, %arg19: memref<16x32xf32, #tpu.memory_space<vmem>>) attributes {dimension_semantics = [#tpu.dimension_semantics<arbitrary>], iteration_bounds = array<i64: 2>, scalar_prefetch = 0 : i64, scratch_operands = 1 : i64, tpu.core_type = #tpu.core_type<tc>, window_params = [{pipeline_mode = #tpu.pipeline_mode<synchronous>, transform_indices = @transform_0, window_bounds = array<i64: 16, 32>}, {pipeline_mode = #tpu.pipeline_mode<synchronous>, transform_indices = @transform_1, window_bounds = array<i64: 32, 32>}, {transform_indices = @transform_2, window_bounds = array<i64: 1, 1, 32>}, {transform_indices = @transform_3, window_bounds = array<i64: 1, 1, 32>}, {transform_indices = @transform_4, window_bounds = array<i64: 1, 32, 32>}, {transform_indices = @transform_5, window_bounds = array<i64: 1, 32, 32>}, {transform_indices = @transform_6, window_bounds = array<i64: 1, 32, 32>}, {transform_indices = @transform_7, window_bounds = array<i64: 1, 32, 32>}, {transform_indices = @transform_8, window_bounds = array<i64: 1, 1, 32>}, {transform_indices = @transform_9, window_bounds = array<i64: 1, 1, 32>}, {transform_indices = @transform_10, window_bounds = array<i64: 1, 1, 32>}, {transform_indices = @transform_11, window_bounds = array<i64: 1, 32, 64>}, {transform_indices = @transform_12, window_bounds = array<i64: 1, 1, 64>}, {transform_indices = @transform_13, window_bounds = array<i64: 1, 64, 32>}, {transform_indices = @transform_14, window_bounds = array<i64: 1, 1, 32>}, {pipeline_mode = #tpu.pipeline_mode<synchronous>, transform_indices = @transform_15, window_bounds = array<i64: 1, 32>}, {pipeline_mode = #tpu.pipeline_mode<synchronous>, transform_indices = @transform_16, window_bounds = array<i64: 1, 32>}, {pipeline_mode = #tpu.pipeline_mode<synchronous>, transform_indices = @transform_17, window_bounds = array<i64: 16, 32>}]} {
    %c0_i32 = arith.constant 0 : i32
    %0 = arith.cmpi eq, %arg0, %c0_i32 : i32
    %1 = arith.extui %0 : i1 to i32
    %c0_i32_0 = arith.constant 0 : i32
    %2 = arith.cmpi ne, %1, %c0_i32_0 : i32
    scf.if %2 {
      %c0_69 = arith.constant 0 : index
      %c0_70 = arith.constant 0 : index
      %126 = vector.load %arg1[%c0_69, %c0_70] : memref<16x32xf32, #tpu.memory_space<vmem>>, vector<16x32xf32>
      %c0_71 = arith.constant 0 : index
      %c0_72 = arith.constant 0 : index
      %127 = vector.load %arg19[%c0_71, %c0_72] : memref<16x32xf32, #tpu.memory_space<vmem>>, vector<16x32xf32>
      tpu.vector_store %arg19[%c0_71, %c0_72], %126 {strides = array<i32>} : memref<16x32xf32, #tpu.memory_space<vmem>>, vector<16x32xf32>,
    } else {
    }
    %c0 = arith.constant 0 : index
    %c0_1 = arith.constant 0 : index
    %3 = vector.load %arg19[%c0, %c0_1] : memref<16x32xf32, #tpu.memory_space<vmem>>, vector<16x32xf32>
    %c0_2 = arith.constant 0 : index
    %c0_3 = arith.constant 0 : index
    %c0_4 = arith.constant 0 : index
    %4 = vector.load %arg3[%c0_2, %c0_3, %c0_4] : memref<1x1x32xf32, #tpu.memory_space<vmem>>, vector<1x1x32xf32>
    %5 = vector.shape_cast %4 : vector<1x1x32xf32> to vector<1x32xf32>
    %c0_5 = arith.constant 0 : index
    %c0_6 = arith.constant 0 : index
    %c0_7 = arith.constant 0 : index
    %6 = vector.load %arg4[%c0_5, %c0_6, %c0_7] : memref<1x1x32xf32, #tpu.memory_space<vmem>>, vector<1x1x32xf32>
    %7 = vector.shape_cast %6 : vector<1x1x32xf32> to vector<1x32xf32>
    %cst = arith.constant dense<0.000000e+00> : vector<16xf32>
    %8 = vector.multi_reduction <add>, %3, %cst [1] : vector<16x32xf32> to vector<16xf32>
    %9 = vector.shape_cast %8 : vector<16xf32> to vector<16x1xf32>
    %cst_8 = arith.constant 3.200000e+01 : f32
    %10 = vector.broadcast %cst_8 : f32 to vector<16x1xf32>
    %11 = arith.divf %9, %10 : vector<16x1xf32>
    %12 = vector.broadcast %11 : vector<16x1xf32> to vector<16x32xf32>
    %13 = arith.subf %3, %12 : vector<16x32xf32>
    %14 = arith.mulf %13, %13 : vector<16x32xf32>
    %cst_9 = arith.constant dense<0.000000e+00> : vector<16xf32>
    %15 = vector.multi_reduction <add>, %14, %cst_9 [1] : vector<16x32xf32> to vector<16xf32>
    %16 = vector.shape_cast %15 : vector<16xf32> to vector<16x1xf32>
    %cst_10 = arith.constant 3.200000e+01 : f32
    %17 = vector.broadcast %cst_10 : f32 to vector<16x1xf32>
    %18 = arith.divf %16, %17 : vector<16x1xf32>
    %19 = vector.broadcast %11 : vector<16x1xf32> to vector<16x32xf32>
    %20 = arith.subf %3, %19 : vector<16x32xf32>
    %cst_11 = arith.constant 9.99999974E-6 : f32
    %21 = vector.broadcast %cst_11 : f32 to vector<16x1xf32>
    %22 = arith.addf %18, %21 : vector<16x1xf32>
    %23 = math.rsqrt %22 : vector<16x1xf32>
    %24 = vector.broadcast %23 : vector<16x1xf32> to vector<16x32xf32>
    %25 = arith.mulf %20, %24 : vector<16x32xf32>
    %26 = vector.broadcast %5 : vector<1x32xf32> to vector<16x32xf32>
    %27 = arith.mulf %25, %26 : vector<16x32xf32>
    %28 = vector.broadcast %7 : vector<1x32xf32> to vector<16x32xf32>
    %29 = arith.addf %27, %28 : vector<16x32xf32>
    %c0_12 = arith.constant 0 : index
    %c0_13 = arith.constant 0 : index
    %c0_14 = arith.constant 0 : index
    %30 = vector.load %arg5[%c0_12, %c0_13, %c0_14] : memref<1x32x32xf32, #tpu.memory_space<vmem>>, vector<1x32x32xf32>
    %31 = vector.shape_cast %30 : vector<1x32x32xf32> to vector<32x32xf32>
    %cst_15 = arith.constant dense<0.000000e+00> : vector<16x32xf32>
    %32 = tpu.matmul %29, %31, %cst_15 {dimension_numbers = #tpu.dot_dimension_numbers<[1], [0], [0], [1], [0, 0, 1, 1], [], []>, precision = #tpu.contract_precision<fp32>} : vector<16x32xf32>, vector<32x32xf32>, vector<16x32xf32> -> vector<16x32xf32>
    %c0_16 = arith.constant 0 : index
    %c0_17 = arith.constant 0 : index
    %c0_18 = arith.constant 0 : index
    %33 = vector.load %arg6[%c0_16, %c0_17, %c0_18] : memref<1x32x32xf32, #tpu.memory_space<vmem>>, vector<1x32x32xf32>
    %34 = vector.shape_cast %33 : vector<1x32x32xf32> to vector<32x32xf32>
    %cst_19 = arith.constant dense<0.000000e+00> : vector<16x32xf32>
    %35 = tpu.matmul %29, %34, %cst_19 {dimension_numbers = #tpu.dot_dimension_numbers<[1], [0], [0], [1], [0, 0, 1, 1], [], []>, precision = #tpu.contract_precision<fp32>} : vector<16x32xf32>, vector<32x32xf32>, vector<16x32xf32> -> vector<16x32xf32>
    %c0_20 = arith.constant 0 : index
    %c0_21 = arith.constant 0 : index
    %c0_22 = arith.constant 0 : index
    %36 = vector.load %arg7[%c0_20, %c0_21, %c0_22] : memref<1x32x32xf32, #tpu.memory_space<vmem>>, vector<1x32x32xf32>
    %37 = vector.shape_cast %36 : vector<1x32x32xf32> to vector<32x32xf32>
    %cst_23 = arith.constant dense<0.000000e+00> : vector<16x32xf32>
    %38 = tpu.matmul %29, %37, %cst_23 {dimension_numbers = #tpu.dot_dimension_numbers<[1], [0], [0], [1], [0, 0, 1, 1], [], []>, precision = #tpu.contract_precision<fp32>} : vector<16x32xf32>, vector<32x32xf32>, vector<16x32xf32> -> vector<16x32xf32>
    %39 = vector.shape_cast %32 : vector<16x32xf32> to vector<2x8x32xf32>
    %40 = vector.shape_cast %35 : vector<16x32xf32> to vector<2x8x32xf32>
    %41 = vector.shape_cast %38 : vector<16x32xf32> to vector<2x8x32xf32>
    %c0_24 = arith.constant 0 : index
    %c0_25 = arith.constant 0 : index
    %42 = vector.load %arg2[%c0_24, %c0_25] : memref<32x32xf32, #tpu.memory_space<vmem>>, vector<32x32xf32>
    %43 = tpu.concatenate %39, %39, %39, %39 in 1 : vector<2x8x32xf32>, vector<2x8x32xf32>, vector<2x8x32xf32>, vector<2x8x32xf32> -> vector<2x32x32xf32>
    %44 = vector.shape_cast %42 : vector<32x32xf32> to vector<1x32x32xf32>
    %45 = vector.broadcast %44 : vector<1x32x32xf32> to vector<2x32x32xf32>
    %46 = arith.mulf %43, %45 : vector<2x32x32xf32>
    "tpu.trace_start"() <{level = 10 : i32, message = "bnk,bmk->bnm"}> : () -> ()
    %cst_26 = arith.constant dense<0.000000e+00> : vector<2x32x8xf32>
    %47 = tpu.matmul %46, %40, %cst_26 {dimension_numbers = #tpu.dot_dimension_numbers<[2], [2], [1], [1], [0, 0, 0, 1, 1, 1], [0], [0]>, precision = #tpu.contract_precision<fp32>} : vector<2x32x32xf32>, vector<2x8x32xf32>, vector<2x32x8xf32> -> vector<2x32x8xf32>
    "tpu.trace_stop"() : () -> ()
    %cst_27 = arith.constant dense<0xFF800000> : vector<2x32xf32>
    %48 = vector.multi_reduction <maximumf>, %47, %cst_27 [2] : vector<2x32x8xf32> to vector<2x32xf32>
    %49 = vector.shape_cast %48 : vector<2x32xf32> to vector<2x32x1xf32>
    %50 = vector.broadcast %49 : vector<2x32x1xf32> to vector<2x32x8xf32>
    %51 = arith.subf %47, %50 : vector<2x32x8xf32>
    %52 = math.exp %51 : vector<2x32x8xf32>
    %cst_28 = arith.constant dense<0.000000e+00> : vector<2x32xf32>
    %53 = vector.multi_reduction <add>, %52, %cst_28 [2] : vector<2x32x8xf32> to vector<2x32xf32>
    %54 = vector.shape_cast %53 : vector<2x32xf32> to vector<2x32x1xf32>
    %55 = tpu.reciprocal %54 {approx = true} : vector<2x32x1xf32> -> vector<2x32x1xf32>
    %56 = vector.broadcast %55 : vector<2x32x1xf32> to vector<2x32x8xf32>
    %57 = arith.mulf %52, %56 : vector<2x32x8xf32>
    "tpu.trace_start"() <{level = 10 : i32, message = "bnm,bmk->bnk"}> : () -> ()
    %cst_29 = arith.constant dense<0.000000e+00> : vector<2x32x32xf32>
    %58 = tpu.matmul %57, %41, %cst_29 {dimension_numbers = #tpu.dot_dimension_numbers<[2], [1], [1], [2], [0, 0, 0, 1, 1, 2], [0], [0]>, precision = #tpu.contract_precision<fp32>} : vector<2x32x8xf32>, vector<2x8x32xf32>, vector<2x32x32xf32> -> vector<2x32x32xf32>
    "tpu.trace_stop"() : () -> ()
    %59 = vector.shape_cast %42 : vector<32x32xf32> to vector<1x32x32xf32>
    %60 = vector.broadcast %59 : vector<1x32x32xf32> to vector<2x32x32xf32>
    %61 = arith.mulf %58, %60 : vector<2x32x32xf32>
    %62 = vector.shape_cast %61 : vector<2x32x32xf32> to vector<2x4x8x32xf32>
    %cst_30 = arith.constant dense<0.000000e+00> : vector<2x8x32xf32>
    %63 = vector.multi_reduction <add>, %62, %cst_30 [1] : vector<2x4x8x32xf32> to vector<2x8x32xf32>
    %64 = vector.shape_cast %63 : vector<2x8x32xf32> to vector<16x32xf32>
    %c0_31 = arith.constant 0 : index
    %c0_32 = arith.constant 0 : index
    %c0_33 = arith.constant 0 : index
    %65 = vector.load %arg8[%c0_31, %c0_32, %c0_33] : memref<1x32x32xf32, #tpu.memory_space<vmem>>, vector<1x32x32xf32>
    %66 = vector.shape_cast %65 : vector<1x32x32xf32> to vector<32x32xf32>
    %cst_34 = arith.constant dense<0.000000e+00> : vector<16x32xf32>
    %67 = tpu.matmul %64, %66, %cst_34 {dimension_numbers = #tpu.dot_dimension_numbers<[1], [0], [0], [1], [0, 0, 1, 1], [], []>, precision = #tpu.contract_precision<fp32>} : vector<16x32xf32>, vector<32x32xf32>, vector<16x32xf32> -> vector<16x32xf32>
    %c0_35 = arith.constant 0 : index
    %c0_36 = arith.constant 0 : index
    %c0_37 = arith.constant 0 : index
    %68 = vector.load %arg9[%c0_35, %c0_36, %c0_37] : memref<1x1x32xf32, #tpu.memory_space<vmem>>, vector<1x1x32xf32>
    %69 = vector.shape_cast %68 : vector<1x1x32xf32> to vector<1x32xf32>
    %70 = vector.broadcast %69 : vector<1x32xf32> to vector<16x32xf32>
    %71 = arith.addf %67, %70 : vector<16x32xf32>
    %72 = arith.addf %3, %71 : vector<16x32xf32>
    %c0_38 = arith.constant 0 : index
    %c0_39 = arith.constant 0 : index
    %c0_40 = arith.constant 0 : index
    %73 = vector.load %arg10[%c0_38, %c0_39, %c0_40] : memref<1x1x32xf32, #tpu.memory_space<vmem>>, vector<1x1x32xf32>
    %74 = vector.shape_cast %73 : vector<1x1x32xf32> to vector<1x32xf32>
    %c0_41 = arith.constant 0 : index
    %c0_42 = arith.constant 0 : index
    %c0_43 = arith.constant 0 : index
    %75 = vector.load %arg11[%c0_41, %c0_42, %c0_43] : memref<1x1x32xf32, #tpu.memory_space<vmem>>, vector<1x1x32xf32>
    %76 = vector.shape_cast %75 : vector<1x1x32xf32> to vector<1x32xf32>
    %cst_44 = arith.constant dense<0.000000e+00> : vector<16xf32>
    %77 = vector.multi_reduction <add>, %72, %cst_44 [1] : vector<16x32xf32> to vector<16xf32>
    %78 = vector.shape_cast %77 : vector<16xf32> to vector<16x1xf32>
    %cst_45 = arith.constant 3.200000e+01 : f32
    %79 = vector.broadcast %cst_45 : f32 to vector<16x1xf32>
    %80 = arith.divf %78, %79 : vector<16x1xf32>
    %81 = vector.broadcast %80 : vector<16x1xf32> to vector<16x32xf32>
    %82 = arith.subf %72, %81 : vector<16x32xf32>
    %83 = arith.mulf %82, %82 : vector<16x32xf32>
    %cst_46 = arith.constant dense<0.000000e+00> : vector<16xf32>
    %84 = vector.multi_reduction <add>, %83, %cst_46 [1] : vector<16x32xf32> to vector<16xf32>
    %85 = vector.shape_cast %84 : vector<16xf32> to vector<16x1xf32>
    %cst_47 = arith.constant 3.200000e+01 : f32
    %86 = vector.broadcast %cst_47 : f32 to vector<16x1xf32>
    %87 = arith.divf %85, %86 : vector<16x1xf32>
    %88 = vector.broadcast %80 : vector<16x1xf32> to vector<16x32xf32>
    %89 = arith.subf %72, %88 : vector<16x32xf32>
    %cst_48 = arith.constant 9.99999974E-6 : f32
    %90 = vector.broadcast %cst_48 : f32 to vector<16x1xf32>
    %91 = arith.addf %87, %90 : vector<16x1xf32>
    %92 = math.rsqrt %91 : vector<16x1xf32>
    %93 = vector.broadcast %92 : vector<16x1xf32> to vector<16x32xf32>
    %94 = arith.mulf %89, %93 : vector<16x32xf32>
    %95 = vector.broadcast %74 : vector<1x32xf32> to vector<16x32xf32>
    %96 = arith.mulf %94, %95 : vector<16x32xf32>
    %97 = vector.broadcast %76 : vector<1x32xf32> to vector<16x32xf32>
    %98 = arith.addf %96, %97 : vector<16x32xf32>
    %c0_49 = arith.constant 0 : index
    %c0_50 = arith.constant 0 : index
    %c0_51 = arith.constant 0 : index
    %99 = vector.load %arg12[%c0_49, %c0_50, %c0_51] : memref<1x32x64xf32, #tpu.memory_space<vmem>>, vector<1x32x64xf32>
    %100 = vector.shape_cast %99 : vector<1x32x64xf32> to vector<32x64xf32>
    %cst_52 = arith.constant dense<0.000000e+00> : vector<16x64xf32>
    %101 = tpu.matmul %98, %100, %cst_52 {dimension_numbers = #tpu.dot_dimension_numbers<[1], [0], [0], [1], [0, 0, 1, 1], [], []>, precision = #tpu.contract_precision<fp32>} : vector<16x32xf32>, vector<32x64xf32>, vector<16x64xf32> -> vector<16x64xf32>
    %c0_53 = arith.constant 0 : index
    %c0_54 = arith.constant 0 : index
    %c0_55 = arith.constant 0 : index
    %102 = vector.load %arg13[%c0_53, %c0_54, %c0_55] : memref<1x1x64xf32, #tpu.memory_space<vmem>>, vector<1x1x64xf32>
    %103 = vector.shape_cast %102 : vector<1x1x64xf32> to vector<1x64xf32>
    %104 = vector.broadcast %103 : vector<1x64xf32> to vector<16x64xf32>
    %105 = arith.addf %101, %104 : vector<16x64xf32>
    %cst_56 = arith.constant 5.000000e-01 : f32
    %106 = vector.broadcast %cst_56 : f32 to vector<16x64xf32>
    %107 = arith.mulf %106, %105 : vector<16x64xf32>
    %cst_57 = arith.constant 0.707106769 : f32
    %108 = vector.broadcast %cst_57 : f32 to vector<16x64xf32>
    %109 = arith.mulf %105, %108 : vector<16x64xf32>
    %110 = math.erf %109 : vector<16x64xf32>
    %cst_58 = arith.constant 1.000000e+00 : f32
    %111 = vector.broadcast %cst_58 : f32 to vector<16x64xf32>
    %112 = arith.addf %111, %110 : vector<16x64xf32>
    %113 = arith.mulf %107, %112 : vector<16x64xf32>
    %c0_59 = arith.constant 0 : index
    %c0_60 = arith.constant 0 : index
    %c0_61 = arith.constant 0 : index
    %114 = vector.load %arg14[%c0_59, %c0_60, %c0_61] : memref<1x64x32xf32, #tpu.memory_space<vmem>>, vector<1x64x32xf32>
    %115 = vector.shape_cast %114 : vector<1x64x32xf32> to vector<64x32xf32>
    %cst_62 = arith.constant dense<0.000000e+00> : vector<16x32xf32>
    %116 = tpu.matmul %113, %115, %cst_62 {dimension_numbers = #tpu.dot_dimension_numbers<[1], [0], [0], [1], [0, 0, 1, 1], [], []>, precision = #tpu.contract_precision<fp32>} : vector<16x64xf32>, vector<64x32xf32>, vector<16x32xf32> -> vector<16x32xf32>
    %c0_63 = arith.constant 0 : index
    %c0_64 = arith.constant 0 : index
    %c0_65 = arith.constant 0 : index
    %117 = vector.load %arg15[%c0_63, %c0_64, %c0_65] : memref<1x1x32xf32, #tpu.memory_space<vmem>>, vector<1x1x32xf32>
    %118 = vector.shape_cast %117 : vector<1x1x32xf32> to vector<1x32xf32>
    %119 = vector.broadcast %118 : vector<1x32xf32> to vector<16x32xf32>
    %120 = arith.addf %116, %119 : vector<16x32xf32>
    %121 = arith.addf %72, %120 : vector<16x32xf32>
    %c0_66 = arith.constant 0 : index
    %c0_67 = arith.constant 0 : index
    %122 = vector.load %arg19[%c0_66, %c0_67] : memref<16x32xf32, #tpu.memory_space<vmem>>, vector<16x32xf32>
    tpu.vector_store %arg19[%c0_66, %c0_67], %121 {strides = array<i32>} : memref<16x32xf32, #tpu.memory_space<vmem>>, vector<16x32xf32>,
    %c1_i32 = arith.constant 1 : i32
    %123 = arith.cmpi eq, %arg0, %c1_i32 : i32
    %124 = arith.extui %123 : i1 to i32
    %c0_i32_68 = arith.constant 0 : i32
    %125 = arith.cmpi ne, %124, %c0_i32_68 : i32
    scf.if %125 {
      %c0_69 = arith.constant 0 : index
      %c0_70 = arith.constant 0 : index
      %126 = vector.load %arg16[%c0_69, %c0_70] : memref<1x32xf32, #tpu.memory_space<vmem>>, vector<1x32xf32>
      %c0_71 = arith.constant 0 : index
      %c0_72 = arith.constant 0 : index
      %127 = vector.load %arg17[%c0_71, %c0_72] : memref<1x32xf32, #tpu.memory_space<vmem>>, vector<1x32xf32>
      %cst_73 = arith.constant dense<0.000000e+00> : vector<16xf32>
      %128 = vector.multi_reduction <add>, %121, %cst_73 [1] : vector<16x32xf32> to vector<16xf32>
      %129 = vector.shape_cast %128 : vector<16xf32> to vector<16x1xf32>
      %cst_74 = arith.constant 3.200000e+01 : f32
      %130 = vector.broadcast %cst_74 : f32 to vector<16x1xf32>
      %131 = arith.divf %129, %130 : vector<16x1xf32>
      %132 = vector.broadcast %131 : vector<16x1xf32> to vector<16x32xf32>
      %133 = arith.subf %121, %132 : vector<16x32xf32>
      %134 = arith.mulf %133, %133 : vector<16x32xf32>
      %cst_75 = arith.constant dense<0.000000e+00> : vector<16xf32>
      %135 = vector.multi_reduction <add>, %134, %cst_75 [1] : vector<16x32xf32> to vector<16xf32>
      %136 = vector.shape_cast %135 : vector<16xf32> to vector<16x1xf32>
      %cst_76 = arith.constant 3.200000e+01 : f32
      %137 = vector.broadcast %cst_76 : f32 to vector<16x1xf32>
      %138 = arith.divf %136, %137 : vector<16x1xf32>
      %139 = vector.broadcast %131 : vector<16x1xf32> to vector<16x32xf32>
      %140 = arith.subf %121, %139 : vector<16x32xf32>
      %cst_77 = arith.constant 9.99999974E-6 : f32
      %141 = vector.broadcast %cst_77 : f32 to vector<16x1xf32>
      %142 = arith.addf %138, %141 : vector<16x1xf32>
      %143 = math.rsqrt %142 : vector<16x1xf32>
      %144 = vector.broadcast %143 : vector<16x1xf32> to vector<16x32xf32>
      %145 = arith.mulf %140, %144 : vector<16x32xf32>
      %146 = vector.broadcast %126 : vector<1x32xf32> to vector<16x32xf32>
      %147 = arith.mulf %145, %146 : vector<16x32xf32>
      %148 = vector.broadcast %127 : vector<1x32xf32> to vector<16x32xf32>
      %149 = arith.addf %147, %148 : vector<16x32xf32>
      %c0_78 = arith.constant 0 : index
      %c0_79 = arith.constant 0 : index
      %150 = vector.load %arg18[%c0_78, %c0_79] : memref<16x32xf32, #tpu.memory_space<vmem>>, vector<16x32xf32>
      tpu.vector_store %arg18[%c0_78, %c0_79], %149 {strides = array<i32>} : memref<16x32xf32, #tpu.memory_space<vmem>>, vector<16x32xf32>,
    } else {
    }
    return
  }
  func.func @transform_0(%arg0: i32) -> (i32, i32) {
    %c0_i32 = arith.constant 0 : i32
    %c0_i32_0 = arith.constant 0 : i32
    %c0_i32_1 = arith.constant 0 : i32
    return %c0_i32, %c0_i32_0 : i32, i32
  }
  func.func @transform_1(%arg0: i32) -> (i32, i32) {
    %c0_i32 = arith.constant 0 : i32
    %c0_i32_0 = arith.constant 0 : i32
    %c0_i32_1 = arith.constant 0 : i32
    return %c0_i32, %c0_i32_0 : i32, i32
  }
  func.func @transform_2(%arg0: i32) -> (i32, i32, i32) {
    %c0_i32 = arith.constant 0 : i32
    %c0_i32_0 = arith.constant 0 : i32
    %c0_i32_1 = arith.constant 0 : i32
    return %arg0, %c0_i32, %c0_i32_0 : i32, i32, i32
  }
  func.func @transform_3(%arg0: i32) -> (i32, i32, i32) {
    %c0_i32 = arith.constant 0 : i32
    %c0_i32_0 = arith.constant 0 : i32
    %c0_i32_1 = arith.constant 0 : i32
    return %arg0, %c0_i32, %c0_i32_0 : i32, i32, i32
  }
  func.func @transform_4(%arg0: i32) -> (i32, i32, i32) {
    %c0_i32 = arith.constant 0 : i32
    %c0_i32_0 = arith.constant 0 : i32
    %c0_i32_1 = arith.constant 0 : i32
    return %arg0, %c0_i32, %c0_i32_0 : i32, i32, i32
  }
  func.func @transform_5(%arg0: i32) -> (i32, i32, i32) {
    %c0_i32 = arith.constant 0 : i32
    %c0_i32_0 = arith.constant 0 : i32
    %c0_i32_1 = arith.constant 0 : i32
    return %arg0, %c0_i32, %c0_i32_0 : i32, i32, i32
  }
  func.func @transform_6(%arg0: i32) -> (i32, i32, i32) {
    %c0_i32 = arith.constant 0 : i32
    %c0_i32_0 = arith.constant 0 : i32
    %c0_i32_1 = arith.constant 0 : i32
    return %arg0, %c0_i32, %c0_i32_0 : i32, i32, i32
  }
  func.func @transform_7(%arg0: i32) -> (i32, i32, i32) {
    %c0_i32 = arith.constant 0 : i32
    %c0_i32_0 = arith.constant 0 : i32
    %c0_i32_1 = arith.constant 0 : i32
    return %arg0, %c0_i32, %c0_i32_0 : i32, i32, i32
  }
  func.func @transform_8(%arg0: i32) -> (i32, i32, i32) {
    %c0_i32 = arith.constant 0 : i32
    %c0_i32_0 = arith.constant 0 : i32
    %c0_i32_1 = arith.constant 0 : i32
    return %arg0, %c0_i32, %c0_i32_0 : i32, i32, i32
  }
  func.func @transform_9(%arg0: i32) -> (i32, i32, i32) {
    %c0_i32 = arith.constant 0 : i32
    %c0_i32_0 = arith.constant 0 : i32
    %c0_i32_1 = arith.constant 0 : i32
    return %arg0, %c0_i32, %c0_i32_0 : i32, i32, i32
  }
  func.func @transform_10(%arg0: i32) -> (i32, i32, i32) {
    %c0_i32 = arith.constant 0 : i32
    %c0_i32_0 = arith.constant 0 : i32
    %c0_i32_1 = arith.constant 0 : i32
    return %arg0, %c0_i32, %c0_i32_0 : i32, i32, i32
  }
  func.func @transform_11(%arg0: i32) -> (i32, i32, i32) {
    %c0_i32 = arith.constant 0 : i32
    %c0_i32_0 = arith.constant 0 : i32
    %c0_i32_1 = arith.constant 0 : i32
    return %arg0, %c0_i32, %c0_i32_0 : i32, i32, i32
  }
  func.func @transform_12(%arg0: i32) -> (i32, i32, i32) {
    %c0_i32 = arith.constant 0 : i32
    %c0_i32_0 = arith.constant 0 : i32
    %c0_i32_1 = arith.constant 0 : i32
    return %arg0, %c0_i32, %c0_i32_0 : i32, i32, i32
  }
  func.func @transform_13(%arg0: i32) -> (i32, i32, i32) {
    %c0_i32 = arith.constant 0 : i32
    %c0_i32_0 = arith.constant 0 : i32
    %c0_i32_1 = arith.constant 0 : i32
    return %arg0, %c0_i32, %c0_i32_0 : i32, i32, i32
  }
  func.func @transform_14(%arg0: i32) -> (i32, i32, i32) {
    %c0_i32 = arith.constant 0 : i32
    %c0_i32_0 = arith.constant 0 : i32
    %c0_i32_1 = arith.constant 0 : i32
    return %arg0, %c0_i32, %c0_i32_0 : i32, i32, i32
  }
  func.func @transform_15(%arg0: i32) -> (i32, i32) {
    %c0_i32 = arith.constant 0 : i32
    %c0_i32_0 = arith.constant 0 : i32
    %c0_i32_1 = arith.constant 0 : i32
    return %c0_i32, %c0_i32_0 : i32, i32
  }
  func.func @transform_16(%arg0: i32) -> (i32, i32) {
    %c0_i32 = arith.constant 0 : i32
    %c0_i32_0 = arith.constant 0 : i32
    %c0_i32_1 = arith.constant 0 : i32
    return %c0_i32, %c0_i32_0 : i32, i32
  }
  func.func @transform_17(%arg0: i32) -> (i32, i32) {
    %c0_i32 = arith.constant 0 : i32
    %c0_i32_0 = arith.constant 0 : i32
    %c0_i32_1 = arith.constant 0 : i32
    return %c0_i32, %c0_i32_0 : i32, i32
  }
}

</mosaic_0001>

<llo_original>
// kernel: transformer_forward.1
$region0: #{transformer_forward.1}
  #allocation0 [shape = 'u32[]', space=smem, size = 0x4, offset = 0x4, fixed_abs, tag = 'smem constant byte address 0x4 - core index']
  #allocation1 [shape = 'u32[72,128]{1,0:T(1,128)}', space=vmem, size = 0x9000, scoped, tag = 'internal scratch']
  #allocation2 [shape = 'f32[16,32]{1,0:T(8,128)}', space=vmem, size = 0x2000, scoped, tag = 'scratch operand']
  %s0 = inlined_call_operand.vmem [shape: f32[16,32], index: 0, kind: input, shape index: {}]
  %s1 = inlined_call_operand.vmem [shape: f32[32,32], index: 1, kind: input, shape index: {}]
  %s2 = inlined_call_operand.vmem [shape: f32[2,1,32], index: 2, kind: input, shape index: {}]
  %s3 = inlined_call_operand.vmem [shape: f32[2,1,32], index: 3, kind: input, shape index: {}]
  %s4 = inlined_call_operand.vmem [shape: f32[2,32,32], index: 4, kind: input, shape index: {}]
  %s5 = inlined_call_operand.vmem [shape: f32[2,32,32], index: 5, kind: input, shape index: {}]
  %s6 = inlined_call_operand.vmem [shape: f32[2,32,32], index: 6, kind: input, shape index: {}]
  %s7 = inlined_call_operand.vmem [shape: f32[2,32,32], index: 7, kind: input, shape index: {}]
  %s8 = inlined_call_operand.vmem [shape: f32[2,1,32], index: 8, kind: input, shape index: {}]
  %s9 = inlined_call_operand.vmem [shape: f32[2,1,32], index: 9, kind: input, shape index: {}]
  %s10 = inlined_call_operand.vmem [shape: f32[2,1,32], index: 10, kind: input, shape index: {}]
  %s11 = inlined_call_operand.vmem [shape: f32[2,32,64], index: 11, kind: input, shape index: {}]
  %s12 = inlined_call_operand.vmem [shape: f32[2,1,64], index: 12, kind: input, shape index: {}]
  %s13 = inlined_call_operand.vmem [shape: f32[2,64,32], index: 13, kind: input, shape index: {}]
  %s14 = inlined_call_operand.vmem [shape: f32[2,1,32], index: 14, kind: input, shape index: {}]
  %s15 = inlined_call_operand.vmem [shape: f32[1,32], index: 15, kind: input, shape index: {}]
  %s16 = inlined_call_operand.vmem [shape: f32[1,32], index: 16, kind: input, shape index: {}]
  %s17 = inlined_call_operand.hbm [shape: f32[16,32], index: 17, kind: output, shape index: {}]
  %s18 = sld [smem:[#allocation0]]
  $region109: #{transformer_forward.1} parent=0
    _
  %s20 = ssub.s32 1, %s18
  %s21 = scalar_select 0, %s20, %s18
  $region1: #{transformer_forward.1} parent=0
    #allocation3 [shape = 'u8[8192]{0}', space=vmem, size = 0x2000, scoped, tag = 'output window, operand 0, single buffered']
    #allocation4 [shape = 's32[2]{0}', space=sflag, size = 0x8, scoped, tag = 'scoped memory for transformer_forward.1']
    %22 = vsyncpa [#allocation4], 0
    loop: start=0, step=1, limit=4
    $region2: #{transformer_forward.1} parent=1 // loop_pre_header
      _
    $region3: #{transformer_forward.1} parent=1 // loop_header
      %s24 = sphi 0, %s28
      %p25 = scmp.ge.s32.totalorder %s24, 4
      %s32 = sphi 0, %s32
      %s34 = sphi 0, %s32
      %s35 = sphi 0, %s34
      %s49 = sphi 0, %s35
      %s53 = sphi 0, %s53
      %s55 = sphi 0, %s53
      %s56 = sphi 0, %s55
      %s70 = sphi 0, %s56
      %s76 = sphi 0, %s78
      %s79 = sphi 0, %s76
      %s80 = sphi 0, %s79
      %s96 = sphi 0, %s80
      %s102 = sphi 0, %s104
      %s105 = sphi 0, %s102
      %s106 = sphi 0, %s105
      %s122 = sphi 0, %s106
      %s128 = sphi 0, %s130
      %s131 = sphi 0, %s128
      %s132 = sphi 0, %s131
      %s148 = sphi 0, %s132
      %s154 = sphi 0, %s156
      %s157 = sphi 0, %s154
      %s158 = sphi 0, %s157
      %s174 = sphi 0, %s158
      %s180 = sphi 0, %s182
      %s183 = sphi 0, %s180
      %s184 = sphi 0, %s183
      %s200 = sphi 0, %s184
      %s206 = sphi 0, %s208
      %s209 = sphi 0, %s206
      %s210 = sphi 0, %s209
      %s226 = sphi 0, %s210
      %s232 = sphi 0, %s234
      %s235 = sphi 0, %s232
      %s236 = sphi 0, %s235
      %s252 = sphi 0, %s236
      %s258 = sphi 0, %s260
      %s261 = sphi 0, %s258
      %s262 = sphi 0, %s261
      %s278 = sphi 0, %s262
      %s284 = sphi 0, %s286
      %s287 = sphi 0, %s284
      %s288 = sphi 0, %s287
      %s304 = sphi 0, %s288
      %s310 = sphi 0, %s312
      %s313 = sphi 0, %s310
      %s314 = sphi 0, %s313
      %s330 = sphi 0, %s314
      %s336 = sphi 0, %s338
      %s339 = sphi 0, %s336
      %s340 = sphi 0, %s339
      %s356 = sphi 0, %s340
      %s362 = sphi 0, %s364
      %s365 = sphi 0, %s362
      %s366 = sphi 0, %s365
      %s382 = sphi 0, %s366
      %s388 = sphi 0, %s390
      %s391 = sphi 0, %s388
      %s392 = sphi 0, %s391
      %s408 = sphi 0, %s392
      %s412 = sphi 0, %s412
      %s414 = sphi 0, %s412
      %s415 = sphi 0, %s414
      %s429 = sphi 0, %s415
      %s433 = sphi 0, %s433
      %s435 = sphi 0, %s433
      %s436 = sphi 0, %s435
      %s450 = sphi 0, %s436
      %s454 = sphi 0, %s454
      %s456 = sphi 0, %s454
      %s457 = sphi 0, %s456
      %s471 = sphi 0, %s457
    $region4: #{transformer_forward.1} parent=1 // loop_header_branch
      %27 = sbr.rel (%p25) target = $region8
    $region5: #{transformer_forward.1} parent=1 // loop_body
      %s29 = ssub.s32 %s24, 1
      %s30 = ssub.s32 %s24, 2
      %s31 = sadd.s32 %s24, 1
      %s33 = sadd.s32 %s32, 1
      %p36 = scmp.eq.s32.totalorder %s24, 1
      %p37 = scmp.ne.s32.totalorder %s32, %s34
      %p38 = scmp.eq.s32.totalorder %s24, 0
      %p39 = por %p37, %p38
      %p40 = scmp.ne.s32.totalorder %s32, %s34
      %p41 = scmp.eq.s32.totalorder %s29, 1
      %p42 = por %p40, %p41
      %p43 = scmp.ne.s32.totalorder %s34, %s35
      %p44 = scmp.eq.s32.totalorder %s29, 0
      %p45 = por %p43, %p44
      %p46 = scmp.ne.s32.totalorder %s34, %s35
      %p47 = scmp.eq.s32.totalorder %s30, 1
      %p48 = por %p46, %p47
      %p50 = scmp.ne.s32.totalorder %s35, %s49
      %p51 = scmp.eq.s32.totalorder %s30, 0
      %p52 = por %p50, %p51
      %s54 = sadd.s32 %s53, 1
      %p57 = scmp.eq.s32.totalorder %s24, 1
      %p58 = scmp.ne.s32.totalorder %s53, %s55
      %p59 = scmp.eq.s32.totalorder %s24, 0
      %p60 = por %p58, %p59
      %p61 = scmp.ne.s32.totalorder %s53, %s55
      %p62 = scmp.eq.s32.totalorder %s29, 1
      %p63 = por %p61, %p62
      %p64 = scmp.ne.s32.totalorder %s55, %s56
      %p65 = scmp.eq.s32.totalorder %s29, 0
      %p66 = por %p64, %p65
      %p67 = scmp.ne.s32.totalorder %s55, %s56
      %p68 = scmp.eq.s32.totalorder %s30, 1
      %p69 = por %p67, %p68
      %p71 = scmp.ne.s32.totalorder %s56, %s70
      %p72 = scmp.eq.s32.totalorder %s30, 0
      %p73 = por %p71, %p72
      %s74 = ssub.s32 %s24, %s31
      %p75 = scmp.eq.s32.totalorder %s74, 0
      %s77 = sadd.s32 %s76, 1
      %s78 = scalar_select %p75, %s76, %s77
      %p81 = pneg %p75
      %p82 = scmp.eq.s32.totalorder %s24, 1
      %p83 = por %p81, %p82
      %p84 = scmp.ne.s32.totalorder %s76, %s79
      %p85 = scmp.eq.s32.totalorder %s24, 0
      %p86 = por %p84, %p85
      %p87 = scmp.ne.s32.totalorder %s76, %s79
      %p88 = scmp.eq.s32.totalorder %s29, 1
      %p89 = por %p87, %p88
      %p90 = scmp.ne.s32.totalorder %s79, %s80
      %p91 = scmp.eq.s32.totalorder %s29, 0
      %p92 = por %p90, %p91
      %p93 = scmp.ne.s32.totalorder %s79, %s80
      %p94 = scmp.eq.s32.totalorder %s30, 1
      %p95 = por %p93, %p94
      %p97 = scmp.ne.s32.totalorder %s80, %s96
      %p98 = scmp.eq.s32.totalorder %s30, 0
      %p99 = por %p97, %p98
      %s100 = ssub.s32 %s24, %s31
      %p101 = scmp.eq.s32.totalorder %s100, 0
      %s103 = sadd.s32 %s102, 1
      %s104 = scalar_select %p101, %s102, %s103
      %p107 = pneg %p101
      %p108 = scmp.eq.s32.totalorder %s24, 1
      %p109 = por %p107, %p108
      %p110 = scmp.ne.s32.totalorder %s102, %s105
      %p111 = scmp.eq.s32.totalorder %s24, 0
      %p112 = por %p110, %p111
      %p113 = scmp.ne.s32.totalorder %s102, %s105
      %p114 = scmp.eq.s32.totalorder %s29, 1
      %p115 = por %p113, %p114
      %p116 = scmp.ne.s32.totalorder %s105, %s106
      %p117 = scmp.eq.s32.totalorder %s29, 0
      %p118 = por %p116, %p117
      %p119 = scmp.ne.s32.totalorder %s105, %s106
      %p120 = scmp.eq.s32.totalorder %s30, 1
      %p121 = por %p119, %p120
      %p123 = scmp.ne.s32.totalorder %s106, %s122
      %p124 = scmp.eq.s32.totalorder %s30, 0
      %p125 = por %p123, %p124
      %s126 = ssub.s32 %s24, %s31
      %p127 = scmp.eq.s32.totalorder %s126, 0
      %s129 = sadd.s32 %s128, 1
      %s130 = scalar_select %p127, %s128, %s129
      %p133 = pneg %p127
      %p134 = scmp.eq.s32.totalorder %s24, 1
      %p135 = por %p133, %p134
      %p136 = scmp.ne.s32.totalorder %s128, %s131
      %p137 = scmp.eq.s32.totalorder %s24, 0
      %p138 = por %p136, %p137
      %p139 = scmp.ne.s32.totalorder %s128, %s131
      %p140 = scmp.eq.s32.totalorder %s29, 1
      %p141 = por %p139, %p140
      %p142 = scmp.ne.s32.totalorder %s131, %s132
      %p143 = scmp.eq.s32.totalorder %s29, 0
      %p144 = por %p142, %p143
      %p145 = scmp.ne.s32.totalorder %s131, %s132
      %p146 = scmp.eq.s32.totalorder %s30, 1
      %p147 = por %p145, %p146
      %p149 = scmp.ne.s32.totalorder %s132, %s148
      %p150 = scmp.eq.s32.totalorder %s30, 0
      %p151 = por %p149, %p150
      %s152 = ssub.s32 %s24, %s31
      %p153 = scmp.eq.s32.totalorder %s152, 0
      %s155 = sadd.s32 %s154, 1
      %s156 = scalar_select %p153, %s154, %s155
      %p159 = pneg %p153
      %p160 = scmp.eq.s32.totalorder %s24, 1
      %p161 = por %p159, %p160
      %p162 = scmp.ne.s32.totalorder %s154, %s157
      %p163 = scmp.eq.s32.totalorder %s24, 0
      %p164 = por %p162, %p163
      %p165 = scmp.ne.s32.totalorder %s154, %s157
      %p166 = scmp.eq.s32.totalorder %s29, 1
      %p167 = por %p165, %p166
      %p168 = scmp.ne.s32.totalorder %s157, %s158
      %p169 = scmp.eq.s32.totalorder %s29, 0
      %p170 = por %p168, %p169
      %p171 = scmp.ne.s32.totalorder %s157, %s158
      %p172 = scmp.eq.s32.totalorder %s30, 1
      %p173 = por %p171, %p172
      %p175 = scmp.ne.s32.totalorder %s158, %s174
      %p176 = scmp.eq.s32.totalorder %s30, 0
      %p177 = por %p175, %p176
      %s178 = ssub.s32 %s24, %s31
      %p179 = scmp.eq.s32.totalorder %s178, 0
      %s181 = sadd.s32 %s180, 1
      %s182 = scalar_select %p179, %s180, %s181
      %p185 = pneg %p179
      %p186 = scmp.eq.s32.totalorder %s24, 1
      %p187 = por %p185, %p186
      %p188 = scmp.ne.s32.totalorder %s180, %s183
      %p189 = scmp.eq.s32.totalorder %s24, 0
      %p190 = por %p188, %p189
      %p191 = scmp.ne.s32.totalorder %s180, %s183
      %p192 = scmp.eq.s32.totalorder %s29, 1
      %p193 = por %p191, %p192
      %p194 = scmp.ne.s32.totalorder %s183, %s184
      %p195 = scmp.eq.s32.totalorder %s29, 0
      %p196 = por %p194, %p195
      %p197 = scmp.ne.s32.totalorder %s183, %s184
      %p198 = scmp.eq.s32.totalorder %s30, 1
      %p199 = por %p197, %p198
      %p201 = scmp.ne.s32.totalorder %s184, %s200
      %p202 = scmp.eq.s32.totalorder %s30, 0
      %p203 = por %p201, %p202
      %s204 = ssub.s32 %s24, %s31
      %p205 = scmp.eq.s32.totalorder %s204, 0
      %s207 = sadd.s32 %s206, 1
      %s208 = scalar_select %p205, %s206, %s207
      %p211 = pneg %p205
      %p212 = scmp.eq.s32.totalorder %s24, 1
      %p213 = por %p211, %p212
      %p214 = scmp.ne.s32.totalorder %s206, %s209
      %p215 = scmp.eq.s32.totalorder %s24, 0
      %p216 = por %p214, %p215
      %p217 = scmp.ne.s32.totalorder %s206, %s209
      %p218 = scmp.eq.s32.totalorder %s29, 1
      %p219 = por %p217, %p218
      %p220 = scmp.ne.s32.totalorder %s209, %s210
      %p221 = scmp.eq.s32.totalorder %s29, 0
      %p222 = por %p220, %p221
      %p223 = scmp.ne.s32.totalorder %s209, %s210
      %p224 = scmp.eq.s32.totalorder %s30, 1
      %p225 = por %p223, %p224
      %p227 = scmp.ne.s32.totalorder %s210, %s226
      %p228 = scmp.eq.s32.totalorder %s30, 0
      %p229 = por %p227, %p228
      %s230 = ssub.s32 %s24, %s31
      %p231 = scmp.eq.s32.totalorder %s230, 0
      %s233 = sadd.s32 %s232, 1
      %s234 = scalar_select %p231, %s232, %s233
      %p237 = pneg %p231
      %p238 = scmp.eq.s32.totalorder %s24, 1
      %p239 = por %p237, %p238
      %p240 = scmp.ne.s32.totalorder %s232, %s235
      %p241 = scmp.eq.s32.totalorder %s24, 0
      %p242 = por %p240, %p241
      %p243 = scmp.ne.s32.totalorder %s232, %s235
      %p244 = scmp.eq.s32.totalorder %s29, 1
      %p245 = por %p243, %p244
      %p246 = scmp.ne.s32.totalorder %s235, %s236
      %p247 = scmp.eq.s32.totalorder %s29, 0
      %p248 = por %p246, %p247
      %p249 = scmp.ne.s32.totalorder %s235, %s236
      %p250 = scmp.eq.s32.totalorder %s30, 1
      %p251 = por %p249, %p250
      %p253 = scmp.ne.s32.totalorder %s236, %s252
      %p254 = scmp.eq.s32.totalorder %s30, 0
      %p255 = por %p253, %p254
      %s256 = ssub.s32 %s24, %s31
      %p257 = scmp.eq.s32.totalorder %s256, 0
      %s259 = sadd.s32 %s258, 1
      %s260 = scalar_select %p257, %s258, %s259
      %p263 = pneg %p257
      %p264 = scmp.eq.s32.totalorder %s24, 1
      %p265 = por %p263, %p264
      %p266 = scmp.ne.s32.totalorder %s258, %s261
      %p267 = scmp.eq.s32.totalorder %s24, 0
      %p268 = por %p266, %p267
      %p269 = scmp.ne.s32.totalorder %s258, %s261
      %p270 = scmp.eq.s32.totalorder %s29, 1
      %p271 = por %p269, %p270
      %p272 = scmp.ne.s32.totalorder %s261, %s262
      %p273 = scmp.eq.s32.totalorder %s29, 0
      %p274 = por %p272, %p273
      %p275 = scmp.ne.s32.totalorder %s261, %s262
      %p276 = scmp.eq.s32.totalorder %s30, 1
      %p277 = por %p275, %p276
      %p279 = scmp.ne.s32.totalorder %s262, %s278
      %p280 = scmp.eq.s32.totalorder %s30, 0
      %p281 = por %p279, %p280
      %s282 = ssub.s32 %s24, %s31
      %p283 = scmp.eq.s32.totalorder %s282, 0
      %s285 = sadd.s32 %s284, 1
      %s286 = scalar_select %p283, %s284, %s285
      %p289 = pneg %p283
      %p290 = scmp.eq.s32.totalorder %s24, 1
      %p291 = por %p289, %p290
      %p292 = scmp.ne.s32.totalorder %s284, %s287
      %p293 = scmp.eq.s32.totalorder %s24, 0
      %p294 = por %p292, %p293
      %p295 = scmp.ne.s32.totalorder %s284, %s287
      %p296 = scmp.eq.s32.totalorder %s29, 1
      %p297 = por %p295, %p296
      %p298 = scmp.ne.s32.totalorder %s287, %s288
      %p299 = scmp.eq.s32.totalorder %s29, 0
      %p300 = por %p298, %p299
      %p301 = scmp.ne.s32.totalorder %s287, %s288
      %p302 = scmp.eq.s32.totalorder %s30, 1
      %p303 = por %p301, %p302
      %p305 = scmp.ne.s32.totalorder %s288, %s304
      %p306 = scmp.eq.s32.totalorder %s30, 0
      %p307 = por %p305, %p306
      %s308 = ssub.s32 %s24, %s31
      %p309 = scmp.eq.s32.totalorder %s308, 0
      %s311 = sadd.s32 %s310, 1
      %s312 = scalar_select %p309, %s310, %s311
      %p315 = pneg %p309
      %p316 = scmp.eq.s32.totalorder %s24, 1
      %p317 = por %p315, %p316
      %p318 = scmp.ne.s32.totalorder %s310, %s313
      %p319 = scmp.eq.s32.totalorder %s24, 0
      %p320 = por %p318, %p319
      %p321 = scmp.ne.s32.totalorder %s310, %s313
      %p322 = scmp.eq.s32.totalorder %s29, 1
      %p323 = por %p321, %p322
      %p324 = scmp.ne.s32.totalorder %s313, %s314
      %p325 = scmp.eq.s32.totalorder %s29, 0
      %p326 = por %p324, %p325
      %p327 = scmp.ne.s32.totalorder %s313, %s314
      %p328 = scmp.eq.s32.totalorder %s30, 1
      %p329 = por %p327, %p328
      %p331 = scmp.ne.s32.totalorder %s314, %s330
      %p332 = scmp.eq.s32.totalorder %s30, 0
      %p333 = por %p331, %p332
      %s334 = ssub.s32 %s24, %s31
      %p335 = scmp.eq.s32.totalorder %s334, 0
      %s337 = sadd.s32 %s336, 1
      %s338 = scalar_select %p335, %s336, %s337
      %p341 = pneg %p335
      %p342 = scmp.eq.s32.totalorder %s24, 1
      %p343 = por %p341, %p342
      %p344 = scmp.ne.s32.totalorder %s336, %s339
      %p345 = scmp.eq.s32.totalorder %s24, 0
      %p346 = por %p344, %p345
      %p347 = scmp.ne.s32.totalorder %s336, %s339
      %p348 = scmp.eq.s32.totalorder %s29, 1
      %p349 = por %p347, %p348
      %p350 = scmp.ne.s32.totalorder %s339, %s340
      %p351 = scmp.eq.s32.totalorder %s29, 0
      %p352 = por %p350, %p351
      %p353 = scmp.ne.s32.totalorder %s339, %s340
      %p354 = scmp.eq.s32.totalorder %s30, 1
      %p355 = por %p353, %p354
      %p357 = scmp.ne.s32.totalorder %s340, %s356
      %p358 = scmp.eq.s32.totalorder %s30, 0
      %p359 = por %p357, %p358
      %s360 = ssub.s32 %s24, %s31
      %p361 = scmp.eq.s32.totalorder %s360, 0
      %s363 = sadd.s32 %s362, 1
      %s364 = scalar_select %p361, %s362, %s363
      %p367 = pneg %p361
      %p368 = scmp.eq.s32.totalorder %s24, 1
      %p369 = por %p367, %p368
      %p370 = scmp.ne.s32.totalorder %s362, %s365
      %p371 = scmp.eq.s32.totalorder %s24, 0
      %p372 = por %p370, %p371
      %p373 = scmp.ne.s32.totalorder %s362, %s365
      %p374 = scmp.eq.s32.totalorder %s29, 1
      %p375 = por %p373, %p374
      %p376 = scmp.ne.s32.totalorder %s365, %s366
      %p377 = scmp.eq.s32.totalorder %s29, 0
      %p378 = por %p376, %p377
      %p379 = scmp.ne.s32.totalorder %s365, %s366
      %p380 = scmp.eq.s32.totalorder %s30, 1
      %p381 = por %p379, %p380
      %p383 = scmp.ne.s32.totalorder %s366, %s382
      %p384 = scmp.eq.s32.totalorder %s30, 0
      %p385 = por %p383, %p384
      %s386 = ssub.s32 %s24, %s31
      %p387 = scmp.eq.s32.totalorder %s386, 0
      %s389 = sadd.s32 %s388, 1
      %s390 = scalar_select %p387, %s388, %s389
      %p393 = pneg %p387
      %p394 = scmp.eq.s32.totalorder %s24, 1
      %p395 = por %p393, %p394
      %p396 = scmp.ne.s32.totalorder %s388, %s391
      %p397 = scmp.eq.s32.totalorder %s24, 0
      %p398 = por %p396, %p397
      %p399 = scmp.ne.s32.totalorder %s388, %s391
      %p400 = scmp.eq.s32.totalorder %s29, 1
      %p401 = por %p399, %p400
      %p402 = scmp.ne.s32.totalorder %s391, %s392
      %p403 = scmp.eq.s32.totalorder %s29, 0
      %p404 = por %p402, %p403
      %p405 = scmp.ne.s32.totalorder %s391, %s392
      %p406 = scmp.eq.s32.totalorder %s30, 1
      %p407 = por %p405, %p406
      %p409 = scmp.ne.s32.totalorder %s392, %s408
      %p410 = scmp.eq.s32.totalorder %s30, 0
      %p411 = por %p409, %p410
      %s413 = sadd.s32 %s412, 1
      %p416 = scmp.eq.s32.totalorder %s24, 1
      %p417 = scmp.ne.s32.totalorder %s412, %s414
      %p418 = scmp.eq.s32.totalorder %s24, 0
      %p419 = por %p417, %p418
      %p420 = scmp.ne.s32.totalorder %s412, %s414
      %p421 = scmp.eq.s32.totalorder %s29, 1
      %p422 = por %p420, %p421
      %p423 = scmp.ne.s32.totalorder %s414, %s415
      %p424 = scmp.eq.s32.totalorder %s29, 0
      %p425 = por %p423, %p424
      %p426 = scmp.ne.s32.totalorder %s414, %s415
      %p427 = scmp.eq.s32.totalorder %s30, 1
      %p428 = por %p426, %p427
      %p430 = scmp.ne.s32.totalorder %s415, %s429
      %p431 = scmp.eq.s32.totalorder %s30, 0
      %p432 = por %p430, %p431
      %s434 = sadd.s32 %s433, 1
      %p437 = scmp.eq.s32.totalorder %s24, 1
      %p438 = scmp.ne.s32.totalorder %s433, %s435
      %p439 = scmp.eq.s32.totalorder %s24, 0
      %p440 = por %p438, %p439
      %p441 = scmp.ne.s32.totalorder %s433, %s435
      %p442 = scmp.eq.s32.totalorder %s29, 1
      %p443 = por %p441, %p442
      %p444 = scmp.ne.s32.totalorder %s435, %s436
      %p445 = scmp.eq.s32.totalorder %s29, 0
      %p446 = por %p444, %p445
      %p447 = scmp.ne.s32.totalorder %s435, %s436
      %p448 = scmp.eq.s32.totalorder %s30, 1
      %p449 = por %p447, %p448
      %p451 = scmp.ne.s32.totalorder %s436, %s450
      %p452 = scmp.eq.s32.totalorder %s30, 0
      %p453 = por %p451, %p452
      %s455 = sadd.s32 %s454, 1
      %p458 = scmp.eq.s32.totalorder %s24, 1
      %p459 = scmp.ne.s32.totalorder %s454, %s456
      %p460 = scmp.eq.s32.totalorder %s24, 0
      %p461 = por %p459, %p460
      %p462 = scmp.ne.s32.totalorder %s454, %s456
      %p463 = scmp.eq.s32.totalorder %s29, 1
      %p464 = por %p462, %p463
      %p465 = scmp.ne.s32.totalorder %s456, %s457
      %p466 = scmp.eq.s32.totalorder %s29, 0
      %p467 = por %p465, %p466
      %p468 = scmp.ne.s32.totalorder %s456, %s457
      %p469 = scmp.eq.s32.totalorder %s30, 1
      %p470 = por %p468, %p469
      %p472 = scmp.ne.s32.totalorder %s457, %s471
      %p473 = scmp.eq.s32.totalorder %s30, 0
      %p474 = por %p472, %p473
      %p475 = scmp.le.s32.totalorder 1, %s24
      %p476 = scmp.lt.s32.totalorder %s24, 3
      %p477 = pnand %p475, %p476
      %p478 = pneg %p477
      // Predicated region
      $region9: #{transformer_forward.1} parent=5 // pred_check
        _
      $region10: #{transformer_forward.1} parent=5 // pred_check_branch
        %480 = sbr.rel (%p477) target = $region12
      $region11: #{transformer_forward.1} parent=5 // pred_region
        %s481 = ssub.s32 %s24, 1
        // Predicated region
        $region13: #{transformer_forward.1} parent=11 // pred_check
          %p482 = pneg %p45
        $region14: #{transformer_forward.1} parent=11 // pred_check_branch
          %484 = sbr.rel (%p482) target = $region16
        $region15: #{transformer_forward.1} parent=11 // pred_region
          _
        $region16: #{transformer_forward.1} parent=11 // pred_fallthru
          _
        // Predicated region
        $region17: #{transformer_forward.1} parent=11 // pred_check
          %p485 = pneg %p66
        $region18: #{transformer_forward.1} parent=11 // pred_check_branch
          %487 = sbr.rel (%p485) target = $region20
        $region19: #{transformer_forward.1} parent=11 // pred_region
          _
        $region20: #{transformer_forward.1} parent=11 // pred_fallthru
          _
        // Predicated region
        $region21: #{transformer_forward.1} parent=11 // pred_check
          %p488 = pneg %p425
        $region22: #{transformer_forward.1} parent=11 // pred_check_branch
          %490 = sbr.rel (%p488) target = $region24
        $region23: #{transformer_forward.1} parent=11 // pred_region
          _
        $region24: #{transformer_forward.1} parent=11 // pred_fallthru
          _
        // Predicated region
        $region25: #{transformer_forward.1} parent=11 // pred_check
          %p491 = pneg %p446
        $region26: #{transformer_forward.1} parent=11 // pred_check_branch
          %493 = sbr.rel (%p491) target = $region28
        $region27: #{transformer_forward.1} parent=11 // pred_region
          _
        $region28: #{transformer_forward.1} parent=11 // pred_fallthru
          _
      $region12: #{transformer_forward.1} parent=5 // pred_fallthru
        _
      %p494 = scmp.lt.s32.totalorder %s24, 2
      // Predicated region
      $region29: #{transformer_forward.1} parent=5 // pred_check
        %p495 = pneg %p494
      $region30: #{transformer_forward.1} parent=5 // pred_check_branch
        %497 = sbr.rel (%p495) target = $region32
      $region31: #{transformer_forward.1} parent=5 // pred_region
        // Predicated region
        $region33: #{transformer_forward.1} parent=31 // pred_check
          %p498 = pneg %p86
        $region34: #{transformer_forward.1} parent=31 // pred_check_branch
          %500 = sbr.rel (%p498) target = $region36
        $region35: #{transformer_forward.1} parent=31 // pred_region
          %p501 = scmp.lt.s32.totalorder %s24, 1
          %s502 = scalar_select %p501, %s24, 1
          %s503 = scalar_lea.vmem %s2, %s502
        $region36: #{transformer_forward.1} parent=31 // pred_fallthru
          _
        // Predicated region
        $region37: #{transformer_forward.1} parent=31 // pred_check
          %p504 = pneg %p112
        $region38: #{transformer_forward.1} parent=31 // pred_check_branch
          %506 = sbr.rel (%p504) target = $region40
        $region39: #{transformer_forward.1} parent=31 // pred_region
          %p507 = scmp.lt.s32.totalorder %s24, 1
          %s508 = scalar_select %p507, %s24, 1
          %s509 = scalar_lea.vmem %s3, %s508
        $region40: #{transformer_forward.1} parent=31 // pred_fallthru
          _
        // Predicated region
        $region41: #{transformer_forward.1} parent=31 // pred_check
          %p510 = pneg %p138
        $region42: #{transformer_forward.1} parent=31 // pred_check_branch
          %512 = sbr.rel (%p510) target = $region44
        $region43: #{transformer_forward.1} parent=31 // pred_region
          %p513 = scmp.lt.s32.totalorder %s24, 1
          %s514 = scalar_select %p513, %s24, 1
          %s515 = smul.addr %s514, 4
          %s516 = smul.addr %s515, 8
          %s517 = scalar_lea.vmem %s4, %s516
        $region44: #{transformer_forward.1} parent=31 // pred_fallthru
          _
        // Predicated region
        $region45: #{transformer_forward.1} parent=31 // pred_check
          %p518 = pneg %p164
        $region46: #{transformer_forward.1} parent=31 // pred_check_branch
          %520 = sbr.rel (%p518) target = $region48
        $region47: #{transformer_forward.1} parent=31 // pred_region
          %p521 = scmp.lt.s32.totalorder %s24, 1
          %s522 = scalar_select %p521, %s24, 1
          %s523 = smul.addr %s522, 4
          %s524 = smul.addr %s523, 8
          %s525 = scalar_lea.vmem %s5, %s524
        $region48: #{transformer_forward.1} parent=31 // pred_fallthru
          _
        // Predicated region
        $region49: #{transformer_forward.1} parent=31 // pred_check
          %p526 = pneg %p190
        $region50: #{transformer_forward.1} parent=31 // pred_check_branch
          %528 = sbr.rel (%p526) target = $region52
        $region51: #{transformer_forward.1} parent=31 // pred_region
          %p529 = scmp.lt.s32.totalorder %s24, 1
          %s530 = scalar_select %p529, %s24, 1
          %s531 = smul.addr %s530, 4
          %s532 = smul.addr %s531, 8
          %s533 = scalar_lea.vmem %s6, %s532
        $region52: #{transformer_forward.1} parent=31 // pred_fallthru
          _
        // Predicated region
        $region53: #{transformer_forward.1} parent=31 // pred_check
          %p534 = pneg %p216
        $region54: #{transformer_forward.1} parent=31 // pred_check_branch
          %536 = sbr.rel (%p534) target = $region56
        $region55: #{transformer_forward.1} parent=31 // pred_region
          %p537 = scmp.lt.s32.totalorder %s24, 1
          %s538 = scalar_select %p537, %s24, 1
          %s539 = smul.addr %s538, 4
          %s540 = smul.addr %s539, 8
          %s541 = scalar_lea.vmem %s7, %s540
        $region56: #{transformer_forward.1} parent=31 // pred_fallthru
          _
        // Predicated region
        $region57: #{transformer_forward.1} parent=31 // pred_check
          %p542 = pneg %p242
        $region58: #{transformer_forward.1} parent=31 // pred_check_branch
          %544 = sbr.rel (%p542) target = $region60
        $region59: #{transformer_forward.1} parent=31 // pred_region
          %p545 = scmp.lt.s32.totalorder %s24, 1
          %s546 = scalar_select %p545, %s24, 1
          %s547 = scalar_lea.vmem %s8, %s546
        $region60: #{transformer_forward.1} parent=31 // pred_fallthru
          _
        // Predicated region
        $region61: #{transformer_forward.1} parent=31 // pred_check
          %p548 = pneg %p268
        $region62: #{transformer_forward.1} parent=31 // pred_check_branch
          %550 = sbr.rel (%p548) target = $region64
        $region63: #{transformer_forward.1} parent=31 // pred_region
          %p551 = scmp.lt.s32.totalorder %s24, 1
          %s552 = scalar_select %p551, %s24, 1
          %s553 = scalar_lea.vmem %s9, %s552
        $region64: #{transformer_forward.1} parent=31 // pred_fallthru
          _
        // Predicated region
        $region65: #{transformer_forward.1} parent=31 // pred_check
          %p554 = pneg %p294
        $region66: #{transformer_forward.1} parent=31 // pred_check_branch
          %556 = sbr.rel (%p554) target = $region68
        $region67: #{transformer_forward.1} parent=31 // pred_region
          %p557 = scmp.lt.s32.totalorder %s24, 1
          %s558 = scalar_select %p557, %s24, 1
          %s559 = scalar_lea.vmem %s10, %s558
        $region68: #{transformer_forward.1} parent=31 // pred_fallthru
          _
        // Predicated region
        $region69: #{transformer_forward.1} parent=31 // pred_check
          %p560 = pneg %p320
        $region70: #{transformer_forward.1} parent=31 // pred_check_branch
          %562 = sbr.rel (%p560) target = $region72
        $region71: #{transformer_forward.1} parent=31 // pred_region
          %p563 = scmp.lt.s32.totalorder %s24, 1
          %s564 = scalar_select %p563, %s24, 1
          %s565 = smul.addr %s564, 4
          %s566 = smul.addr %s565, 8
          %s567 = scalar_lea.vmem %s11, %s566
        $region72: #{transformer_forward.1} parent=31 // pred_fallthru
          _
        // Predicated region
        $region73: #{transformer_forward.1} parent=31 // pred_check
          %p568 = pneg %p346
        $region74: #{transformer_forward.1} parent=31 // pred_check_branch
          %570 = sbr.rel (%p568) target = $region76
        $region75: #{transformer_forward.1} parent=31 // pred_region
          %p571 = scmp.lt.s32.totalorder %s24, 1
          %s572 = scalar_select %p571, %s24, 1
          %s573 = scalar_lea.vmem %s12, %s572
        $region76: #{transformer_forward.1} parent=31 // pred_fallthru
          _
        // Predicated region
        $region77: #{transformer_forward.1} parent=31 // pred_check
          %p574 = pneg %p372
        $region78: #{transformer_forward.1} parent=31 // pred_check_branch
          %576 = sbr.rel (%p574) target = $region80
        $region79: #{transformer_forward.1} parent=31 // pred_region
          %p577 = scmp.lt.s32.totalorder %s24, 1
          %s578 = scalar_select %p577, %s24, 1
          %s579 = smul.addr %s578, 8
          %s580 = smul.addr %s579, 8
          %s581 = scalar_lea.vmem %s13, %s580
        $region80: #{transformer_forward.1} parent=31 // pred_fallthru
          _
        // Predicated region
        $region81: #{transformer_forward.1} parent=31 // pred_check
          %p582 = pneg %p398
        $region82: #{transformer_forward.1} parent=31 // pred_check_branch
          %584 = sbr.rel (%p582) target = $region84
        $region83: #{transformer_forward.1} parent=31 // pred_region
          %p585 = scmp.lt.s32.totalorder %s24, 1
          %s586 = scalar_select %p585, %s24, 1
          %s587 = scalar_lea.vmem %s14, %s586
        $region84: #{transformer_forward.1} parent=31 // pred_fallthru
          _
      $region32: #{transformer_forward.1} parent=5 // pred_fallthru
        _
      %p588 = scmp.le.s32.totalorder 1, %s24
      %p589 = scmp.lt.s32.totalorder %s24, 3
      %p590 = pnand %p588, %p589
      %p591 = pneg %p590
      // Predicated region
      $region85: #{transformer_forward.1} parent=5 // pred_check
        _
      $region86: #{transformer_forward.1} parent=5 // pred_check_branch
        %593 = sbr.rel (%p590) target = $region88
      $region87: #{transformer_forward.1} parent=5 // pred_region
        %s594 = ssub.s32 %s24, 1
        %p595 = pneg %p45
        %p596 = pneg %p42
        %p597 = pneg %p66
        %p598 = pneg %p63
        %p599 = scmp.lt.s32.totalorder %s29, 1
        %s600 = scalar_select %p599, %s29, 1
        %s601 = scalar_lea.vmem %s2, %s600
        %p602 = pneg %p92
        %p603 = pneg %p89
        %p604 = scmp.lt.s32.totalorder %s29, 1
        %s605 = scalar_select %p604, %s29, 1
        %s606 = scalar_lea.vmem %s3, %s605
        %p607 = pneg %p118
        %p608 = pneg %p115
        %p609 = scmp.lt.s32.totalorder %s29, 1
        %s610 = scalar_select %p609, %s29, 1
        %s611 = smul.addr %s610, 4
        %s612 = smul.addr %s611, 8
        %s613 = scalar_lea.vmem %s4, %s612
        %p614 = pneg %p144
        %p615 = pneg %p141
        %p616 = scmp.lt.s32.totalorder %s29, 1
        %s617 = scalar_select %p616, %s29, 1
        %s618 = smul.addr %s617, 4
        %s619 = smul.addr %s618, 8
        %s620 = scalar_lea.vmem %s5, %s619
        %p621 = pneg %p170
        %p622 = pneg %p167
        %p623 = scmp.lt.s32.totalorder %s29, 1
        %s624 = scalar_select %p623, %s29, 1
        %s625 = smul.addr %s624, 4
        %s626 = smul.addr %s625, 8
        %s627 = scalar_lea.vmem %s6, %s626
        %p628 = pneg %p196
        %p629 = pneg %p193
        %p630 = scmp.lt.s32.totalorder %s29, 1
        %s631 = scalar_select %p630, %s29, 1
        %s632 = smul.addr %s631, 4
        %s633 = smul.addr %s632, 8
        %s634 = scalar_lea.vmem %s7, %s633
        %p635 = pneg %p222
        %p636 = pneg %p219
        %p637 = scmp.lt.s32.totalorder %s29, 1
        %s638 = scalar_select %p637, %s29, 1
        %s639 = scalar_lea.vmem %s8, %s638
        %p640 = pneg %p248
        %p641 = pneg %p245
        %p642 = scmp.lt.s32.totalorder %s29, 1
        %s643 = scalar_select %p642, %s29, 1
        %s644 = scalar_lea.vmem %s9, %s643
        %p645 = pneg %p274
        %p646 = pneg %p271
        %p647 = scmp.lt.s32.totalorder %s29, 1
        %s648 = scalar_select %p647, %s29, 1
        %s649 = scalar_lea.vmem %s10, %s648
        %p650 = pneg %p300
        %p651 = pneg %p297
        %p652 = scmp.lt.s32.totalorder %s29, 1
        %s653 = scalar_select %p652, %s29, 1
        %s654 = smul.addr %s653, 4
        %s655 = smul.addr %s654, 8
        %s656 = scalar_lea.vmem %s11, %s655
        %p657 = pneg %p326
        %p658 = pneg %p323
        %p659 = scmp.lt.s32.totalorder %s29, 1
        %s660 = scalar_select %p659, %s29, 1
        %s661 = scalar_lea.vmem %s12, %s660
        %p662 = pneg %p352
        %p663 = pneg %p349
        %p664 = scmp.lt.s32.totalorder %s29, 1
        %s665 = scalar_select %p664, %s29, 1
        %s666 = smul.addr %s665, 8
        %s667 = smul.addr %s666, 8
        %s668 = scalar_lea.vmem %s13, %s667
        %p669 = pneg %p378
        %p670 = pneg %p375
        %p671 = scmp.lt.s32.totalorder %s29, 1
        %s672 = scalar_select %p671, %s29, 1
        %s673 = scalar_lea.vmem %s14, %s672
        %p674 = pneg %p404
        %p675 = pneg %p401
        %p676 = pneg %p425
        %p677 = pneg %p422
        %p678 = pneg %p446
        %p679 = pneg %p443
        %p680 = pneg %p467
        %p681 = pneg %p464
        %p682 = scmp.lt.s32.totalorder %s29, 1
        %s683 = scalar_select %p682, %s29, 1
        %s684 = scalar_lea.vmem %s2, %s683
        %p685 = scmp.lt.s32.totalorder %s29, 1
        %s686 = scalar_select %p685, %s29, 1
        %s687 = scalar_lea.vmem %s3, %s686
        %p688 = scmp.lt.s32.totalorder %s29, 1
        %s689 = scalar_select %p688, %s29, 1
        %s690 = smul.addr %s689, 4
        %s691 = smul.addr %s690, 8
        %s692 = scalar_lea.vmem %s4, %s691
        %p693 = scmp.lt.s32.totalorder %s29, 1
        %s694 = scalar_select %p693, %s29, 1
        %s695 = smul.addr %s694, 4
        %s696 = smul.addr %s695, 8
        %s697 = scalar_lea.vmem %s5, %s696
        %p698 = scmp.lt.s32.totalorder %s29, 1
        %s699 = scalar_select %p698, %s29, 1
        %s700 = smul.addr %s699, 4
        %s701 = smul.addr %s700, 8
        %s702 = scalar_lea.vmem %s6, %s701
        %p703 = scmp.lt.s32.totalorder %s29, 1
        %s704 = scalar_select %p703, %s29, 1
        %s705 = smul.addr %s704, 4
        %s706 = smul.addr %s705, 8
        %s707 = scalar_lea.vmem %s7, %s706
        %p708 = scmp.lt.s32.totalorder %s29, 1
        %s709 = scalar_select %p708, %s29, 1
        %s710 = scalar_lea.vmem %s8, %s709
        %p711 = scmp.lt.s32.totalorder %s29, 1
        %s712 = scalar_select %p711, %s29, 1
        %s713 = scalar_lea.vmem %s9, %s712
        %p714 = scmp.lt.s32.totalorder %s29, 1
        %s715 = scalar_select %p714, %s29, 1
        %s716 = scalar_lea.vmem %s10, %s715
        %p717 = scmp.lt.s32.totalorder %s29, 1
        %s718 = scalar_select %p717, %s29, 1
        %s719 = smul.addr %s718, 4
        %s720 = smul.addr %s719, 8
        %s721 = scalar_lea.vmem %s11, %s720
        %p722 = scmp.lt.s32.totalorder %s29, 1
        %s723 = scalar_select %p722, %s29, 1
        %s724 = scalar_lea.vmem %s12, %s723
        %p725 = scmp.lt.s32.totalorder %s29, 1
        %s726 = scalar_select %p725, %s29, 1
        %s727 = smul.addr %s726, 8
        %s728 = smul.addr %s727, 8
        %s729 = scalar_lea.vmem %s13, %s728
        %p730 = scmp.lt.s32.totalorder %s29, 1
        %s731 = scalar_select %p730, %s29, 1
        %s732 = scalar_lea.vmem %s14, %s731
        %p733 = scmp.eq.s32.totalorder %s29, 0
        // Predicated region
        $region89: #{transformer_forward.1} parent=87 // pred_check
          %p734 = pneg %p733
        $region90: #{transformer_forward.1} parent=87 // pred_check_branch
          %736 = sbr.rel (%p734) target = $region92
        $region91: #{transformer_forward.1} parent=87 // pred_region
          %v737 = vld [vmem:[%s0] sm:$0xff]
          %v738 = vld [vmem:[%s0 + $0x8] sm:$0xff]
          %vm739 = vcmask 261120
          %740 = vst.msk [vmem:[#allocation2] sm:$0xff] %vm739, %v737
          %741 = vst.msk [vmem:[#allocation2 + $0x8] sm:$0xff] %vm739, %v738
        $region92: #{transformer_forward.1} parent=87 // pred_fallthru
          _
        %v742 = vld [vmem:[#allocation2] sm:$0xff]
        %v743 = vld [vmem:[#allocation2 + $0x8] sm:$0xff]
        %v744 = vld [vmem:[%s684] sm:$0x1]
        %v745 = vld [vmem:[%s687] sm:$0x1]
        %vm746 = vcmask 261120
        %v747 = vsel %vm746, %v742, 0.0
        %748 = vadd.xlane.f32.xlu0 %v747
        %v749 = vpop.xlane.xlu0 %748
        %v750 = vsel %vm746, %v743, 0.0
        %751 = vadd.xlane.f32.xlu0 %v750
        %v752 = vpop.xlane.xlu0 %751
        %v753 = vrcp.pop 32.0
        %v754 = vmul.f32 32.0, %v753
        %v755 = vsub.f32 1.0, %v754
        %v756 = vmul.f32 %v753, %v755
        %v757 = vadd.f32 %v753, %v756
        %vm758 = vweird.f32 %v753
        %v759 = vsel %vm758, %v753, %v757
        %v760 = vmul.f32 %v749, %v759
        %v761 = vmul.f32 %v752, %v759
        %v762 = vsub.f32 %v742, %v760
        %v763 = vsub.f32 %v743, %v761
        %v764 = vmul.f32 %v762, %v762
        %v765 = vmul.f32 %v763, %v763
        %v766 = vsel %vm746, %v764, 0.0
        %767 = vadd.xlane.f32.xlu0 %v766
        %v768 = vpop.xlane.xlu0 %767
        %v769 = vsel %vm746, %v765, 0.0
        %770 = vadd.xlane.f32.xlu0 %v769
        %v771 = vpop.xlane.xlu0 %770
        %v772 = vmul.f32 %v768, %v759
        %v773 = vmul.f32 %v771, %v759
        %v774 = vadd.f32 %v772, 1e-05
        %v775 = vadd.f32 %v773, 1e-05
        %v776 = vrsqrt.pop %v774
        %v777 = vmul.f32 %v776, %v774
        %v778 = vmul.f32 %v777, %v776
        %v779 = vmul.f32 0.5, %v778
        %v780 = vsub.f32 1.5, %v779
        %v781 = vmul.f32 %v776, %v780
        %vm782 = vweird.f32 %v774
        %vm783 = vweird.f32 %v776
        %vm784 = vmor %vm782, %vm783
        %v785 = vsel %vm784, %v776, %v781
        %v786 = vrsqrt.pop %v775
        %v787 = vmul.f32 %v786, %v775
        %v788 = vmul.f32 %v787, %v786
        %v789 = vmul.f32 0.5, %v788
        %v790 = vsub.f32 1.5, %v789
        %v791 = vmul.f32 %v786, %v790
        %vm792 = vweird.f32 %v775
        %vm793 = vweird.f32 %v786
        %vm794 = vmor %vm792, %vm793
        %v795 = vsel %vm794, %v786, %v791
        %v796 = vmul.f32 %v762, %v785
        %v797 = vmul.f32 %v763, %v795
        %v799 = vperm.slane %v744, 0
        %v801 = vmul.f32 %v796, %v799
        %v802 = vmul.f32 %v797, %v799
        %v804 = vperm.slane %v745, 0
        %v806 = vadd.f32 %v801, %v804
        %v807 = vadd.f32 %v802, %v804
        %v808 = vld [vmem:[%s692] sm:$0xff]
        %v809 = vld [vmem:[%s692 + $0x8] sm:$0xff]
        %v810 = vld [vmem:[%s692 + $0x10] sm:$0xff]
        %v811 = vld [vmem:[%s692 + $0x18] sm:$0xff]
        %v813 = vsel %vm746, %v806, 0
        %v816 = vsel %vm746, %v807, 0
        %818 = vmatpush.msra.mxu0 0.0
        %819 = vmatpush.msra.mxu0 0.0
        %820 = vmatpush.msra.mxu0 0.0
        %821 = vmatpush.msra.mxu0 0.0
        %822 = vmatpush.msra.mxu0 0.0
        %823 = vmatpush.msra.mxu0 0.0
        %824 = vmatpush.msra.mxu0 0.0
        %825 = vmatpush.msra.mxu0 0.0
        %826 = vmatpush.msra.mxu0 0.0
        %827 = vmatpush.msra.mxu0 0.0
        %828 = vmatpush.msra.mxu0 0.0
        %829 = vmatpush.msra.mxu0 0.0
        %v830 = vand.u32 %v811, 4294901760
        %831 = vmatpush.msra.mxu0 %v830
        %v832 = vand.u32 %v810, 4294901760
        %833 = vmatpush.msra.mxu0 %v832
        %v834 = vand.u32 %v809, 4294901760
        %835 = vmatpush.msra.mxu0 %v834
        %v836 = vand.u32 %v808, 4294901760
        %837 = vmatpush.msra.mxu0 %v836
        %v838 = vand.u32 %v813, 4294901760
        %v839 = vsub.f32 %v813, %v838
        %v840 = vand.u32 %v839, 4294901760
        %v841 = vsub.f32 %v839, %v840
        %v842 = vand.u32 %v841, 4294901760
        %843 = vmatmul.f32.gmra.mxu0 %v842
        %v844 = vpop.f32.mrf.mxu0
        %v845 = vadd.f32 0.0, %v844
        %v846 = vand.u32 %v816, 4294901760
        %v847 = vsub.f32 %v816, %v846
        %v848 = vand.u32 %v847, 4294901760
        %v849 = vsub.f32 %v847, %v848
        %v850 = vand.u32 %v849, 4294901760
        %851 = vmatmul.f32.gmra.mxu0 %v850
        %v852 = vpop.f32.mrf.mxu0
        %v853 = vadd.f32 0.0, %v852
        %854 = vdwg.mxu0
        %855 = vmatpush.msra.mxu0 0.0
        %856 = vmatpush.msra.mxu0 0.0
        %857 = vmatpush.msra.mxu0 0.0
        %858 = vmatpush.msra.mxu0 0.0
        %859 = vmatpush.msra.mxu0 0.0
        %860 = vmatpush.msra.mxu0 0.0
        %861 = vmatpush.msra.mxu0 0.0
        %862 = vmatpush.msra.mxu0 0.0
        %863 = vmatpush.msra.mxu0 0.0
        %864 = vmatpush.msra.mxu0 0.0
        %865 = vmatpush.msra.mxu0 0.0
        %866 = vmatpush.msra.mxu0 0.0
        %v867 = vand.u32 %v811, 4294901760
        %v868 = vsub.f32 %v811, %v867
        %v869 = vand.u32 %v868, 4294901760
        %v870 = vsub.f32 %v868, %v869
        %v871 = vand.u32 %v870, 4294901760
        %872 = vmatpush.msra.mxu0 %v871
        %v873 = vand.u32 %v810, 4294901760
        %v874 = vsub.f32 %v810, %v873
        %v875 = vand.u32 %v874, 4294901760
        %v876 = vsub.f32 %v874, %v875
        %v877 = vand.u32 %v876, 4294901760
        %878 = vmatpush.msra.mxu0 %v877
        %v879 = vand.u32 %v809, 4294901760
        %v880 = vsub.f32 %v809, %v879
        %v881 = vand.u32 %v880, 4294901760
        %v882 = vsub.f32 %v880, %v881
        %v883 = vand.u32 %v882, 4294901760
        %884 = vmatpush.msra.mxu0 %v883
        %v885 = vand.u32 %v808, 4294901760
        %v886 = vsub.f32 %v808, %v885
        %v887 = vand.u32 %v886, 4294901760
        %v888 = vsub.f32 %v886, %v887
        %v889 = vand.u32 %v888, 4294901760
        %890 = vmatpush.msra.mxu0 %v889
        %v891 = vand.u32 %v813, 4294901760
        %892 = vmatmul.f32.gmra.mxu0 %v891
        %v893 = vpop.f32.mrf.mxu0
        %v894 = vadd.f32 %v845, %v893
        %v895 = vand.u32 %v816, 4294901760
        %896 = vmatmul.f32.gmra.mxu0 %v895
        %v897 = vpop.f32.mrf.mxu0
        %v898 = vadd.f32 %v853, %v897
        %899 = vdwg.mxu0
        %900 = vmatpush.msra.mxu0 0.0
        %901 = vmatpush.msra.mxu0 0.0
        %902 = vmatpush.msra.mxu0 0.0
        %903 = vmatpush.msra.mxu0 0.0
        %904 = vmatpush.msra.mxu0 0.0
        %905 = vmatpush.msra.mxu0 0.0
        %906 = vmatpush.msra.mxu0 0.0
        %907 = vmatpush.msra.mxu0 0.0
        %908 = vmatpush.msra.mxu0 0.0
        %909 = vmatpush.msra.mxu0 0.0
        %910 = vmatpush.msra.mxu0 0.0
        %911 = vmatpush.msra.mxu0 0.0
        %v912 = vand.u32 %v811, 4294901760
        %v913 = vsub.f32 %v811, %v912
        %914 = vmatpush.msra.mxu0 %v913
        %v915 = vand.u32 %v810, 4294901760
        %v916 = vsub.f32 %v810, %v915
        %917 = vmatpush.msra.mxu0 %v916
        %v918 = vand.u32 %v809, 4294901760
        %v919 = vsub.f32 %v809, %v918
        %920 = vmatpush.msra.mxu0 %v919
        %v921 = vand.u32 %v808, 4294901760
        %v922 = vsub.f32 %v808, %v921
        %923 = vmatpush.msra.mxu0 %v922
        %v924 = vand.u32 %v813, 4294901760
        %v925 = vsub.f32 %v813, %v924
        %926 = vmatmul.f32.gmra.mxu0 %v925
        %v927 = vpop.f32.mrf.mxu0
        %v928 = vadd.f32 %v894, %v927
        %v929 = vand.u32 %v816, 4294901760
        %v930 = vsub.f32 %v816, %v929
        %931 = vmatmul.f32.gmra.mxu0 %v930
        %v932 = vpop.f32.mrf.mxu0
        %v933 = vadd.f32 %v898, %v932
        %934 = vdwg.mxu0
        %935 = vmatpush.msra.mxu0 0.0
        %936 = vmatpush.msra.mxu0 0.0
        %937 = vmatpush.msra.mxu0 0.0
        %938 = vmatpush.msra.mxu0 0.0
        %939 = vmatpush.msra.mxu0 0.0
        %940 = vmatpush.msra.mxu0 0.0
        %941 = vmatpush.msra.mxu0 0.0
        %942 = vmatpush.msra.mxu0 0.0
        %943 = vmatpush.msra.mxu0 0.0
        %944 = vmatpush.msra.mxu0 0.0
        %945 = vmatpush.msra.mxu0 0.0
        %946 = vmatpush.msra.mxu0 0.0
        %v947 = vand.u32 %v811, 4294901760
        %948 = vmatpush.msra.mxu0 %v947
        %v949 = vand.u32 %v810, 4294901760
        %950 = vmatpush.msra.mxu0 %v949
        %v951 = vand.u32 %v809, 4294901760
        %952 = vmatpush.msra.mxu0 %v951
        %v953 = vand.u32 %v808, 4294901760
        %954 = vmatpush.msra.mxu0 %v953
        %v955 = vand.u32 %v813, 4294901760
        %v956 = vsub.f32 %v813, %v955
        %v957 = vand.u32 %v956, 4294901760
        %958 = vmatmul.f32.gmra.mxu0 %v957
        %v959 = vpop.f32.mrf.mxu0
        %v960 = vadd.f32 %v928, %v959
        %v961 = vand.u32 %v816, 4294901760
        %v962 = vsub.f32 %v816, %v961
        %v963 = vand.u32 %v962, 4294901760
        %964 = vmatmul.f32.gmra.mxu0 %v963
        %v965 = vpop.f32.mrf.mxu0
        %v966 = vadd.f32 %v933, %v965
        %967 = vdwg.mxu0
        %968 = vmatpush.msra.mxu0 0.0
        %969 = vmatpush.msra.mxu0 0.0
        %970 = vmatpush.msra.mxu0 0.0
        %971 = vmatpush.msra.mxu0 0.0
        %972 = vmatpush.msra.mxu0 0.0
        %973 = vmatpush.msra.mxu0 0.0
        %974 = vmatpush.msra.mxu0 0.0
        %975 = vmatpush.msra.mxu0 0.0
        %976 = vmatpush.msra.mxu0 0.0
        %977 = vmatpush.msra.mxu0 0.0
        %978 = vmatpush.msra.mxu0 0.0
        %979 = vmatpush.msra.mxu0 0.0
        %v980 = vand.u32 %v811, 4294901760
        %v981 = vsub.f32 %v811, %v980
        %v982 = vand.u32 %v981, 4294901760
        %983 = vmatpush.msra.mxu0 %v982
        %v984 = vand.u32 %v810, 4294901760
        %v985 = vsub.f32 %v810, %v984
        %v986 = vand.u32 %v985, 4294901760
        %987 = vmatpush.msra.mxu0 %v986
        %v988 = vand.u32 %v809, 4294901760
        %v989 = vsub.f32 %v809, %v988
        %v990 = vand.u32 %v989, 4294901760
        %991 = vmatpush.msra.mxu0 %v990
        %v992 = vand.u32 %v808, 4294901760
        %v993 = vsub.f32 %v808, %v992
        %v994 = vand.u32 %v993, 4294901760
        %995 = vmatpush.msra.mxu0 %v994
        %v996 = vand.u32 %v813, 4294901760
        %997 = vmatmul.f32.gmra.mxu0 %v996
        %v998 = vpop.f32.mrf.mxu0
        %v999 = vadd.f32 %v960, %v998
        %v1000 = vand.u32 %v816, 4294901760
        %1001 = vmatmul.f32.gmra.mxu0 %v1000
        %v1002 = vpop.f32.mrf.mxu0
        %v1003 = vadd.f32 %v966, %v1002
        %1004 = vdwg.mxu0
        %1005 = vmatpush.msra.mxu0 0.0
        %1006 = vmatpush.msra.mxu0 0.0
        %1007 = vmatpush.msra.mxu0 0.0
        %1008 = vmatpush.msra.mxu0 0.0
        %1009 = vmatpush.msra.mxu0 0.0
        %1010 = vmatpush.msra.mxu0 0.0
        %1011 = vmatpush.msra.mxu0 0.0
        %1012 = vmatpush.msra.mxu0 0.0
        %1013 = vmatpush.msra.mxu0 0.0
        %1014 = vmatpush.msra.mxu0 0.0
        %1015 = vmatpush.msra.mxu0 0.0
        %1016 = vmatpush.msra.mxu0 0.0
        %v1017 = vand.u32 %v811, 4294901760
        %1018 = vmatpush.msra.mxu0 %v1017
        %v1019 = vand.u32 %v810, 4294901760
        %1020 = vmatpush.msra.mxu0 %v1019
        %v1021 = vand.u32 %v809, 4294901760
        %1022 = vmatpush.msra.mxu0 %v1021
        %v1023 = vand.u32 %v808, 4294901760
        %1024 = vmatpush.msra.mxu0 %v1023
        %v1025 = vand.u32 %v813, 4294901760
        %1026 = vmatmul.f32.gmra.mxu0 %v1025
        %v1027 = vpop.f32.mrf.mxu0
        %v1028 = vadd.f32 %v999, %v1027
        %v1029 = vand.u32 %v816, 4294901760
        %1030 = vmatmul.f32.gmra.mxu0 %v1029
        %v1031 = vpop.f32.mrf.mxu0
        %v1032 = vadd.f32 %v1003, %v1031
        %1033 = vdwg.mxu0
        %v1034 = vld [vmem:[%s697] sm:$0xff]
        %v1035 = vld [vmem:[%s697 + $0x8] sm:$0xff]
        %v1036 = vld [vmem:[%s697 + $0x10] sm:$0xff]
        %v1037 = vld [vmem:[%s697 + $0x18] sm:$0xff]
        %1038 = vmatpush.msra.mxu0 0.0
        %1039 = vmatpush.msra.mxu0 0.0
        %1040 = vmatpush.msra.mxu0 0.0
        %1041 = vmatpush.msra.mxu0 0.0
        %1042 = vmatpush.msra.mxu0 0.0
        %1043 = vmatpush.msra.mxu0 0.0
        %1044 = vmatpush.msra.mxu0 0.0
        %1045 = vmatpush.msra.mxu0 0.0
        %1046 = vmatpush.msra.mxu0 0.0
        %1047 = vmatpush.msra.mxu0 0.0
        %1048 = vmatpush.msra.mxu0 0.0
        %1049 = vmatpush.msra.mxu0 0.0
        %v1050 = vand.u32 %v1037, 4294901760
        %1051 = vmatpush.msra.mxu0 %v1050
        %v1052 = vand.u32 %v1036, 4294901760
        %1053 = vmatpush.msra.mxu0 %v1052
        %v1054 = vand.u32 %v1035, 4294901760
        %1055 = vmatpush.msra.mxu0 %v1054
        %v1056 = vand.u32 %v1034, 4294901760
        %1057 = vmatpush.msra.mxu0 %v1056
        %v1058 = vand.u32 %v813, 4294901760
        %v1059 = vsub.f32 %v813, %v1058
        %v1060 = vand.u32 %v1059, 4294901760
        %v1061 = vsub.f32 %v1059, %v1060
        %v1062 = vand.u32 %v1061, 4294901760
        %1063 = vmatmul.f32.gmra.mxu0 %v1062
        %v1064 = vpop.f32.mrf.mxu0
        %v1065 = vadd.f32 0.0, %v1064
        %v1066 = vand.u32 %v816, 4294901760
        %v1067 = vsub.f32 %v816, %v1066
        %v1068 = vand.u32 %v1067, 4294901760
        %v1069 = vsub.f32 %v1067, %v1068
        %v1070 = vand.u32 %v1069, 4294901760
        %1071 = vmatmul.f32.gmra.mxu0 %v1070
        %v1072 = vpop.f32.mrf.mxu0
        %v1073 = vadd.f32 0.0, %v1072
        %1074 = vdwg.mxu0
        %1075 = vmatpush.msra.mxu0 0.0
        %1076 = vmatpush.msra.mxu0 0.0
        %1077 = vmatpush.msra.mxu0 0.0
        %1078 = vmatpush.msra.mxu0 0.0
        %1079 = vmatpush.msra.mxu0 0.0
        %1080 = vmatpush.msra.mxu0 0.0
        %1081 = vmatpush.msra.mxu0 0.0
        %1082 = vmatpush.msra.mxu0 0.0
        %1083 = vmatpush.msra.mxu0 0.0
        %1084 = vmatpush.msra.mxu0 0.0
        %1085 = vmatpush.msra.mxu0 0.0
        %1086 = vmatpush.msra.mxu0 0.0
        %v1087 = vand.u32 %v1037, 4294901760
        %v1088 = vsub.f32 %v1037, %v1087
        %v1089 = vand.u32 %v1088, 4294901760
        %v1090 = vsub.f32 %v1088, %v1089
        %v1091 = vand.u32 %v1090, 4294901760
        %1092 = vmatpush.msra.mxu0 %v1091
        %v1093 = vand.u32 %v1036, 4294901760
        %v1094 = vsub.f32 %v1036, %v1093
        %v1095 = vand.u32 %v1094, 4294901760
        %v1096 = vsub.f32 %v1094, %v1095
        %v1097 = vand.u32 %v1096, 4294901760
        %1098 = vmatpush.msra.mxu0 %v1097
        %v1099 = vand.u32 %v1035, 4294901760
        %v1100 = vsub.f32 %v1035, %v1099
        %v1101 = vand.u32 %v1100, 4294901760
        %v1102 = vsub.f32 %v1100, %v1101
        %v1103 = vand.u32 %v1102, 4294901760
        %1104 = vmatpush.msra.mxu0 %v1103
        %v1105 = vand.u32 %v1034, 4294901760
        %v1106 = vsub.f32 %v1034, %v1105
        %v1107 = vand.u32 %v1106, 4294901760
        %v1108 = vsub.f32 %v1106, %v1107
        %v1109 = vand.u32 %v1108, 4294901760
        %1110 = vmatpush.msra.mxu0 %v1109
        %v1111 = vand.u32 %v813, 4294901760
        %1112 = vmatmul.f32.gmra.mxu0 %v1111
        %v1113 = vpop.f32.mrf.mxu0
        %v1114 = vadd.f32 %v1065, %v1113
        %v1115 = vand.u32 %v816, 4294901760
        %1116 = vmatmul.f32.gmra.mxu0 %v1115
        %v1117 = vpop.f32.mrf.mxu0
        %v1118 = vadd.f32 %v1073, %v1117
        %1119 = vdwg.mxu0
        %1120 = vmatpush.msra.mxu0 0.0
        %1121 = vmatpush.msra.mxu0 0.0
        %1122 = vmatpush.msra.mxu0 0.0
        %1123 = vmatpush.msra.mxu0 0.0
        %1124 = vmatpush.msra.mxu0 0.0
        %1125 = vmatpush.msra.mxu0 0.0
        %1126 = vmatpush.msra.mxu0 0.0
        %1127 = vmatpush.msra.mxu0 0.0
        %1128 = vmatpush.msra.mxu0 0.0
        %1129 = vmatpush.msra.mxu0 0.0
        %1130 = vmatpush.msra.mxu0 0.0
        %1131 = vmatpush.msra.mxu0 0.0
        %v1132 = vand.u32 %v1037, 4294901760
        %v1133 = vsub.f32 %v1037, %v1132
        %1134 = vmatpush.msra.mxu0 %v1133
        %v1135 = vand.u32 %v1036, 4294901760
        %v1136 = vsub.f32 %v1036, %v1135
        %1137 = vmatpush.msra.mxu0 %v1136
        %v1138 = vand.u32 %v1035, 4294901760
        %v1139 = vsub.f32 %v1035, %v1138
        %1140 = vmatpush.msra.mxu0 %v1139
        %v1141 = vand.u32 %v1034, 4294901760
        %v1142 = vsub.f32 %v1034, %v1141
        %1143 = vmatpush.msra.mxu0 %v1142
        %v1144 = vand.u32 %v813, 4294901760
        %v1145 = vsub.f32 %v813, %v1144
        %1146 = vmatmul.f32.gmra.mxu0 %v1145
        %v1147 = vpop.f32.mrf.mxu0
        %v1148 = vadd.f32 %v1114, %v1147
        %v1149 = vand.u32 %v816, 4294901760
        %v1150 = vsub.f32 %v816, %v1149
        %1151 = vmatmul.f32.gmra.mxu0 %v1150
        %v1152 = vpop.f32.mrf.mxu0
        %v1153 = vadd.f32 %v1118, %v1152
        %1154 = vdwg.mxu0
        %1155 = vmatpush.msra.mxu0 0.0
        %1156 = vmatpush.msra.mxu0 0.0
        %1157 = vmatpush.msra.mxu0 0.0
        %1158 = vmatpush.msra.mxu0 0.0
        %1159 = vmatpush.msra.mxu0 0.0
        %1160 = vmatpush.msra.mxu0 0.0
        %1161 = vmatpush.msra.mxu0 0.0
        %1162 = vmatpush.msra.mxu0 0.0
        %1163 = vmatpush.msra.mxu0 0.0
        %1164 = vmatpush.msra.mxu0 0.0
        %1165 = vmatpush.msra.mxu0 0.0
        %1166 = vmatpush.msra.mxu0 0.0
        %v1167 = vand.u32 %v1037, 4294901760
        %1168 = vmatpush.msra.mxu0 %v1167
        %v1169 = vand.u32 %v1036, 4294901760
        %1170 = vmatpush.msra.mxu0 %v1169
        %v1171 = vand.u32 %v1035, 4294901760
        %1172 = vmatpush.msra.mxu0 %v1171
        %v1173 = vand.u32 %v1034, 4294901760
        %1174 = vmatpush.msra.mxu0 %v1173
        %v1175 = vand.u32 %v813, 4294901760
        %v1176 = vsub.f32 %v813, %v1175
        %v1177 = vand.u32 %v1176, 4294901760
        %1178 = vmatmul.f32.gmra.mxu0 %v1177
        %v1179 = vpop.f32.mrf.mxu0
        %v1180 = vadd.f32 %v1148, %v1179
        %v1181 = vand.u32 %v816, 4294901760
        %v1182 = vsub.f32 %v816, %v1181
        %v1183 = vand.u32 %v1182, 4294901760
        %1184 = vmatmul.f32.gmra.mxu0 %v1183
        %v1185 = vpop.f32.mrf.mxu0
        %v1186 = vadd.f32 %v1153, %v1185
        %1187 = vdwg.mxu0
        %1188 = vmatpush.msra.mxu0 0.0
        %1189 = vmatpush.msra.mxu0 0.0
        %1190 = vmatpush.msra.mxu0 0.0
        %1191 = vmatpush.msra.mxu0 0.0
        %1192 = vmatpush.msra.mxu0 0.0
        %1193 = vmatpush.msra.mxu0 0.0
        %1194 = vmatpush.msra.mxu0 0.0
        %1195 = vmatpush.msra.mxu0 0.0
        %1196 = vmatpush.msra.mxu0 0.0
        %1197 = vmatpush.msra.mxu0 0.0
        %1198 = vmatpush.msra.mxu0 0.0
        %1199 = vmatpush.msra.mxu0 0.0
        %v1200 = vand.u32 %v1037, 4294901760
        %v1201 = vsub.f32 %v1037, %v1200
        %v1202 = vand.u32 %v1201, 4294901760
        %1203 = vmatpush.msra.mxu0 %v1202
        %v1204 = vand.u32 %v1036, 4294901760
        %v1205 = vsub.f32 %v1036, %v1204
        %v1206 = vand.u32 %v1205, 4294901760
        %1207 = vmatpush.msra.mxu0 %v1206
        %v1208 = vand.u32 %v1035, 4294901760
        %v1209 = vsub.f32 %v1035, %v1208
        %v1210 = vand.u32 %v1209, 4294901760
        %1211 = vmatpush.msra.mxu0 %v1210
        %v1212 = vand.u32 %v1034, 4294901760
        %v1213 = vsub.f32 %v1034, %v1212
        %v1214 = vand.u32 %v1213, 4294901760
        %1215 = vmatpush.msra.mxu0 %v1214
        %v1216 = vand.u32 %v813, 4294901760
        %1217 = vmatmul.f32.gmra.mxu0 %v1216
        %v1218 = vpop.f32.mrf.mxu0
        %v1219 = vadd.f32 %v1180, %v1218
        %v1220 = vand.u32 %v816, 4294901760
        %1221 = vmatmul.f32.gmra.mxu0 %v1220
        %v1222 = vpop.f32.mrf.mxu0
        %v1223 = vadd.f32 %v1186, %v1222
        %1224 = vdwg.mxu0
        %1225 = vmatpush.msra.mxu0 0.0
        %1226 = vmatpush.msra.mxu0 0.0
        %1227 = vmatpush.msra.mxu0 0.0
        %1228 = vmatpush.msra.mxu0 0.0
        %1229 = vmatpush.msra.mxu0 0.0
        %1230 = vmatpush.msra.mxu0 0.0
        %1231 = vmatpush.msra.mxu0 0.0
        %1232 = vmatpush.msra.mxu0 0.0
        %1233 = vmatpush.msra.mxu0 0.0
        %1234 = vmatpush.msra.mxu0 0.0
        %1235 = vmatpush.msra.mxu0 0.0
        %1236 = vmatpush.msra.mxu0 0.0
        %v1237 = vand.u32 %v1037, 4294901760
        %1238 = vmatpush.msra.mxu0 %v1237
        %v1239 = vand.u32 %v1036, 4294901760
        %1240 = vmatpush.msra.mxu0 %v1239
        %v1241 = vand.u32 %v1035, 4294901760
        %1242 = vmatpush.msra.mxu0 %v1241
        %v1243 = vand.u32 %v1034, 4294901760
        %1244 = vmatpush.msra.mxu0 %v1243
        %v1245 = vand.u32 %v813, 4294901760
        %1246 = vmatmul.f32.gmra.mxu0 %v1245
        %v1247 = vpop.f32.mrf.mxu0
        %v1248 = vadd.f32 %v1219, %v1247
        %v1249 = vand.u32 %v816, 4294901760
        %1250 = vmatmul.f32.gmra.mxu0 %v1249
        %v1251 = vpop.f32.mrf.mxu0
        %v1252 = vadd.f32 %v1223, %v1251
        %1253 = vdwg.mxu0
        %v1254 = vld [vmem:[%s702] sm:$0xff]
        %v1255 = vld [vmem:[%s702 + $0x8] sm:$0xff]
        %v1256 = vld [vmem:[%s702 + $0x10] sm:$0xff]
        %v1257 = vld [vmem:[%s702 + $0x18] sm:$0xff]
        %1258 = vmatpush.msra.mxu0 0.0
        %1259 = vmatpush.msra.mxu0 0.0
        %1260 = vmatpush.msra.mxu0 0.0
        %1261 = vmatpush.msra.mxu0 0.0
        %1262 = vmatpush.msra.mxu0 0.0
        %1263 = vmatpush.msra.mxu0 0.0
        %1264 = vmatpush.msra.mxu0 0.0
        %1265 = vmatpush.msra.mxu0 0.0
        %1266 = vmatpush.msra.mxu0 0.0
        %1267 = vmatpush.msra.mxu0 0.0
        %1268 = vmatpush.msra.mxu0 0.0
        %1269 = vmatpush.msra.mxu0 0.0
        %v1270 = vand.u32 %v1257, 4294901760
        %1271 = vmatpush.msra.mxu0 %v1270
        %v1272 = vand.u32 %v1256, 4294901760
        %1273 = vmatpush.msra.mxu0 %v1272
        %v1274 = vand.u32 %v1255, 4294901760
        %1275 = vmatpush.msra.mxu0 %v1274
        %v1276 = vand.u32 %v1254, 4294901760
        %1277 = vmatpush.msra.mxu0 %v1276
        %v1278 = vand.u32 %v813, 4294901760
        %v1279 = vsub.f32 %v813, %v1278
        %v1280 = vand.u32 %v1279, 4294901760
        %v1281 = vsub.f32 %v1279, %v1280
        %v1282 = vand.u32 %v1281, 4294901760
        %1283 = vmatmul.f32.gmra.mxu0 %v1282
        %v1284 = vpop.f32.mrf.mxu0
        %v1285 = vadd.f32 0.0, %v1284
        %v1286 = vand.u32 %v816, 4294901760
        %v1287 = vsub.f32 %v816, %v1286
        %v1288 = vand.u32 %v1287, 4294901760
        %v1289 = vsub.f32 %v1287, %v1288
        %v1290 = vand.u32 %v1289, 4294901760
        %1291 = vmatmul.f32.gmra.mxu0 %v1290
        %v1292 = vpop.f32.mrf.mxu0
        %v1293 = vadd.f32 0.0, %v1292
        %1294 = vdwg.mxu0
        %1295 = vmatpush.msra.mxu0 0.0
        %1296 = vmatpush.msra.mxu0 0.0
        %1297 = vmatpush.msra.mxu0 0.0
        %1298 = vmatpush.msra.mxu0 0.0
        %1299 = vmatpush.msra.mxu0 0.0
        %1300 = vmatpush.msra.mxu0 0.0
        %1301 = vmatpush.msra.mxu0 0.0
        %1302 = vmatpush.msra.mxu0 0.0
        %1303 = vmatpush.msra.mxu0 0.0
        %1304 = vmatpush.msra.mxu0 0.0
        %1305 = vmatpush.msra.mxu0 0.0
        %1306 = vmatpush.msra.mxu0 0.0
        %v1307 = vand.u32 %v1257, 4294901760
        %v1308 = vsub.f32 %v1257, %v1307
        %v1309 = vand.u32 %v1308, 4294901760
        %v1310 = vsub.f32 %v1308, %v1309
        %v1311 = vand.u32 %v1310, 4294901760
        %1312 = vmatpush.msra.mxu0 %v1311
        %v1313 = vand.u32 %v1256, 4294901760
        %v1314 = vsub.f32 %v1256, %v1313
        %v1315 = vand.u32 %v1314, 4294901760
        %v1316 = vsub.f32 %v1314, %v1315
        %v1317 = vand.u32 %v1316, 4294901760
        %1318 = vmatpush.msra.mxu0 %v1317
        %v1319 = vand.u32 %v1255, 4294901760
        %v1320 = vsub.f32 %v1255, %v1319
        %v1321 = vand.u32 %v1320, 4294901760
        %v1322 = vsub.f32 %v1320, %v1321
        %v1323 = vand.u32 %v1322, 4294901760
        %1324 = vmatpush.msra.mxu0 %v1323
        %v1325 = vand.u32 %v1254, 4294901760
        %v1326 = vsub.f32 %v1254, %v1325
        %v1327 = vand.u32 %v1326, 4294901760
        %v1328 = vsub.f32 %v1326, %v1327
        %v1329 = vand.u32 %v1328, 4294901760
        %1330 = vmatpush.msra.mxu0 %v1329
        %v1331 = vand.u32 %v813, 4294901760
        %1332 = vmatmul.f32.gmra.mxu0 %v1331
        %v1333 = vpop.f32.mrf.mxu0
        %v1334 = vadd.f32 %v1285, %v1333
        %v1335 = vand.u32 %v816, 4294901760
        %1336 = vmatmul.f32.gmra.mxu0 %v1335
        %v1337 = vpop.f32.mrf.mxu0
        %v1338 = vadd.f32 %v1293, %v1337
        %1339 = vdwg.mxu0
        %1340 = vmatpush.msra.mxu0 0.0
        %1341 = vmatpush.msra.mxu0 0.0
        %1342 = vmatpush.msra.mxu0 0.0
        %1343 = vmatpush.msra.mxu0 0.0
        %1344 = vmatpush.msra.mxu0 0.0
        %1345 = vmatpush.msra.mxu0 0.0
        %1346 = vmatpush.msra.mxu0 0.0
        %1347 = vmatpush.msra.mxu0 0.0
        %1348 = vmatpush.msra.mxu0 0.0
        %1349 = vmatpush.msra.mxu0 0.0
        %1350 = vmatpush.msra.mxu0 0.0
        %1351 = vmatpush.msra.mxu0 0.0
        %v1352 = vand.u32 %v1257, 4294901760
        %v1353 = vsub.f32 %v1257, %v1352
        %1354 = vmatpush.msra.mxu0 %v1353
        %v1355 = vand.u32 %v1256, 4294901760
        %v1356 = vsub.f32 %v1256, %v1355
        %1357 = vmatpush.msra.mxu0 %v1356
        %v1358 = vand.u32 %v1255, 4294901760
        %v1359 = vsub.f32 %v1255, %v1358
        %1360 = vmatpush.msra.mxu0 %v1359
        %v1361 = vand.u32 %v1254, 4294901760
        %v1362 = vsub.f32 %v1254, %v1361
        %1363 = vmatpush.msra.mxu0 %v1362
        %v1364 = vand.u32 %v813, 4294901760
        %v1365 = vsub.f32 %v813, %v1364
        %1366 = vmatmul.f32.gmra.mxu0 %v1365
        %v1367 = vpop.f32.mrf.mxu0
        %v1368 = vadd.f32 %v1334, %v1367
        %v1369 = vand.u32 %v816, 4294901760
        %v1370 = vsub.f32 %v816, %v1369
        %1371 = vmatmul.f32.gmra.mxu0 %v1370
        %v1372 = vpop.f32.mrf.mxu0
        %v1373 = vadd.f32 %v1338, %v1372
        %1374 = vdwg.mxu0
        %1375 = vmatpush.msra.mxu0 0.0
        %1376 = vmatpush.msra.mxu0 0.0
        %1377 = vmatpush.msra.mxu0 0.0
        %1378 = vmatpush.msra.mxu0 0.0
        %1379 = vmatpush.msra.mxu0 0.0
        %1380 = vmatpush.msra.mxu0 0.0
        %1381 = vmatpush.msra.mxu0 0.0
        %1382 = vmatpush.msra.mxu0 0.0
        %1383 = vmatpush.msra.mxu0 0.0
        %1384 = vmatpush.msra.mxu0 0.0
        %1385 = vmatpush.msra.mxu0 0.0
        %1386 = vmatpush.msra.mxu0 0.0
        %v1387 = vand.u32 %v1257, 4294901760
        %1388 = vmatpush.msra.mxu0 %v1387
        %v1389 = vand.u32 %v1256, 4294901760
        %1390 = vmatpush.msra.mxu0 %v1389
        %v1391 = vand.u32 %v1255, 4294901760
        %1392 = vmatpush.msra.mxu0 %v1391
        %v1393 = vand.u32 %v1254, 4294901760
        %1394 = vmatpush.msra.mxu0 %v1393
        %v1395 = vand.u32 %v813, 4294901760
        %v1396 = vsub.f32 %v813, %v1395
        %v1397 = vand.u32 %v1396, 4294901760
        %1398 = vmatmul.f32.gmra.mxu0 %v1397
        %v1399 = vpop.f32.mrf.mxu0
        %v1400 = vadd.f32 %v1368, %v1399
        %v1401 = vand.u32 %v816, 4294901760
        %v1402 = vsub.f32 %v816, %v1401
        %v1403 = vand.u32 %v1402, 4294901760
        %1404 = vmatmul.f32.gmra.mxu0 %v1403
        %v1405 = vpop.f32.mrf.mxu0
        %v1406 = vadd.f32 %v1373, %v1405
        %1407 = vdwg.mxu0
        %1408 = vmatpush.msra.mxu0 0.0
        %1409 = vmatpush.msra.mxu0 0.0
        %1410 = vmatpush.msra.mxu0 0.0
        %1411 = vmatpush.msra.mxu0 0.0
        %1412 = vmatpush.msra.mxu0 0.0
        %1413 = vmatpush.msra.mxu0 0.0
        %1414 = vmatpush.msra.mxu0 0.0
        %1415 = vmatpush.msra.mxu0 0.0
        %1416 = vmatpush.msra.mxu0 0.0
        %1417 = vmatpush.msra.mxu0 0.0
        %1418 = vmatpush.msra.mxu0 0.0
        %1419 = vmatpush.msra.mxu0 0.0
        %v1420 = vand.u32 %v1257, 4294901760
        %v1421 = vsub.f32 %v1257, %v1420
        %v1422 = vand.u32 %v1421, 4294901760
        %1423 = vmatpush.msra.mxu0 %v1422
        %v1424 = vand.u32 %v1256, 4294901760
        %v1425 = vsub.f32 %v1256, %v1424
        %v1426 = vand.u32 %v1425, 4294901760
        %1427 = vmatpush.msra.mxu0 %v1426
        %v1428 = vand.u32 %v1255, 4294901760
        %v1429 = vsub.f32 %v1255, %v1428
        %v1430 = vand.u32 %v1429, 4294901760
        %1431 = vmatpush.msra.mxu0 %v1430
        %v1432 = vand.u32 %v1254, 4294901760
        %v1433 = vsub.f32 %v1254, %v1432
        %v1434 = vand.u32 %v1433, 4294901760
        %1435 = vmatpush.msra.mxu0 %v1434
        %v1436 = vand.u32 %v813, 4294901760
        %1437 = vmatmul.f32.gmra.mxu0 %v1436
        %v1438 = vpop.f32.mrf.mxu0
        %v1439 = vadd.f32 %v1400, %v1438
        %v1440 = vand.u32 %v816, 4294901760
        %1441 = vmatmul.f32.gmra.mxu0 %v1440
        %v1442 = vpop.f32.mrf.mxu0
        %v1443 = vadd.f32 %v1406, %v1442
        %1444 = vdwg.mxu0
        %1445 = vmatpush.msra.mxu0 0.0
        %1446 = vmatpush.msra.mxu0 0.0
        %1447 = vmatpush.msra.mxu0 0.0
        %1448 = vmatpush.msra.mxu0 0.0
        %1449 = vmatpush.msra.mxu0 0.0
        %1450 = vmatpush.msra.mxu0 0.0
        %1451 = vmatpush.msra.mxu0 0.0
        %1452 = vmatpush.msra.mxu0 0.0
        %1453 = vmatpush.msra.mxu0 0.0
        %1454 = vmatpush.msra.mxu0 0.0
        %1455 = vmatpush.msra.mxu0 0.0
        %1456 = vmatpush.msra.mxu0 0.0
        %v1457 = vand.u32 %v1257, 4294901760
        %1458 = vmatpush.msra.mxu0 %v1457
        %v1459 = vand.u32 %v1256, 4294901760
        %1460 = vmatpush.msra.mxu0 %v1459
        %v1461 = vand.u32 %v1255, 4294901760
        %1462 = vmatpush.msra.mxu0 %v1461
        %v1463 = vand.u32 %v1254, 4294901760
        %1464 = vmatpush.msra.mxu0 %v1463
        %v1465 = vand.u32 %v813, 4294901760
        %1466 = vmatmul.f32.gmra.mxu0 %v1465
        %v1467 = vpop.f32.mrf.mxu0
        %v1468 = vadd.f32 %v1439, %v1467
        %v1469 = vand.u32 %v816, 4294901760
        %1470 = vmatmul.f32.gmra.mxu0 %v1469
        %v1471 = vpop.f32.mrf.mxu0
        %v1472 = vadd.f32 %v1443, %v1471
        %1473 = vdwg.mxu0
        %v1474 = vld [vmem:[%s1] sm:$0xff]
        %v1475 = vld [vmem:[%s1 + $0x8] sm:$0xff]
        %v1476 = vld [vmem:[%s1 + $0x10] sm:$0xff]
        %v1477 = vld [vmem:[%s1 + $0x18] sm:$0xff]
        %v1478 = vmul.f32 %v1028, %v1474
        %v1479 = vmul.f32 %v1028, %v1475
        %v1480 = vmul.f32 %v1028, %v1476
        %v1481 = vmul.f32 %v1028, %v1477
        %v1482 = vmul.f32 %v1032, %v1474
        %v1483 = vmul.f32 %v1032, %v1475
        %v1484 = vmul.f32 %v1032, %v1476
        %v1485 = vmul.f32 %v1032, %v1477
        %v1487 = vsel %vm746, %v1478, 0
        %v1490 = vsel %vm746, %v1479, 0
        %v1493 = vsel %vm746, %v1480, 0
        %v1496 = vsel %vm746, %v1481, 0
        %v1499 = vsel %vm746, %v1248, 0
        %1501 = vmatpush.xpose.msra.mxu0 0.0
        %1502 = vmatpush.xpose.msra.mxu0 0.0
        %1503 = vmatpush.xpose.msra.mxu0 0.0
        %1504 = vmatpush.xpose.msra.mxu0 0.0
        %1505 = vmatpush.xpose.msra.mxu0 0.0
        %1506 = vmatpush.xpose.msra.mxu0 0.0
        %1507 = vmatpush.xpose.msra.mxu0 0.0
        %1508 = vmatpush.xpose.msra.mxu0 0.0
        %1509 = vmatpush.xpose.msra.mxu0 0.0
        %1510 = vmatpush.xpose.msra.mxu0 0.0
        %1511 = vmatpush.xpose.msra.mxu0 0.0
        %1512 = vmatpush.xpose.msra.mxu0 0.0
        %1513 = vmatpush.xpose.msra.mxu0 0.0
        %1514 = vmatpush.xpose.msra.mxu0 0.0
        %1515 = vmatpush.xpose.msra.mxu0 0.0
        %v1516 = vand.u32 %v1499, 4294901760
        %1517 = vmatpush.xpose.msra.mxu0 %v1516
        %v1518 = vand.u32 %v1487, 4294901760
        %v1519 = vsub.f32 %v1487, %v1518
        %v1520 = vand.u32 %v1519, 4294901760
        %v1521 = vsub.f32 %v1519, %v1520
        %v1522 = vand.u32 %v1521, 4294901760
        %1523 = vmatmul.f32.gmra.mxu0 %v1522
        %v1524 = vpop.f32.mrf.mxu0
        %v1525 = vadd.f32 0.0, %v1524
        %v1526 = vand.u32 %v1490, 4294901760
        %v1527 = vsub.f32 %v1490, %v1526
        %v1528 = vand.u32 %v1527, 4294901760
        %v1529 = vsub.f32 %v1527, %v1528
        %v1530 = vand.u32 %v1529, 4294901760
        %1531 = vmatmul.f32.gmra.mxu0 %v1530
        %v1532 = vpop.f32.mrf.mxu0
        %v1533 = vadd.f32 0.0, %v1532
        %v1534 = vand.u32 %v1493, 4294901760
        %v1535 = vsub.f32 %v1493, %v1534
        %v1536 = vand.u32 %v1535, 4294901760
        %v1537 = vsub.f32 %v1535, %v1536
        %v1538 = vand.u32 %v1537, 4294901760
        %1539 = vmatmul.f32.gmra.mxu0 %v1538
        %v1540 = vpop.f32.mrf.mxu0
        %v1541 = vadd.f32 0.0, %v1540
        %v1542 = vand.u32 %v1496, 4294901760
        %v1543 = vsub.f32 %v1496, %v1542
        %v1544 = vand.u32 %v1543, 4294901760
        %v1545 = vsub.f32 %v1543, %v1544
        %v1546 = vand.u32 %v1545, 4294901760
        %1547 = vmatmul.f32.gmra.mxu0 %v1546
        %v1548 = vpop.f32.mrf.mxu0
        %v1549 = vadd.f32 0.0, %v1548
        %1550 = vdwg.mxu0
        %1551 = vmatpush.xpose.msra.mxu0 0.0
        %1552 = vmatpush.xpose.msra.mxu0 0.0
        %1553 = vmatpush.xpose.msra.mxu0 0.0
        %1554 = vmatpush.xpose.msra.mxu0 0.0
        %1555 = vmatpush.xpose.msra.mxu0 0.0
        %1556 = vmatpush.xpose.msra.mxu0 0.0
        %1557 = vmatpush.xpose.msra.mxu0 0.0
        %1558 = vmatpush.xpose.msra.mxu0 0.0
        %1559 = vmatpush.xpose.msra.mxu0 0.0
        %1560 = vmatpush.xpose.msra.mxu0 0.0
        %1561 = vmatpush.xpose.msra.mxu0 0.0
        %1562 = vmatpush.xpose.msra.mxu0 0.0
        %1563 = vmatpush.xpose.msra.mxu0 0.0
        %1564 = vmatpush.xpose.msra.mxu0 0.0
        %1565 = vmatpush.xpose.msra.mxu0 0.0
        %v1566 = vand.u32 %v1499, 4294901760
        %v1567 = vsub.f32 %v1499, %v1566
        %v1568 = vand.u32 %v1567, 4294901760
        %v1569 = vsub.f32 %v1567, %v1568
        %v1570 = vand.u32 %v1569, 4294901760
        %1571 = vmatpush.xpose.msra.mxu0 %v1570
        %v1572 = vand.u32 %v1487, 4294901760
        %1573 = vmatmul.f32.gmra.mxu0 %v1572
        %v1574 = vpop.f32.mrf.mxu0
        %v1575 = vadd.f32 %v1525, %v1574
        %v1576 = vand.u32 %v1490, 4294901760
        %1577 = vmatmul.f32.gmra.mxu0 %v1576
        %v1578 = vpop.f32.mrf.mxu0
        %v1579 = vadd.f32 %v1533, %v1578
        %v1580 = vand.u32 %v1493, 4294901760
        %1581 = vmatmul.f32.gmra.mxu0 %v1580
        %v1582 = vpop.f32.mrf.mxu0
        %v1583 = vadd.f32 %v1541, %v1582
        %v1584 = vand.u32 %v1496, 4294901760
        %1585 = vmatmul.f32.gmra.mxu0 %v1584
        %v1586 = vpop.f32.mrf.mxu0
        %v1587 = vadd.f32 %v1549, %v1586
        %1588 = vdwg.mxu0
        %1589 = vmatpush.xpose.msra.mxu0 0.0
        %1590 = vmatpush.xpose.msra.mxu0 0.0
        %1591 = vmatpush.xpose.msra.mxu0 0.0
        %1592 = vmatpush.xpose.msra.mxu0 0.0
        %1593 = vmatpush.xpose.msra.mxu0 0.0
        %1594 = vmatpush.xpose.msra.mxu0 0.0
        %1595 = vmatpush.xpose.msra.mxu0 0.0
        %1596 = vmatpush.xpose.msra.mxu0 0.0
        %1597 = vmatpush.xpose.msra.mxu0 0.0
        %1598 = vmatpush.xpose.msra.mxu0 0.0
        %1599 = vmatpush.xpose.msra.mxu0 0.0
        %1600 = vmatpush.xpose.msra.mxu0 0.0
        %1601 = vmatpush.xpose.msra.mxu0 0.0
        %1602 = vmatpush.xpose.msra.mxu0 0.0
        %1603 = vmatpush.xpose.msra.mxu0 0.0
        %v1604 = vand.u32 %v1499, 4294901760
        %v1605 = vsub.f32 %v1499, %v1604
        %1606 = vmatpush.xpose.msra.mxu0 %v1605
        %v1607 = vand.u32 %v1487, 4294901760
        %v1608 = vsub.f32 %v1487, %v1607
        %1609 = vmatmul.f32.gmra.mxu0 %v1608
        %v1610 = vpop.f32.mrf.mxu0
        %v1611 = vadd.f32 %v1575, %v1610
        %v1612 = vand.u32 %v1490, 4294901760
        %v1613 = vsub.f32 %v1490, %v1612
        %1614 = vmatmul.f32.gmra.mxu0 %v1613
        %v1615 = vpop.f32.mrf.mxu0
        %v1616 = vadd.f32 %v1579, %v1615
        %v1617 = vand.u32 %v1493, 4294901760
        %v1618 = vsub.f32 %v1493, %v1617
        %1619 = vmatmul.f32.gmra.mxu0 %v1618
        %v1620 = vpop.f32.mrf.mxu0
        %v1621 = vadd.f32 %v1583, %v1620
        %v1622 = vand.u32 %v1496, 4294901760
        %v1623 = vsub.f32 %v1496, %v1622
        %1624 = vmatmul.f32.gmra.mxu0 %v1623
        %v1625 = vpop.f32.mrf.mxu0
        %v1626 = vadd.f32 %v1587, %v1625
        %1627 = vdwg.mxu0
        %1628 = vmatpush.xpose.msra.mxu0 0.0
        %1629 = vmatpush.xpose.msra.mxu0 0.0
        %1630 = vmatpush.xpose.msra.mxu0 0.0
        %1631 = vmatpush.xpose.msra.mxu0 0.0
        %1632 = vmatpush.xpose.msra.mxu0 0.0
        %1633 = vmatpush.xpose.msra.mxu0 0.0
        %1634 = vmatpush.xpose.msra.mxu0 0.0
        %1635 = vmatpush.xpose.msra.mxu0 0.0
        %1636 = vmatpush.xpose.msra.mxu0 0.0
        %1637 = vmatpush.xpose.msra.mxu0 0.0
        %1638 = vmatpush.xpose.msra.mxu0 0.0
        %1639 = vmatpush.xpose.msra.mxu0 0.0
        %1640 = vmatpush.xpose.msra.mxu0 0.0
        %1641 = vmatpush.xpose.msra.mxu0 0.0
        %1642 = vmatpush.xpose.msra.mxu0 0.0
        %v1643 = vand.u32 %v1499, 4294901760
        %1644 = vmatpush.xpose.msra.mxu0 %v1643
        %v1645 = vand.u32 %v1487, 4294901760
        %v1646 = vsub.f32 %v1487, %v1645
        %v1647 = vand.u32 %v1646, 4294901760
        %1648 = vmatmul.f32.gmra.mxu0 %v1647
        %v1649 = vpop.f32.mrf.mxu0
        %v1650 = vadd.f32 %v1611, %v1649
        %v1651 = vand.u32 %v1490, 4294901760
        %v1652 = vsub.f32 %v1490, %v1651
        %v1653 = vand.u32 %v1652, 4294901760
        %1654 = vmatmul.f32.gmra.mxu0 %v1653
        %v1655 = vpop.f32.mrf.mxu0
        %v1656 = vadd.f32 %v1616, %v1655
        %v1657 = vand.u32 %v1493, 4294901760
        %v1658 = vsub.f32 %v1493, %v1657
        %v1659 = vand.u32 %v1658, 4294901760
        %1660 = vmatmul.f32.gmra.mxu0 %v1659
        %v1661 = vpop.f32.mrf.mxu0
        %v1662 = vadd.f32 %v1621, %v1661
        %v1663 = vand.u32 %v1496, 4294901760
        %v1664 = vsub.f32 %v1496, %v1663
        %v1665 = vand.u32 %v1664, 4294901760
        %1666 = vmatmul.f32.gmra.mxu0 %v1665
        %v1667 = vpop.f32.mrf.mxu0
        %v1668 = vadd.f32 %v1626, %v1667
        %1669 = vdwg.mxu0
        %1670 = vmatpush.xpose.msra.mxu0 0.0
        %1671 = vmatpush.xpose.msra.mxu0 0.0
        %1672 = vmatpush.xpose.msra.mxu0 0.0
        %1673 = vmatpush.xpose.msra.mxu0 0.0
        %1674 = vmatpush.xpose.msra.mxu0 0.0
        %1675 = vmatpush.xpose.msra.mxu0 0.0
        %1676 = vmatpush.xpose.msra.mxu0 0.0
        %1677 = vmatpush.xpose.msra.mxu0 0.0
        %1678 = vmatpush.xpose.msra.mxu0 0.0
        %1679 = vmatpush.xpose.msra.mxu0 0.0
        %1680 = vmatpush.xpose.msra.mxu0 0.0
        %1681 = vmatpush.xpose.msra.mxu0 0.0
        %1682 = vmatpush.xpose.msra.mxu0 0.0
        %1683 = vmatpush.xpose.msra.mxu0 0.0
        %1684 = vmatpush.xpose.msra.mxu0 0.0
        %v1685 = vand.u32 %v1499, 4294901760
        %v1686 = vsub.f32 %v1499, %v1685
        %v1687 = vand.u32 %v1686, 4294901760
        %1688 = vmatpush.xpose.msra.mxu0 %v1687
        %v1689 = vand.u32 %v1487, 4294901760
        %1690 = vmatmul.f32.gmra.mxu0 %v1689
        %v1691 = vpop.f32.mrf.mxu0
        %v1692 = vadd.f32 %v1650, %v1691
        %v1693 = vand.u32 %v1490, 4294901760
        %1694 = vmatmul.f32.gmra.mxu0 %v1693
        %v1695 = vpop.f32.mrf.mxu0
        %v1696 = vadd.f32 %v1656, %v1695
        %v1697 = vand.u32 %v1493, 4294901760
        %1698 = vmatmul.f32.gmra.mxu0 %v1697
        %v1699 = vpop.f32.mrf.mxu0
        %v1700 = vadd.f32 %v1662, %v1699
        %v1701 = vand.u32 %v1496, 4294901760
        %1702 = vmatmul.f32.gmra.mxu0 %v1701
        %v1703 = vpop.f32.mrf.mxu0
        %v1704 = vadd.f32 %v1668, %v1703
        %1705 = vdwg.mxu0
        %1706 = vmatpush.xpose.msra.mxu0 0.0
        %1707 = vmatpush.xpose.msra.mxu0 0.0
        %1708 = vmatpush.xpose.msra.mxu0 0.0
        %1709 = vmatpush.xpose.msra.mxu0 0.0
        %1710 = vmatpush.xpose.msra.mxu0 0.0
        %1711 = vmatpush.xpose.msra.mxu0 0.0
        %1712 = vmatpush.xpose.msra.mxu0 0.0
        %1713 = vmatpush.xpose.msra.mxu0 0.0
        %1714 = vmatpush.xpose.msra.mxu0 0.0
        %1715 = vmatpush.xpose.msra.mxu0 0.0
        %1716 = vmatpush.xpose.msra.mxu0 0.0
        %1717 = vmatpush.xpose.msra.mxu0 0.0
        %1718 = vmatpush.xpose.msra.mxu0 0.0
        %1719 = vmatpush.xpose.msra.mxu0 0.0
        %1720 = vmatpush.xpose.msra.mxu0 0.0
        %v1721 = vand.u32 %v1499, 4294901760
        %1722 = vmatpush.xpose.msra.mxu0 %v1721
        %v1723 = vand.u32 %v1487, 4294901760
        %1724 = vmatmul.f32.gmra.mxu0 %v1723
        %v1725 = vpop.f32.mrf.mxu0
        %v1726 = vadd.f32 %v1692, %v1725
        %v1727 = vand.u32 %v1490, 4294901760
        %1728 = vmatmul.f32.gmra.mxu0 %v1727
        %v1729 = vpop.f32.mrf.mxu0
        %v1730 = vadd.f32 %v1696, %v1729
        %v1731 = vand.u32 %v1493, 4294901760
        %1732 = vmatmul.f32.gmra.mxu0 %v1731
        %v1733 = vpop.f32.mrf.mxu0
        %v1734 = vadd.f32 %v1700, %v1733
        %v1735 = vand.u32 %v1496, 4294901760
        %1736 = vmatmul.f32.gmra.mxu0 %v1735
        %v1737 = vpop.f32.mrf.mxu0
        %v1738 = vadd.f32 %v1704, %v1737
        %1739 = vdwg.mxu0
        %v1741 = vsel %vm746, %v1482, 0
        %v1744 = vsel %vm746, %v1483, 0
        %v1747 = vsel %vm746, %v1484, 0
        %v1750 = vsel %vm746, %v1485, 0
        %v1753 = vsel %vm746, %v1252, 0
        %1755 = vmatpush.xpose.msra.mxu0 0.0
        %1756 = vmatpush.xpose.msra.mxu0 0.0
        %1757 = vmatpush.xpose.msra.mxu0 0.0
        %1758 = vmatpush.xpose.msra.mxu0 0.0
        %1759 = vmatpush.xpose.msra.mxu0 0.0
        %1760 = vmatpush.xpose.msra.mxu0 0.0
        %1761 = vmatpush.xpose.msra.mxu0 0.0
        %1762 = vmatpush.xpose.msra.mxu0 0.0
        %1763 = vmatpush.xpose.msra.mxu0 0.0
        %1764 = vmatpush.xpose.msra.mxu0 0.0
        %1765 = vmatpush.xpose.msra.mxu0 0.0
        %1766 = vmatpush.xpose.msra.mxu0 0.0
        %1767 = vmatpush.xpose.msra.mxu0 0.0
        %1768 = vmatpush.xpose.msra.mxu0 0.0
        %1769 = vmatpush.xpose.msra.mxu0 0.0
        %v1770 = vand.u32 %v1753, 4294901760
        %1771 = vmatpush.xpose.msra.mxu0 %v1770
        %v1772 = vand.u32 %v1741, 4294901760
        %v1773 = vsub.f32 %v1741, %v1772
        %v1774 = vand.u32 %v1773, 4294901760
        %v1775 = vsub.f32 %v1773, %v1774
        %v1776 = vand.u32 %v1775, 4294901760
        %1777 = vmatmul.f32.gmra.mxu0 %v1776
        %v1778 = vpop.f32.mrf.mxu0
        %v1779 = vadd.f32 0.0, %v1778
        %v1780 = vand.u32 %v1744, 4294901760
        %v1781 = vsub.f32 %v1744, %v1780
        %v1782 = vand.u32 %v1781, 4294901760
        %v1783 = vsub.f32 %v1781, %v1782
        %v1784 = vand.u32 %v1783, 4294901760
        %1785 = vmatmul.f32.gmra.mxu0 %v1784
        %v1786 = vpop.f32.mrf.mxu0
        %v1787 = vadd.f32 0.0, %v1786
        %v1788 = vand.u32 %v1747, 4294901760
        %v1789 = vsub.f32 %v1747, %v1788
        %v1790 = vand.u32 %v1789, 4294901760
        %v1791 = vsub.f32 %v1789, %v1790
        %v1792 = vand.u32 %v1791, 4294901760
        %1793 = vmatmul.f32.gmra.mxu0 %v1792
        %v1794 = vpop.f32.mrf.mxu0
        %v1795 = vadd.f32 0.0, %v1794
        %v1796 = vand.u32 %v1750, 4294901760
        %v1797 = vsub.f32 %v1750, %v1796
        %v1798 = vand.u32 %v1797, 4294901760
        %v1799 = vsub.f32 %v1797, %v1798
        %v1800 = vand.u32 %v1799, 4294901760
        %1801 = vmatmul.f32.gmra.mxu0 %v1800
        %v1802 = vpop.f32.mrf.mxu0
        %v1803 = vadd.f32 0.0, %v1802
        %1804 = vdwg.mxu0
        %1805 = vmatpush.xpose.msra.mxu0 0.0
        %1806 = vmatpush.xpose.msra.mxu0 0.0
        %1807 = vmatpush.xpose.msra.mxu0 0.0
        %1808 = vmatpush.xpose.msra.mxu0 0.0
        %1809 = vmatpush.xpose.msra.mxu0 0.0
        %1810 = vmatpush.xpose.msra.mxu0 0.0
        %1811 = vmatpush.xpose.msra.mxu0 0.0
        %1812 = vmatpush.xpose.msra.mxu0 0.0
        %1813 = vmatpush.xpose.msra.mxu0 0.0
        %1814 = vmatpush.xpose.msra.mxu0 0.0
        %1815 = vmatpush.xpose.msra.mxu0 0.0
        %1816 = vmatpush.xpose.msra.mxu0 0.0
        %1817 = vmatpush.xpose.msra.mxu0 0.0
        %1818 = vmatpush.xpose.msra.mxu0 0.0
        %1819 = vmatpush.xpose.msra.mxu0 0.0
        %v1820 = vand.u32 %v1753, 4294901760
        %v1821 = vsub.f32 %v1753, %v1820
        %v1822 = vand.u32 %v1821, 4294901760
        %v1823 = vsub.f32 %v1821, %v1822
        %v1824 = vand.u32 %v1823, 4294901760
        %1825 = vmatpush.xpose.msra.mxu0 %v1824
        %v1826 = vand.u32 %v1741, 4294901760
        %1827 = vmatmul.f32.gmra.mxu0 %v1826
        %v1828 = vpop.f32.mrf.mxu0
        %v1829 = vadd.f32 %v1779, %v1828
        %v1830 = vand.u32 %v1744, 4294901760
        %1831 = vmatmul.f32.gmra.mxu0 %v1830
        %v1832 = vpop.f32.mrf.mxu0
        %v1833 = vadd.f32 %v1787, %v1832
        %v1834 = vand.u32 %v1747, 4294901760
        %1835 = vmatmul.f32.gmra.mxu0 %v1834
        %v1836 = vpop.f32.mrf.mxu0
        %v1837 = vadd.f32 %v1795, %v1836
        %v1838 = vand.u32 %v1750, 4294901760
        %1839 = vmatmul.f32.gmra.mxu0 %v1838
        %v1840 = vpop.f32.mrf.mxu0
        %v1841 = vadd.f32 %v1803, %v1840
        %1842 = vdwg.mxu0
        %1843 = vmatpush.xpose.msra.mxu0 0.0
        %1844 = vmatpush.xpose.msra.mxu0 0.0
        %1845 = vmatpush.xpose.msra.mxu0 0.0
        %1846 = vmatpush.xpose.msra.mxu0 0.0
        %1847 = vmatpush.xpose.msra.mxu0 0.0
        %1848 = vmatpush.xpose.msra.mxu0 0.0
        %1849 = vmatpush.xpose.msra.mxu0 0.0
        %1850 = vmatpush.xpose.msra.mxu0 0.0
        %1851 = vmatpush.xpose.msra.mxu0 0.0
        %1852 = vmatpush.xpose.msra.mxu0 0.0
        %1853 = vmatpush.xpose.msra.mxu0 0.0
        %1854 = vmatpush.xpose.msra.mxu0 0.0
        %1855 = vmatpush.xpose.msra.mxu0 0.0
        %1856 = vmatpush.xpose.msra.mxu0 0.0
        %1857 = vmatpush.xpose.msra.mxu0 0.0
        %v1858 = vand.u32 %v1753, 4294901760
        %v1859 = vsub.f32 %v1753, %v1858
        %1860 = vmatpush.xpose.msra.mxu0 %v1859
        %v1861 = vand.u32 %v1741, 4294901760
        %v1862 = vsub.f32 %v1741, %v1861
        %1863 = vmatmul.f32.gmra.mxu0 %v1862
        %v1864 = vpop.f32.mrf.mxu0
        %v1865 = vadd.f32 %v1829, %v1864
        %v1866 = vand.u32 %v1744, 4294901760
        %v1867 = vsub.f32 %v1744, %v1866
        %1868 = vmatmul.f32.gmra.mxu0 %v1867
        %v1869 = vpop.f32.mrf.mxu0
        %v1870 = vadd.f32 %v1833, %v1869
        %v1871 = vand.u32 %v1747, 4294901760
        %v1872 = vsub.f32 %v1747, %v1871
        %1873 = vmatmul.f32.gmra.mxu0 %v1872
        %v1874 = vpop.f32.mrf.mxu0
        %v1875 = vadd.f32 %v1837, %v1874
        %v1876 = vand.u32 %v1750, 4294901760
        %v1877 = vsub.f32 %v1750, %v1876
        %1878 = vmatmul.f32.gmra.mxu0 %v1877
        %v1879 = vpop.f32.mrf.mxu0
        %v1880 = vadd.f32 %v1841, %v1879
        %1881 = vdwg.mxu0
        %1882 = vmatpush.xpose.msra.mxu0 0.0
        %1883 = vmatpush.xpose.msra.mxu0 0.0
        %1884 = vmatpush.xpose.msra.mxu0 0.0
        %1885 = vmatpush.xpose.msra.mxu0 0.0
        %1886 = vmatpush.xpose.msra.mxu0 0.0
        %1887 = vmatpush.xpose.msra.mxu0 0.0
        %1888 = vmatpush.xpose.msra.mxu0 0.0
        %1889 = vmatpush.xpose.msra.mxu0 0.0
        %1890 = vmatpush.xpose.msra.mxu0 0.0
        %1891 = vmatpush.xpose.msra.mxu0 0.0
        %1892 = vmatpush.xpose.msra.mxu0 0.0
        %1893 = vmatpush.xpose.msra.mxu0 0.0
        %1894 = vmatpush.xpose.msra.mxu0 0.0
        %1895 = vmatpush.xpose.msra.mxu0 0.0
        %1896 = vmatpush.xpose.msra.mxu0 0.0
        %v1897 = vand.u32 %v1753, 4294901760
        %1898 = vmatpush.xpose.msra.mxu0 %v1897
        %v1899 = vand.u32 %v1741, 4294901760
        %v1900 = vsub.f32 %v1741, %v1899
        %v1901 = vand.u32 %v1900, 4294901760
        %1902 = vmatmul.f32.gmra.mxu0 %v1901
        %v1903 = vpop.f32.mrf.mxu0
        %v1904 = vadd.f32 %v1865, %v1903
        %v1905 = vand.u32 %v1744, 4294901760
        %v1906 = vsub.f32 %v1744, %v1905
        %v1907 = vand.u32 %v1906, 4294901760
        %1908 = vmatmul.f32.gmra.mxu0 %v1907
        %v1909 = vpop.f32.mrf.mxu0
        %v1910 = vadd.f32 %v1870, %v1909
        %v1911 = vand.u32 %v1747, 4294901760
        %v1912 = vsub.f32 %v1747, %v1911
        %v1913 = vand.u32 %v1912, 4294901760
        %1914 = vmatmul.f32.gmra.mxu0 %v1913
        %v1915 = vpop.f32.mrf.mxu0
        %v1916 = vadd.f32 %v1875, %v1915
        %v1917 = vand.u32 %v1750, 4294901760
        %v1918 = vsub.f32 %v1750, %v1917
        %v1919 = vand.u32 %v1918, 4294901760
        %1920 = vmatmul.f32.gmra.mxu0 %v1919
        %v1921 = vpop.f32.mrf.mxu0
        %v1922 = vadd.f32 %v1880, %v1921
        %1923 = vdwg.mxu0
        %1924 = vmatpush.xpose.msra.mxu0 0.0
        %1925 = vmatpush.xpose.msra.mxu0 0.0
        %1926 = vmatpush.xpose.msra.mxu0 0.0
        %1927 = vmatpush.xpose.msra.mxu0 0.0
        %1928 = vmatpush.xpose.msra.mxu0 0.0
        %1929 = vmatpush.xpose.msra.mxu0 0.0
        %1930 = vmatpush.xpose.msra.mxu0 0.0
        %1931 = vmatpush.xpose.msra.mxu0 0.0
        %1932 = vmatpush.xpose.msra.mxu0 0.0
        %1933 = vmatpush.xpose.msra.mxu0 0.0
        %1934 = vmatpush.xpose.msra.mxu0 0.0
        %1935 = vmatpush.xpose.msra.mxu0 0.0
        %1936 = vmatpush.xpose.msra.mxu0 0.0
        %1937 = vmatpush.xpose.msra.mxu0 0.0
        %1938 = vmatpush.xpose.msra.mxu0 0.0
        %v1939 = vand.u32 %v1753, 4294901760
        %v1940 = vsub.f32 %v1753, %v1939
        %v1941 = vand.u32 %v1940, 4294901760
        %1942 = vmatpush.xpose.msra.mxu0 %v1941
        %v1943 = vand.u32 %v1741, 4294901760
        %1944 = vmatmul.f32.gmra.mxu0 %v1943
        %v1945 = vpop.f32.mrf.mxu0
        %v1946 = vadd.f32 %v1904, %v1945
        %v1947 = vand.u32 %v1744, 4294901760
        %1948 = vmatmul.f32.gmra.mxu0 %v1947
        %v1949 = vpop.f32.mrf.mxu0
        %v1950 = vadd.f32 %v1910, %v1949
        %v1951 = vand.u32 %v1747, 4294901760
        %1952 = vmatmul.f32.gmra.mxu0 %v1951
        %v1953 = vpop.f32.mrf.mxu0
        %v1954 = vadd.f32 %v1916, %v1953
        %v1955 = vand.u32 %v1750, 4294901760
        %1956 = vmatmul.f32.gmra.mxu0 %v1955
        %v1957 = vpop.f32.mrf.mxu0
        %v1958 = vadd.f32 %v1922, %v1957
        %1959 = vdwg.mxu0
        %1960 = vmatpush.xpose.msra.mxu0 0.0
        %1961 = vmatpush.xpose.msra.mxu0 0.0
        %1962 = vmatpush.xpose.msra.mxu0 0.0
        %1963 = vmatpush.xpose.msra.mxu0 0.0
        %1964 = vmatpush.xpose.msra.mxu0 0.0
        %1965 = vmatpush.xpose.msra.mxu0 0.0
        %1966 = vmatpush.xpose.msra.mxu0 0.0
        %1967 = vmatpush.xpose.msra.mxu0 0.0
        %1968 = vmatpush.xpose.msra.mxu0 0.0
        %1969 = vmatpush.xpose.msra.mxu0 0.0
        %1970 = vmatpush.xpose.msra.mxu0 0.0
        %1971 = vmatpush.xpose.msra.mxu0 0.0
        %1972 = vmatpush.xpose.msra.mxu0 0.0
        %1973 = vmatpush.xpose.msra.mxu0 0.0
        %1974 = vmatpush.xpose.msra.mxu0 0.0
        %v1975 = vand.u32 %v1753, 4294901760
        %1976 = vmatpush.xpose.msra.mxu0 %v1975
        %v1977 = vand.u32 %v1741, 4294901760
        %1978 = vmatmul.f32.gmra.mxu0 %v1977
        %v1979 = vpop.f32.mrf.mxu0
        %v1980 = vadd.f32 %v1946, %v1979
        %v1981 = vand.u32 %v1744, 4294901760
        %1982 = vmatmul.f32.gmra.mxu0 %v1981
        %v1983 = vpop.f32.mrf.mxu0
        %v1984 = vadd.f32 %v1950, %v1983
        %v1985 = vand.u32 %v1747, 4294901760
        %1986 = vmatmul.f32.gmra.mxu0 %v1985
        %v1987 = vpop.f32.mrf.mxu0
        %v1988 = vadd.f32 %v1954, %v1987
        %v1989 = vand.u32 %v1750, 4294901760
        %1990 = vmatmul.f32.gmra.mxu0 %v1989
        %v1991 = vpop.f32.mrf.mxu0
        %v1992 = vadd.f32 %v1958, %v1991
        %1993 = vdwg.mxu0
        %vm1994 = vcmask 64512
        %v1995 = vsel %vm1994, %v1726, -inf
        %1996 = vmax.xlane.f32.xlu0 %v1995
        %v1997 = vpop.xlane.xlu0 %1996
        %v1998 = vsel %vm1994, %v1730, -inf
        %1999 = vmax.xlane.f32.xlu0 %v1998
        %v2000 = vpop.xlane.xlu0 %1999
        %v2001 = vsel %vm1994, %v1734, -inf
        %2002 = vmax.xlane.f32.xlu0 %v2001
        %v2003 = vpop.xlane.xlu0 %2002
        %v2004 = vsel %vm1994, %v1738, -inf
        %2005 = vmax.xlane.f32.xlu0 %v2004
        %v2006 = vpop.xlane.xlu0 %2005
        %v2007 = vsel %vm1994, %v1980, -inf
        %2008 = vmax.xlane.f32.xlu0 %v2007
        %v2009 = vpop.xlane.xlu0 %2008
        %v2010 = vsel %vm1994, %v1984, -inf
        %2011 = vmax.xlane.f32.xlu0 %v2010
        %v2012 = vpop.xlane.xlu0 %2011
        %v2013 = vsel %vm1994, %v1988, -inf
        %2014 = vmax.xlane.f32.xlu0 %v2013
        %v2015 = vpop.xlane.xlu0 %2014
        %v2016 = vsel %vm1994, %v1992, -inf
        %2017 = vmax.xlane.f32.xlu0 %v2016
        %v2018 = vpop.xlane.xlu0 %2017
        %v2019 = vsub.f32 %v1726, %v1997
        %v2020 = vsub.f32 %v1730, %v2000
        %v2021 = vsub.f32 %v1734, %v2003
        %v2022 = vsub.f32 %v1738, %v2006
        %v2023 = vsub.f32 %v1980, %v2009
        %v2024 = vsub.f32 %v1984, %v2012
        %v2025 = vsub.f32 %v1988, %v2015
        %v2026 = vsub.f32 %v1992, %v2018
        %v2027 = vmul.f32 %v2019, 1.442695
        %v2028 = vpow.pop %v2027
        %v2029 = vmul.f32 %v2020, 1.442695
        %v2030 = vpow.pop %v2029
        %v2031 = vmul.f32 %v2021, 1.442695
        %v2032 = vpow.pop %v2031
        %v2033 = vmul.f32 %v2022, 1.442695
        %v2034 = vpow.pop %v2033
        %v2035 = vmul.f32 %v2023, 1.442695
        %v2036 = vpow.pop %v2035
        %v2037 = vmul.f32 %v2024, 1.442695
        %v2038 = vpow.pop %v2037
        %v2039 = vmul.f32 %v2025, 1.442695
        %v2040 = vpow.pop %v2039
        %v2041 = vmul.f32 %v2026, 1.442695
        %v2042 = vpow.pop %v2041
        %v2043 = vsel %vm1994, %v2028, 0.0
        %2044 = vadd.xlane.f32.xlu0 %v2043
        %v2045 = vpop.xlane.xlu0 %2044
        %v2046 = vsel %vm1994, %v2030, 0.0
        %2047 = vadd.xlane.f32.xlu0 %v2046
        %v2048 = vpop.xlane.xlu0 %2047
        %v2049 = vsel %vm1994, %v2032, 0.0
        %2050 = vadd.xlane.f32.xlu0 %v2049
        %v2051 = vpop.xlane.xlu0 %2050
        %v2052 = vsel %vm1994, %v2034, 0.0
        %2053 = vadd.xlane.f32.xlu0 %v2052
        %v2054 = vpop.xlane.xlu0 %2053
        %v2055 = vsel %vm1994, %v2036, 0.0
        %2056 = vadd.xlane.f32.xlu0 %v2055
        %v2057 = vpop.xlane.xlu0 %2056
        %v2058 = vsel %vm1994, %v2038, 0.0
        %2059 = vadd.xlane.f32.xlu0 %v2058
        %v2060 = vpop.xlane.xlu0 %2059
        %v2061 = vsel %vm1994, %v2040, 0.0
        %2062 = vadd.xlane.f32.xlu0 %v2061
        %v2063 = vpop.xlane.xlu0 %2062
        %v2064 = vsel %vm1994, %v2042, 0.0
        %2065 = vadd.xlane.f32.xlu0 %v2064
        %v2066 = vpop.xlane.xlu0 %2065
        %v2067 = vrcp.pop %v2045
        %v2068 = vrcp.pop %v2048
        %v2069 = vrcp.pop %v2051
        %v2070 = vrcp.pop %v2054
        %v2071 = vrcp.pop %v2057
        %v2072 = vrcp.pop %v2060
        %v2073 = vrcp.pop %v2063
        %v2074 = vrcp.pop %v2066
        %v2075 = vmul.f32 %v2028, %v2067
        %v2076 = vmul.f32 %v2030, %v2068
        %v2077 = vmul.f32 %v2032, %v2069
        %v2078 = vmul.f32 %v2034, %v2070
        %v2079 = vmul.f32 %v2036, %v2071
        %v2080 = vmul.f32 %v2038, %v2072
        %v2081 = vmul.f32 %v2040, %v2073
        %v2082 = vmul.f32 %v2042, %v2074
        %v2084 = vsel %vm1994, %v2075, 0
        %v2087 = vsel %vm1994, %v2076, 0
        %v2090 = vsel %vm1994, %v2077, 0
        %v2093 = vsel %vm1994, %v2078, 0
        %2095 = vmatpush.msra.mxu0 0.0
        %2096 = vmatpush.msra.mxu0 0.0
        %2097 = vmatpush.msra.mxu0 0.0
        %2098 = vmatpush.msra.mxu0 0.0
        %2099 = vmatpush.msra.mxu0 0.0
        %2100 = vmatpush.msra.mxu0 0.0
        %2101 = vmatpush.msra.mxu0 0.0
        %2102 = vmatpush.msra.mxu0 0.0
        %2103 = vmatpush.msra.mxu0 0.0
        %2104 = vmatpush.msra.mxu0 0.0
        %2105 = vmatpush.msra.mxu0 0.0
        %2106 = vmatpush.msra.mxu0 0.0
        %2107 = vmatpush.msra.mxu0 0.0
        %2108 = vmatpush.msra.mxu0 0.0
        %2109 = vmatpush.msra.mxu0 0.0
        %v2110 = vand.u32 %v1468, 4294901760
        %2111 = vmatpush.msra.mxu0 %v2110
        %v2112 = vand.u32 %v2084, 4294901760
        %v2113 = vsub.f32 %v2084, %v2112
        %v2114 = vand.u32 %v2113, 4294901760
        %v2115 = vsub.f32 %v2113, %v2114
        %v2116 = vand.u32 %v2115, 4294901760
        %2117 = vmatmul.f32.gmra.mxu0 %v2116
        %v2118 = vpop.f32.mrf.mxu0
        %v2119 = vadd.f32 0.0, %v2118
        %v2120 = vand.u32 %v2087, 4294901760
        %v2121 = vsub.f32 %v2087, %v2120
        %v2122 = vand.u32 %v2121, 4294901760
        %v2123 = vsub.f32 %v2121, %v2122
        %v2124 = vand.u32 %v2123, 4294901760
        %2125 = vmatmul.f32.gmra.mxu0 %v2124
        %v2126 = vpop.f32.mrf.mxu0
        %v2127 = vadd.f32 0.0, %v2126
        %v2128 = vand.u32 %v2090, 4294901760
        %v2129 = vsub.f32 %v2090, %v2128
        %v2130 = vand.u32 %v2129, 4294901760
        %v2131 = vsub.f32 %v2129, %v2130
        %v2132 = vand.u32 %v2131, 4294901760
        %2133 = vmatmul.f32.gmra.mxu0 %v2132
        %v2134 = vpop.f32.mrf.mxu0
        %v2135 = vadd.f32 0.0, %v2134
        %v2136 = vand.u32 %v2093, 4294901760
        %v2137 = vsub.f32 %v2093, %v2136
        %v2138 = vand.u32 %v2137, 4294901760
        %v2139 = vsub.f32 %v2137, %v2138
        %v2140 = vand.u32 %v2139, 4294901760
        %2141 = vmatmul.f32.gmra.mxu0 %v2140
        %v2142 = vpop.f32.mrf.mxu0
        %v2143 = vadd.f32 0.0, %v2142
        %2144 = vdwg.mxu0
        %2145 = vmatpush.msra.mxu0 0.0
        %2146 = vmatpush.msra.mxu0 0.0
        %2147 = vmatpush.msra.mxu0 0.0
        %2148 = vmatpush.msra.mxu0 0.0
        %2149 = vmatpush.msra.mxu0 0.0
        %2150 = vmatpush.msra.mxu0 0.0
        %2151 = vmatpush.msra.mxu0 0.0
        %2152 = vmatpush.msra.mxu0 0.0
        %2153 = vmatpush.msra.mxu0 0.0
        %2154 = vmatpush.msra.mxu0 0.0
        %2155 = vmatpush.msra.mxu0 0.0
        %2156 = vmatpush.msra.mxu0 0.0
        %2157 = vmatpush.msra.mxu0 0.0
        %2158 = vmatpush.msra.mxu0 0.0
        %2159 = vmatpush.msra.mxu0 0.0
        %v2160 = vand.u32 %v1468, 4294901760
        %v2161 = vsub.f32 %v1468, %v2160
        %v2162 = vand.u32 %v2161, 4294901760
        %v2163 = vsub.f32 %v2161, %v2162
        %v2164 = vand.u32 %v2163, 4294901760
        %2165 = vmatpush.msra.mxu0 %v2164
        %v2166 = vand.u32 %v2084, 4294901760
        %2167 = vmatmul.f32.gmra.mxu0 %v2166
        %v2168 = vpop.f32.mrf.mxu0
        %v2169 = vadd.f32 %v2119, %v2168
        %v2170 = vand.u32 %v2087, 4294901760
        %2171 = vmatmul.f32.gmra.mxu0 %v2170
        %v2172 = vpop.f32.mrf.mxu0
        %v2173 = vadd.f32 %v2127, %v2172
        %v2174 = vand.u32 %v2090, 4294901760
        %2175 = vmatmul.f32.gmra.mxu0 %v2174
        %v2176 = vpop.f32.mrf.mxu0
        %v2177 = vadd.f32 %v2135, %v2176
        %v2178 = vand.u32 %v2093, 4294901760
        %2179 = vmatmul.f32.gmra.mxu0 %v2178
        %v2180 = vpop.f32.mrf.mxu0
        %v2181 = vadd.f32 %v2143, %v2180
        %2182 = vdwg.mxu0
        %2183 = vmatpush.msra.mxu0 0.0
        %2184 = vmatpush.msra.mxu0 0.0
        %2185 = vmatpush.msra.mxu0 0.0
        %2186 = vmatpush.msra.mxu0 0.0
        %2187 = vmatpush.msra.mxu0 0.0
        %2188 = vmatpush.msra.mxu0 0.0
        %2189 = vmatpush.msra.mxu0 0.0
        %2190 = vmatpush.msra.mxu0 0.0
        %2191 = vmatpush.msra.mxu0 0.0
        %2192 = vmatpush.msra.mxu0 0.0
        %2193 = vmatpush.msra.mxu0 0.0
        %2194 = vmatpush.msra.mxu0 0.0
        %2195 = vmatpush.msra.mxu0 0.0
        %2196 = vmatpush.msra.mxu0 0.0
        %2197 = vmatpush.msra.mxu0 0.0
        %v2198 = vand.u32 %v1468, 4294901760
        %v2199 = vsub.f32 %v1468, %v2198
        %2200 = vmatpush.msra.mxu0 %v2199
        %v2201 = vand.u32 %v2084, 4294901760
        %v2202 = vsub.f32 %v2084, %v2201
        %2203 = vmatmul.f32.gmra.mxu0 %v2202
        %v2204 = vpop.f32.mrf.mxu0
        %v2205 = vadd.f32 %v2169, %v2204
        %v2206 = vand.u32 %v2087, 4294901760
        %v2207 = vsub.f32 %v2087, %v2206
        %2208 = vmatmul.f32.gmra.mxu0 %v2207
        %v2209 = vpop.f32.mrf.mxu0
        %v2210 = vadd.f32 %v2173, %v2209
        %v2211 = vand.u32 %v2090, 4294901760
        %v2212 = vsub.f32 %v2090, %v2211
        %2213 = vmatmul.f32.gmra.mxu0 %v2212
        %v2214 = vpop.f32.mrf.mxu0
        %v2215 = vadd.f32 %v2177, %v2214
        %v2216 = vand.u32 %v2093, 4294901760
        %v2217 = vsub.f32 %v2093, %v2216
        %2218 = vmatmul.f32.gmra.mxu0 %v2217
        %v2219 = vpop.f32.mrf.mxu0
        %v2220 = vadd.f32 %v2181, %v2219
        %2221 = vdwg.mxu0
        %2222 = vmatpush.msra.mxu0 0.0
        %2223 = vmatpush.msra.mxu0 0.0
        %2224 = vmatpush.msra.mxu0 0.0
        %2225 = vmatpush.msra.mxu0 0.0
        %2226 = vmatpush.msra.mxu0 0.0
        %2227 = vmatpush.msra.mxu0 0.0
        %2228 = vmatpush.msra.mxu0 0.0
        %2229 = vmatpush.msra.mxu0 0.0
        %2230 = vmatpush.msra.mxu0 0.0
        %2231 = vmatpush.msra.mxu0 0.0
        %2232 = vmatpush.msra.mxu0 0.0
        %2233 = vmatpush.msra.mxu0 0.0
        %2234 = vmatpush.msra.mxu0 0.0
        %2235 = vmatpush.msra.mxu0 0.0
        %2236 = vmatpush.msra.mxu0 0.0
        %v2237 = vand.u32 %v1468, 4294901760
        %2238 = vmatpush.msra.mxu0 %v2237
        %v2239 = vand.u32 %v2084, 4294901760
        %v2240 = vsub.f32 %v2084, %v2239
        %v2241 = vand.u32 %v2240, 4294901760
        %2242 = vmatmul.f32.gmra.mxu0 %v2241
        %v2243 = vpop.f32.mrf.mxu0
        %v2244 = vadd.f32 %v2205, %v2243
        %v2245 = vand.u32 %v2087, 4294901760
        %v2246 = vsub.f32 %v2087, %v2245
        %v2247 = vand.u32 %v2246, 4294901760
        %2248 = vmatmul.f32.gmra.mxu0 %v2247
        %v2249 = vpop.f32.mrf.mxu0
        %v2250 = vadd.f32 %v2210, %v2249
        %v2251 = vand.u32 %v2090, 4294901760
        %v2252 = vsub.f32 %v2090, %v2251
        %v2253 = vand.u32 %v2252, 4294901760
        %2254 = vmatmul.f32.gmra.mxu0 %v2253
        %v2255 = vpop.f32.mrf.mxu0
        %v2256 = vadd.f32 %v2215, %v2255
        %v2257 = vand.u32 %v2093, 4294901760
        %v2258 = vsub.f32 %v2093, %v2257
        %v2259 = vand.u32 %v2258, 4294901760
        %2260 = vmatmul.f32.gmra.mxu0 %v2259
        %v2261 = vpop.f32.mrf.mxu0
        %v2262 = vadd.f32 %v2220, %v2261
        %2263 = vdwg.mxu0
        %2264 = vmatpush.msra.mxu0 0.0
        %2265 = vmatpush.msra.mxu0 0.0
        %2266 = vmatpush.msra.mxu0 0.0
        %2267 = vmatpush.msra.mxu0 0.0
        %2268 = vmatpush.msra.mxu0 0.0
        %2269 = vmatpush.msra.mxu0 0.0
        %2270 = vmatpush.msra.mxu0 0.0
        %2271 = vmatpush.msra.mxu0 0.0
        %2272 = vmatpush.msra.mxu0 0.0
        %2273 = vmatpush.msra.mxu0 0.0
        %2274 = vmatpush.msra.mxu0 0.0
        %2275 = vmatpush.msra.mxu0 0.0
        %2276 = vmatpush.msra.mxu0 0.0
        %2277 = vmatpush.msra.mxu0 0.0
        %2278 = vmatpush.msra.mxu0 0.0
        %v2279 = vand.u32 %v1468, 4294901760
        %v2280 = vsub.f32 %v1468, %v2279
        %v2281 = vand.u32 %v2280, 4294901760
        %2282 = vmatpush.msra.mxu0 %v2281
        %v2283 = vand.u32 %v2084, 4294901760
        %2284 = vmatmul.f32.gmra.mxu0 %v2283
        %v2285 = vpop.f32.mrf.mxu0
        %v2286 = vadd.f32 %v2244, %v2285
        %v2287 = vand.u32 %v2087, 4294901760
        %2288 = vmatmul.f32.gmra.mxu0 %v2287
        %v2289 = vpop.f32.mrf.mxu0
        %v2290 = vadd.f32 %v2250, %v2289
        %v2291 = vand.u32 %v2090, 4294901760
        %2292 = vmatmul.f32.gmra.mxu0 %v2291
        %v2293 = vpop.f32.mrf.mxu0
        %v2294 = vadd.f32 %v2256, %v2293
        %v2295 = vand.u32 %v2093, 4294901760
        %2296 = vmatmul.f32.gmra.mxu0 %v2295
        %v2297 = vpop.f32.mrf.mxu0
        %v2298 = vadd.f32 %v2262, %v2297
        %2299 = vdwg.mxu0
        %2300 = vmatpush.msra.mxu0 0.0
        %2301 = vmatpush.msra.mxu0 0.0
        %2302 = vmatpush.msra.mxu0 0.0
        %2303 = vmatpush.msra.mxu0 0.0
        %2304 = vmatpush.msra.mxu0 0.0
        %2305 = vmatpush.msra.mxu0 0.0
        %2306 = vmatpush.msra.mxu0 0.0
        %2307 = vmatpush.msra.mxu0 0.0
        %2308 = vmatpush.msra.mxu0 0.0
        %2309 = vmatpush.msra.mxu0 0.0
        %2310 = vmatpush.msra.mxu0 0.0
        %2311 = vmatpush.msra.mxu0 0.0
        %2312 = vmatpush.msra.mxu0 0.0
        %2313 = vmatpush.msra.mxu0 0.0
        %2314 = vmatpush.msra.mxu0 0.0
        %v2315 = vand.u32 %v1468, 4294901760
        %2316 = vmatpush.msra.mxu0 %v2315
        %v2317 = vand.u32 %v2084, 4294901760
        %2318 = vmatmul.f32.gmra.mxu0 %v2317
        %v2319 = vpop.f32.mrf.mxu0
        %v2320 = vadd.f32 %v2286, %v2319
        %v2321 = vand.u32 %v2087, 4294901760
        %2322 = vmatmul.f32.gmra.mxu0 %v2321
        %v2323 = vpop.f32.mrf.mxu0
        %v2324 = vadd.f32 %v2290, %v2323
        %v2325 = vand.u32 %v2090, 4294901760
        %2326 = vmatmul.f32.gmra.mxu0 %v2325
        %v2327 = vpop.f32.mrf.mxu0
        %v2328 = vadd.f32 %v2294, %v2327
        %v2329 = vand.u32 %v2093, 4294901760
        %2330 = vmatmul.f32.gmra.mxu0 %v2329
        %v2331 = vpop.f32.mrf.mxu0
        %v2332 = vadd.f32 %v2298, %v2331
        %2333 = vdwg.mxu0
        %v2335 = vsel %vm1994, %v2079, 0
        %v2338 = vsel %vm1994, %v2080, 0
        %v2341 = vsel %vm1994, %v2081, 0
        %v2344 = vsel %vm1994, %v2082, 0
        %2346 = vmatpush.msra.mxu0 0.0
        %2347 = vmatpush.msra.mxu0 0.0
        %2348 = vmatpush.msra.mxu0 0.0
        %2349 = vmatpush.msra.mxu0 0.0
        %2350 = vmatpush.msra.mxu0 0.0
        %2351 = vmatpush.msra.mxu0 0.0
        %2352 = vmatpush.msra.mxu0 0.0
        %2353 = vmatpush.msra.mxu0 0.0
        %2354 = vmatpush.msra.mxu0 0.0
        %2355 = vmatpush.msra.mxu0 0.0
        %2356 = vmatpush.msra.mxu0 0.0
        %2357 = vmatpush.msra.mxu0 0.0
        %2358 = vmatpush.msra.mxu0 0.0
        %2359 = vmatpush.msra.mxu0 0.0
        %2360 = vmatpush.msra.mxu0 0.0
        %v2361 = vand.u32 %v1472, 4294901760
        %2362 = vmatpush.msra.mxu0 %v2361
        %v2363 = vand.u32 %v2335, 4294901760
        %v2364 = vsub.f32 %v2335, %v2363
        %v2365 = vand.u32 %v2364, 4294901760
        %v2366 = vsub.f32 %v2364, %v2365
        %v2367 = vand.u32 %v2366, 4294901760
        %2368 = vmatmul.f32.gmra.mxu0 %v2367
        %v2369 = vpop.f32.mrf.mxu0
        %v2370 = vadd.f32 0.0, %v2369
        %v2371 = vand.u32 %v2338, 4294901760
        %v2372 = vsub.f32 %v2338, %v2371
        %v2373 = vand.u32 %v2372, 4294901760
        %v2374 = vsub.f32 %v2372, %v2373
        %v2375 = vand.u32 %v2374, 4294901760
        %2376 = vmatmul.f32.gmra.mxu0 %v2375
        %v2377 = vpop.f32.mrf.mxu0
        %v2378 = vadd.f32 0.0, %v2377
        %v2379 = vand.u32 %v2341, 4294901760
        %v2380 = vsub.f32 %v2341, %v2379
        %v2381 = vand.u32 %v2380, 4294901760
        %v2382 = vsub.f32 %v2380, %v2381
        %v2383 = vand.u32 %v2382, 4294901760
        %2384 = vmatmul.f32.gmra.mxu0 %v2383
        %v2385 = vpop.f32.mrf.mxu0
        %v2386 = vadd.f32 0.0, %v2385
        %v2387 = vand.u32 %v2344, 4294901760
        %v2388 = vsub.f32 %v2344, %v2387
        %v2389 = vand.u32 %v2388, 4294901760
        %v2390 = vsub.f32 %v2388, %v2389
        %v2391 = vand.u32 %v2390, 4294901760
        %2392 = vmatmul.f32.gmra.mxu0 %v2391
        %v2393 = vpop.f32.mrf.mxu0
        %v2394 = vadd.f32 0.0, %v2393
        %2395 = vdwg.mxu0
        %2396 = vmatpush.msra.mxu0 0.0
        %2397 = vmatpush.msra.mxu0 0.0
        %2398 = vmatpush.msra.mxu0 0.0
        %2399 = vmatpush.msra.mxu0 0.0
        %2400 = vmatpush.msra.mxu0 0.0
        %2401 = vmatpush.msra.mxu0 0.0
        %2402 = vmatpush.msra.mxu0 0.0
        %2403 = vmatpush.msra.mxu0 0.0
        %2404 = vmatpush.msra.mxu0 0.0
        %2405 = vmatpush.msra.mxu0 0.0
        %2406 = vmatpush.msra.mxu0 0.0
        %2407 = vmatpush.msra.mxu0 0.0
        %2408 = vmatpush.msra.mxu0 0.0
        %2409 = vmatpush.msra.mxu0 0.0
        %2410 = vmatpush.msra.mxu0 0.0
        %v2411 = vand.u32 %v1472, 4294901760
        %v2412 = vsub.f32 %v1472, %v2411
        %v2413 = vand.u32 %v2412, 4294901760
        %v2414 = vsub.f32 %v2412, %v2413
        %v2415 = vand.u32 %v2414, 4294901760
        %2416 = vmatpush.msra.mxu0 %v2415
        %v2417 = vand.u32 %v2335, 4294901760
        %2418 = vmatmul.f32.gmra.mxu0 %v2417
        %v2419 = vpop.f32.mrf.mxu0
        %v2420 = vadd.f32 %v2370, %v2419
        %v2421 = vand.u32 %v2338, 4294901760
        %2422 = vmatmul.f32.gmra.mxu0 %v2421
        %v2423 = vpop.f32.mrf.mxu0
        %v2424 = vadd.f32 %v2378, %v2423
        %v2425 = vand.u32 %v2341, 4294901760
        %2426 = vmatmul.f32.gmra.mxu0 %v2425
        %v2427 = vpop.f32.mrf.mxu0
        %v2428 = vadd.f32 %v2386, %v2427
        %v2429 = vand.u32 %v2344, 4294901760
        %2430 = vmatmul.f32.gmra.mxu0 %v2429
        %v2431 = vpop.f32.mrf.mxu0
        %v2432 = vadd.f32 %v2394, %v2431
        %2433 = vdwg.mxu0
        %2434 = vmatpush.msra.mxu0 0.0
        %2435 = vmatpush.msra.mxu0 0.0
        %2436 = vmatpush.msra.mxu0 0.0
        %2437 = vmatpush.msra.mxu0 0.0
        %2438 = vmatpush.msra.mxu0 0.0
        %2439 = vmatpush.msra.mxu0 0.0
        %2440 = vmatpush.msra.mxu0 0.0
        %2441 = vmatpush.msra.mxu0 0.0
        %2442 = vmatpush.msra.mxu0 0.0
        %2443 = vmatpush.msra.mxu0 0.0
        %2444 = vmatpush.msra.mxu0 0.0
        %2445 = vmatpush.msra.mxu0 0.0
        %2446 = vmatpush.msra.mxu0 0.0
        %2447 = vmatpush.msra.mxu0 0.0
        %2448 = vmatpush.msra.mxu0 0.0
        %v2449 = vand.u32 %v1472, 4294901760
        %v2450 = vsub.f32 %v1472, %v2449
        %2451 = vmatpush.msra.mxu0 %v2450
        %v2452 = vand.u32 %v2335, 4294901760
        %v2453 = vsub.f32 %v2335, %v2452
        %2454 = vmatmul.f32.gmra.mxu0 %v2453
        %v2455 = vpop.f32.mrf.mxu0
        %v2456 = vadd.f32 %v2420, %v2455
        %v2457 = vand.u32 %v2338, 4294901760
        %v2458 = vsub.f32 %v2338, %v2457
        %2459 = vmatmul.f32.gmra.mxu0 %v2458
        %v2460 = vpop.f32.mrf.mxu0
        %v2461 = vadd.f32 %v2424, %v2460
        %v2462 = vand.u32 %v2341, 4294901760
        %v2463 = vsub.f32 %v2341, %v2462
        %2464 = vmatmul.f32.gmra.mxu0 %v2463
        %v2465 = vpop.f32.mrf.mxu0
        %v2466 = vadd.f32 %v2428, %v2465
        %v2467 = vand.u32 %v2344, 4294901760
        %v2468 = vsub.f32 %v2344, %v2467
        %2469 = vmatmul.f32.gmra.mxu0 %v2468
        %v2470 = vpop.f32.mrf.mxu0
        %v2471 = vadd.f32 %v2432, %v2470
        %2472 = vdwg.mxu0
        %2473 = vmatpush.msra.mxu0 0.0
        %2474 = vmatpush.msra.mxu0 0.0
        %2475 = vmatpush.msra.mxu0 0.0
        %2476 = vmatpush.msra.mxu0 0.0
        %2477 = vmatpush.msra.mxu0 0.0
        %2478 = vmatpush.msra.mxu0 0.0
        %2479 = vmatpush.msra.mxu0 0.0
        %2480 = vmatpush.msra.mxu0 0.0
        %2481 = vmatpush.msra.mxu0 0.0
        %2482 = vmatpush.msra.mxu0 0.0
        %2483 = vmatpush.msra.mxu0 0.0
        %2484 = vmatpush.msra.mxu0 0.0
        %2485 = vmatpush.msra.mxu0 0.0
        %2486 = vmatpush.msra.mxu0 0.0
        %2487 = vmatpush.msra.mxu0 0.0
        %v2488 = vand.u32 %v1472, 4294901760
        %2489 = vmatpush.msra.mxu0 %v2488
        %v2490 = vand.u32 %v2335, 4294901760
        %v2491 = vsub.f32 %v2335, %v2490
        %v2492 = vand.u32 %v2491, 4294901760
        %2493 = vmatmul.f32.gmra.mxu0 %v2492
        %v2494 = vpop.f32.mrf.mxu0
        %v2495 = vadd.f32 %v2456, %v2494
        %v2496 = vand.u32 %v2338, 4294901760
        %v2497 = vsub.f32 %v2338, %v2496
        %v2498 = vand.u32 %v2497, 4294901760
        %2499 = vmatmul.f32.gmra.mxu0 %v2498
        %v2500 = vpop.f32.mrf.mxu0
        %v2501 = vadd.f32 %v2461, %v2500
        %v2502 = vand.u32 %v2341, 4294901760
        %v2503 = vsub.f32 %v2341, %v2502
        %v2504 = vand.u32 %v2503, 4294901760
        %2505 = vmatmul.f32.gmra.mxu0 %v2504
        %v2506 = vpop.f32.mrf.mxu0
        %v2507 = vadd.f32 %v2466, %v2506
        %v2508 = vand.u32 %v2344, 4294901760
        %v2509 = vsub.f32 %v2344, %v2508
        %v2510 = vand.u32 %v2509, 4294901760
        %2511 = vmatmul.f32.gmra.mxu0 %v2510
        %v2512 = vpop.f32.mrf.mxu0
        %v2513 = vadd.f32 %v2471, %v2512
        %2514 = vdwg.mxu0
        %2515 = vmatpush.msra.mxu0 0.0
        %2516 = vmatpush.msra.mxu0 0.0
        %2517 = vmatpush.msra.mxu0 0.0
        %2518 = vmatpush.msra.mxu0 0.0
        %2519 = vmatpush.msra.mxu0 0.0
        %2520 = vmatpush.msra.mxu0 0.0
        %2521 = vmatpush.msra.mxu0 0.0
        %2522 = vmatpush.msra.mxu0 0.0
        %2523 = vmatpush.msra.mxu0 0.0
        %2524 = vmatpush.msra.mxu0 0.0
        %2525 = vmatpush.msra.mxu0 0.0
        %2526 = vmatpush.msra.mxu0 0.0
        %2527 = vmatpush.msra.mxu0 0.0
        %2528 = vmatpush.msra.mxu0 0.0
        %2529 = vmatpush.msra.mxu0 0.0
        %v2530 = vand.u32 %v1472, 4294901760
        %v2531 = vsub.f32 %v1472, %v2530
        %v2532 = vand.u32 %v2531, 4294901760
        %2533 = vmatpush.msra.mxu0 %v2532
        %v2534 = vand.u32 %v2335, 4294901760
        %2535 = vmatmul.f32.gmra.mxu0 %v2534
        %v2536 = vpop.f32.mrf.mxu0
        %v2537 = vadd.f32 %v2495, %v2536
        %v2538 = vand.u32 %v2338, 4294901760
        %2539 = vmatmul.f32.gmra.mxu0 %v2538
        %v2540 = vpop.f32.mrf.mxu0
        %v2541 = vadd.f32 %v2501, %v2540
        %v2542 = vand.u32 %v2341, 4294901760
        %2543 = vmatmul.f32.gmra.mxu0 %v2542
        %v2544 = vpop.f32.mrf.mxu0
        %v2545 = vadd.f32 %v2507, %v2544
        %v2546 = vand.u32 %v2344, 4294901760
        %2547 = vmatmul.f32.gmra.mxu0 %v2546
        %v2548 = vpop.f32.mrf.mxu0
        %v2549 = vadd.f32 %v2513, %v2548
        %2550 = vdwg.mxu0
        %2551 = vmatpush.msra.mxu0 0.0
        %2552 = vmatpush.msra.mxu0 0.0
        %2553 = vmatpush.msra.mxu0 0.0
        %2554 = vmatpush.msra.mxu0 0.0
        %2555 = vmatpush.msra.mxu0 0.0
        %2556 = vmatpush.msra.mxu0 0.0
        %2557 = vmatpush.msra.mxu0 0.0
        %2558 = vmatpush.msra.mxu0 0.0
        %2559 = vmatpush.msra.mxu0 0.0
        %2560 = vmatpush.msra.mxu0 0.0
        %2561 = vmatpush.msra.mxu0 0.0
        %2562 = vmatpush.msra.mxu0 0.0
        %2563 = vmatpush.msra.mxu0 0.0
        %2564 = vmatpush.msra.mxu0 0.0
        %2565 = vmatpush.msra.mxu0 0.0
        %v2566 = vand.u32 %v1472, 4294901760
        %2567 = vmatpush.msra.mxu0 %v2566
        %v2568 = vand.u32 %v2335, 4294901760
        %2569 = vmatmul.f32.gmra.mxu0 %v2568
        %v2570 = vpop.f32.mrf.mxu0
        %v2571 = vadd.f32 %v2537, %v2570
        %v2572 = vand.u32 %v2338, 4294901760
        %2573 = vmatmul.f32.gmra.mxu0 %v2572
        %v2574 = vpop.f32.mrf.mxu0
        %v2575 = vadd.f32 %v2541, %v2574
        %v2576 = vand.u32 %v2341, 4294901760
        %2577 = vmatmul.f32.gmra.mxu0 %v2576
        %v2578 = vpop.f32.mrf.mxu0
        %v2579 = vadd.f32 %v2545, %v2578
        %v2580 = vand.u32 %v2344, 4294901760
        %2581 = vmatmul.f32.gmra.mxu0 %v2580
        %v2582 = vpop.f32.mrf.mxu0
        %v2583 = vadd.f32 %v2549, %v2582
        %2584 = vdwg.mxu0
        %v2585 = vmul.f32 %v2320, %v1474
        %v2586 = vmul.f32 %v2324, %v1475
        %v2587 = vmul.f32 %v2328, %v1476
        %v2588 = vmul.f32 %v2332, %v1477
        %v2589 = vmul.f32 %v2571, %v1474
        %v2590 = vmul.f32 %v2575, %v1475
        %v2591 = vmul.f32 %v2579, %v1476
        %v2592 = vmul.f32 %v2583, %v1477
        %v2593 = vsel %vm746, %v2585, 0.0
        %v2594 = vsel %vm746, %v2586, 0.0
        %v2595 = vadd.f32 %v2593, %v2594
        %v2596 = vsel %vm746, %v2587, 0.0
        %v2597 = vadd.f32 %v2595, %v2596
        %v2598 = vsel %vm746, %v2588, 0.0
        %v2599 = vadd.f32 %v2597, %v2598
        %v2600 = vsel %vm746, %v2589, 0.0
        %v2601 = vsel %vm746, %v2590, 0.0
        %v2602 = vadd.f32 %v2600, %v2601
        %v2603 = vsel %vm746, %v2591, 0.0
        %v2604 = vadd.f32 %v2602, %v2603
        %v2605 = vsel %vm746, %v2592, 0.0
        %v2606 = vadd.f32 %v2604, %v2605
        %v2607 = vld [vmem:[%s707] sm:$0xff]
        %v2608 = vld [vmem:[%s707 + $0x8] sm:$0xff]
        %v2609 = vld [vmem:[%s707 + $0x10] sm:$0xff]
        %v2610 = vld [vmem:[%s707 + $0x18] sm:$0xff]
        %v2611 = vld [vmem:[%s710] sm:$0x1]
        %v2613 = vperm.slane %v2611, 0
        %v2616 = vsel %vm746, %v2599, 0
        %v2619 = vsel %vm746, %v2606, 0
        %2621 = vmatpush.msra.mxu0 0.0
        %2622 = vmatpush.msra.mxu0 0.0
        %2623 = vmatpush.msra.mxu0 0.0
        %2624 = vmatpush.msra.mxu0 0.0
        %2625 = vmatpush.msra.mxu0 0.0
        %2626 = vmatpush.msra.mxu0 0.0
        %2627 = vmatpush.msra.mxu0 0.0
        %2628 = vmatpush.msra.mxu0 0.0
        %2629 = vmatpush.msra.mxu0 0.0
        %2630 = vmatpush.msra.mxu0 0.0
        %2631 = vmatpush.msra.mxu0 0.0
        %2632 = vmatpush.msra.mxu0 0.0
        %v2633 = vand.u32 %v2610, 4294901760
        %2634 = vmatpush.msra.mxu0 %v2633
        %v2635 = vand.u32 %v2609, 4294901760
        %2636 = vmatpush.msra.mxu0 %v2635
        %v2637 = vand.u32 %v2608, 4294901760
        %2638 = vmatpush.msra.mxu0 %v2637
        %v2639 = vand.u32 %v2607, 4294901760
        %2640 = vmatpush.msra.mxu0 %v2639
        %v2641 = vand.u32 %v2616, 4294901760
        %v2642 = vsub.f32 %v2616, %v2641
        %v2643 = vand.u32 %v2642, 4294901760
        %v2644 = vsub.f32 %v2642, %v2643
        %v2645 = vand.u32 %v2644, 4294901760
        %2646 = vmatmul.f32.gmra.mxu0 %v2645
        %v2647 = vpop.f32.mrf.mxu0
        %v2648 = vadd.f32 %v2613, %v2647
        %v2649 = vand.u32 %v2619, 4294901760
        %v2650 = vsub.f32 %v2619, %v2649
        %v2651 = vand.u32 %v2650, 4294901760
        %v2652 = vsub.f32 %v2650, %v2651
        %v2653 = vand.u32 %v2652, 4294901760
        %2654 = vmatmul.f32.gmra.mxu0 %v2653
        %v2655 = vpop.f32.mrf.mxu0
        %v2656 = vadd.f32 %v2613, %v2655
        %2657 = vdwg.mxu0
        %2658 = vmatpush.msra.mxu0 0.0
        %2659 = vmatpush.msra.mxu0 0.0
        %2660 = vmatpush.msra.mxu0 0.0
        %2661 = vmatpush.msra.mxu0 0.0
        %2662 = vmatpush.msra.mxu0 0.0
        %2663 = vmatpush.msra.mxu0 0.0
        %2664 = vmatpush.msra.mxu0 0.0
        %2665 = vmatpush.msra.mxu0 0.0
        %2666 = vmatpush.msra.mxu0 0.0
        %2667 = vmatpush.msra.mxu0 0.0
        %2668 = vmatpush.msra.mxu0 0.0
        %2669 = vmatpush.msra.mxu0 0.0
        %v2670 = vand.u32 %v2610, 4294901760
        %v2671 = vsub.f32 %v2610, %v2670
        %v2672 = vand.u32 %v2671, 4294901760
        %v2673 = vsub.f32 %v2671, %v2672
        %v2674 = vand.u32 %v2673, 4294901760
        %2675 = vmatpush.msra.mxu0 %v2674
        %v2676 = vand.u32 %v2609, 4294901760
        %v2677 = vsub.f32 %v2609, %v2676
        %v2678 = vand.u32 %v2677, 4294901760
        %v2679 = vsub.f32 %v2677, %v2678
        %v2680 = vand.u32 %v2679, 4294901760
        %2681 = vmatpush.msra.mxu0 %v2680
        %v2682 = vand.u32 %v2608, 4294901760
        %v2683 = vsub.f32 %v2608, %v2682
        %v2684 = vand.u32 %v2683, 4294901760
        %v2685 = vsub.f32 %v2683, %v2684
        %v2686 = vand.u32 %v2685, 4294901760
        %2687 = vmatpush.msra.mxu0 %v2686
        %v2688 = vand.u32 %v2607, 4294901760
        %v2689 = vsub.f32 %v2607, %v2688
        %v2690 = vand.u32 %v2689, 4294901760
        %v2691 = vsub.f32 %v2689, %v2690
        %v2692 = vand.u32 %v2691, 4294901760
        %2693 = vmatpush.msra.mxu0 %v2692
        %v2694 = vand.u32 %v2616, 4294901760
        %2695 = vmatmul.f32.gmra.mxu0 %v2694
        %v2696 = vpop.f32.mrf.mxu0
        %v2697 = vadd.f32 %v2648, %v2696
        %v2698 = vand.u32 %v2619, 4294901760
        %2699 = vmatmul.f32.gmra.mxu0 %v2698
        %v2700 = vpop.f32.mrf.mxu0
        %v2701 = vadd.f32 %v2656, %v2700
        %2702 = vdwg.mxu0
        %2703 = vmatpush.msra.mxu0 0.0
        %2704 = vmatpush.msra.mxu0 0.0
        %2705 = vmatpush.msra.mxu0 0.0
        %2706 = vmatpush.msra.mxu0 0.0
        %2707 = vmatpush.msra.mxu0 0.0
        %2708 = vmatpush.msra.mxu0 0.0
        %2709 = vmatpush.msra.mxu0 0.0
        %2710 = vmatpush.msra.mxu0 0.0
        %2711 = vmatpush.msra.mxu0 0.0
        %2712 = vmatpush.msra.mxu0 0.0
        %2713 = vmatpush.msra.mxu0 0.0
        %2714 = vmatpush.msra.mxu0 0.0
        %v2715 = vand.u32 %v2610, 4294901760
        %v2716 = vsub.f32 %v2610, %v2715
        %2717 = vmatpush.msra.mxu0 %v2716
        %v2718 = vand.u32 %v2609, 4294901760
        %v2719 = vsub.f32 %v2609, %v2718
        %2720 = vmatpush.msra.mxu0 %v2719
        %v2721 = vand.u32 %v2608, 4294901760
        %v2722 = vsub.f32 %v2608, %v2721
        %2723 = vmatpush.msra.mxu0 %v2722
        %v2724 = vand.u32 %v2607, 4294901760
        %v2725 = vsub.f32 %v2607, %v2724
        %2726 = vmatpush.msra.mxu0 %v2725
        %v2727 = vand.u32 %v2616, 4294901760
        %v2728 = vsub.f32 %v2616, %v2727
        %2729 = vmatmul.f32.gmra.mxu0 %v2728
        %v2730 = vpop.f32.mrf.mxu0
        %v2731 = vadd.f32 %v2697, %v2730
        %v2732 = vand.u32 %v2619, 4294901760
        %v2733 = vsub.f32 %v2619, %v2732
        %2734 = vmatmul.f32.gmra.mxu0 %v2733
        %v2735 = vpop.f32.mrf.mxu0
        %v2736 = vadd.f32 %v2701, %v2735
        %2737 = vdwg.mxu0
        %2738 = vmatpush.msra.mxu0 0.0
        %2739 = vmatpush.msra.mxu0 0.0
        %2740 = vmatpush.msra.mxu0 0.0
        %2741 = vmatpush.msra.mxu0 0.0
        %2742 = vmatpush.msra.mxu0 0.0
        %2743 = vmatpush.msra.mxu0 0.0
        %2744 = vmatpush.msra.mxu0 0.0
        %2745 = vmatpush.msra.mxu0 0.0
        %2746 = vmatpush.msra.mxu0 0.0
        %2747 = vmatpush.msra.mxu0 0.0
        %2748 = vmatpush.msra.mxu0 0.0
        %2749 = vmatpush.msra.mxu0 0.0
        %v2750 = vand.u32 %v2610, 4294901760
        %2751 = vmatpush.msra.mxu0 %v2750
        %v2752 = vand.u32 %v2609, 4294901760
        %2753 = vmatpush.msra.mxu0 %v2752
        %v2754 = vand.u32 %v2608, 4294901760
        %2755 = vmatpush.msra.mxu0 %v2754
        %v2756 = vand.u32 %v2607, 4294901760
        %2757 = vmatpush.msra.mxu0 %v2756
        %v2758 = vand.u32 %v2616, 4294901760
        %v2759 = vsub.f32 %v2616, %v2758
        %v2760 = vand.u32 %v2759, 4294901760
        %2761 = vmatmul.f32.gmra.mxu0 %v2760
        %v2762 = vpop.f32.mrf.mxu0
        %v2763 = vadd.f32 %v2731, %v2762
        %v2764 = vand.u32 %v2619, 4294901760
        %v2765 = vsub.f32 %v2619, %v2764
        %v2766 = vand.u32 %v2765, 4294901760
        %2767 = vmatmul.f32.gmra.mxu0 %v2766
        %v2768 = vpop.f32.mrf.mxu0
        %v2769 = vadd.f32 %v2736, %v2768
        %2770 = vdwg.mxu0
        %2771 = vmatpush.msra.mxu0 0.0
        %2772 = vmatpush.msra.mxu0 0.0
        %2773 = vmatpush.msra.mxu0 0.0
        %2774 = vmatpush.msra.mxu0 0.0
        %2775 = vmatpush.msra.mxu0 0.0
        %2776 = vmatpush.msra.mxu0 0.0
        %2777 = vmatpush.msra.mxu0 0.0
        %2778 = vmatpush.msra.mxu0 0.0
        %2779 = vmatpush.msra.mxu0 0.0
        %2780 = vmatpush.msra.mxu0 0.0
        %2781 = vmatpush.msra.mxu0 0.0
        %2782 = vmatpush.msra.mxu0 0.0
        %v2783 = vand.u32 %v2610, 4294901760
        %v2784 = vsub.f32 %v2610, %v2783
        %v2785 = vand.u32 %v2784, 4294901760
        %2786 = vmatpush.msra.mxu0 %v2785
        %v2787 = vand.u32 %v2609, 4294901760
        %v2788 = vsub.f32 %v2609, %v2787
        %v2789 = vand.u32 %v2788, 4294901760
        %2790 = vmatpush.msra.mxu0 %v2789
        %v2791 = vand.u32 %v2608, 4294901760
        %v2792 = vsub.f32 %v2608, %v2791
        %v2793 = vand.u32 %v2792, 4294901760
        %2794 = vmatpush.msra.mxu0 %v2793
        %v2795 = vand.u32 %v2607, 4294901760
        %v2796 = vsub.f32 %v2607, %v2795
        %v2797 = vand.u32 %v2796, 4294901760
        %2798 = vmatpush.msra.mxu0 %v2797
        %v2799 = vand.u32 %v2616, 4294901760
        %2800 = vmatmul.f32.gmra.mxu0 %v2799
        %v2801 = vpop.f32.mrf.mxu0
        %v2802 = vadd.f32 %v2763, %v2801
        %v2803 = vand.u32 %v2619, 4294901760
        %2804 = vmatmul.f32.gmra.mxu0 %v2803
        %v2805 = vpop.f32.mrf.mxu0
        %v2806 = vadd.f32 %v2769, %v2805
        %2807 = vdwg.mxu0
        %2808 = vmatpush.msra.mxu0 0.0
        %2809 = vmatpush.msra.mxu0 0.0
        %2810 = vmatpush.msra.mxu0 0.0
        %2811 = vmatpush.msra.mxu0 0.0
        %2812 = vmatpush.msra.mxu0 0.0
        %2813 = vmatpush.msra.mxu0 0.0
        %2814 = vmatpush.msra.mxu0 0.0
        %2815 = vmatpush.msra.mxu0 0.0
        %2816 = vmatpush.msra.mxu0 0.0
        %2817 = vmatpush.msra.mxu0 0.0
        %2818 = vmatpush.msra.mxu0 0.0
        %2819 = vmatpush.msra.mxu0 0.0
        %v2820 = vand.u32 %v2610, 4294901760
        %2821 = vmatpush.msra.mxu0 %v2820
        %v2822 = vand.u32 %v2609, 4294901760
        %2823 = vmatpush.msra.mxu0 %v2822
        %v2824 = vand.u32 %v2608, 4294901760
        %2825 = vmatpush.msra.mxu0 %v2824
        %v2826 = vand.u32 %v2607, 4294901760
        %2827 = vmatpush.msra.mxu0 %v2826
        %v2828 = vand.u32 %v2616, 4294901760
        %2829 = vmatmul.f32.gmra.mxu0 %v2828
        %v2830 = vpop.f32.mrf.mxu0
        %v2831 = vadd.f32 %v2802, %v2830
        %v2832 = vand.u32 %v2619, 4294901760
        %2833 = vmatmul.f32.gmra.mxu0 %v2832
        %v2834 = vpop.f32.mrf.mxu0
        %v2835 = vadd.f32 %v2806, %v2834
        %2836 = vdwg.mxu0
        %v2837 = vadd.f32 %v742, %v2831
        %v2838 = vadd.f32 %v743, %v2835
        %v2839 = vld [vmem:[%s713] sm:$0x1]
        %v2840 = vld [vmem:[%s716] sm:$0x1]
        %v2841 = vsel %vm746, %v2837, 0.0
        %2842 = vadd.xlane.f32.xlu0 %v2841
        %v2843 = vpop.xlane.xlu0 %2842
        %v2844 = vsel %vm746, %v2838, 0.0
        %2845 = vadd.xlane.f32.xlu0 %v2844
        %v2846 = vpop.xlane.xlu0 %2845
        %v2847 = vmul.f32 %v2843, %v759
        %v2848 = vmul.f32 %v2846, %v759
        %v2849 = vsub.f32 %v2837, %v2847
        %v2850 = vsub.f32 %v2838, %v2848
        %v2851 = vmul.f32 %v2849, %v2849
        %v2852 = vmul.f32 %v2850, %v2850
        %v2853 = vsel %vm746, %v2851, 0.0
        %2854 = vadd.xlane.f32.xlu0 %v2853
        %v2855 = vpop.xlane.xlu0 %2854
        %v2856 = vsel %vm746, %v2852, 0.0
        %2857 = vadd.xlane.f32.xlu0 %v2856
        %v2858 = vpop.xlane.xlu0 %2857
        %v2859 = vmul.f32 %v2855, %v759
        %v2860 = vmul.f32 %v2858, %v759
        %v2861 = vadd.f32 %v2859, 1e-05
        %v2862 = vadd.f32 %v2860, 1e-05
        %v2863 = vrsqrt.pop %v2861
        %v2864 = vmul.f32 %v2863, %v2861
        %v2865 = vmul.f32 %v2864, %v2863
        %v2866 = vmul.f32 0.5, %v2865
        %v2867 = vsub.f32 1.5, %v2866
        %v2868 = vmul.f32 %v2863, %v2867
        %vm2869 = vweird.f32 %v2861
        %vm2870 = vweird.f32 %v2863
        %vm2871 = vmor %vm2869, %vm2870
        %v2872 = vsel %vm2871, %v2863, %v2868
        %v2873 = vrsqrt.pop %v2862
        %v2874 = vmul.f32 %v2873, %v2862
        %v2875 = vmul.f32 %v2874, %v2873
        %v2876 = vmul.f32 0.5, %v2875
        %v2877 = vsub.f32 1.5, %v2876
        %v2878 = vmul.f32 %v2873, %v2877
        %vm2879 = vweird.f32 %v2862
        %vm2880 = vweird.f32 %v2873
        %vm2881 = vmor %vm2879, %vm2880
        %v2882 = vsel %vm2881, %v2873, %v2878
        %v2883 = vmul.f32 %v2849, %v2872
        %v2884 = vmul.f32 %v2850, %v2882
        %v2886 = vperm.slane %v2839, 0
        %v2888 = vmul.f32 %v2883, %v2886
        %v2889 = vmul.f32 %v2884, %v2886
        %v2891 = vperm.slane %v2840, 0
        %v2893 = vadd.f32 %v2888, %v2891
        %v2894 = vadd.f32 %v2889, %v2891
        %v2895 = vld [vmem:[%s721] sm:$0xff]
        %v2896 = vld [vmem:[%s721 + $0x8] sm:$0xff]
        %v2897 = vld [vmem:[%s721 + $0x10] sm:$0xff]
        %v2898 = vld [vmem:[%s721 + $0x18] sm:$0xff]
        %v2899 = vld [vmem:[%s724] sm:$0x1]
        %v2901 = vperm.slane %v2899, 0
        %v2904 = vsel %vm746, %v2893, 0
        %v2907 = vsel %vm746, %v2894, 0
        %2909 = vmatpush.msra.mxu0 0.0
        %2910 = vmatpush.msra.mxu0 0.0
        %2911 = vmatpush.msra.mxu0 0.0
        %2912 = vmatpush.msra.mxu0 0.0
        %2913 = vmatpush.msra.mxu0 0.0
        %2914 = vmatpush.msra.mxu0 0.0
        %2915 = vmatpush.msra.mxu0 0.0
        %2916 = vmatpush.msra.mxu0 0.0
        %2917 = vmatpush.msra.mxu0 0.0
        %2918 = vmatpush.msra.mxu0 0.0
        %2919 = vmatpush.msra.mxu0 0.0
        %2920 = vmatpush.msra.mxu0 0.0
        %v2921 = vand.u32 %v2898, 4294901760
        %2922 = vmatpush.msra.mxu0 %v2921
        %v2923 = vand.u32 %v2897, 4294901760
        %2924 = vmatpush.msra.mxu0 %v2923
        %v2925 = vand.u32 %v2896, 4294901760
        %2926 = vmatpush.msra.mxu0 %v2925
        %v2927 = vand.u32 %v2895, 4294901760
        %2928 = vmatpush.msra.mxu0 %v2927
        %v2929 = vand.u32 %v2904, 4294901760
        %v2930 = vsub.f32 %v2904, %v2929
        %v2931 = vand.u32 %v2930, 4294901760
        %v2932 = vsub.f32 %v2930, %v2931
        %v2933 = vand.u32 %v2932, 4294901760
        %2934 = vmatmul.f32.gmra.mxu0 %v2933
        %v2935 = vpop.f32.mrf.mxu0
        %v2936 = vadd.f32 %v2901, %v2935
        %v2937 = vand.u32 %v2907, 4294901760
        %v2938 = vsub.f32 %v2907, %v2937
        %v2939 = vand.u32 %v2938, 4294901760
        %v2940 = vsub.f32 %v2938, %v2939
        %v2941 = vand.u32 %v2940, 4294901760
        %2942 = vmatmul.f32.gmra.mxu0 %v2941
        %v2943 = vpop.f32.mrf.mxu0
        %v2944 = vadd.f32 %v2901, %v2943
        %2945 = vdwg.mxu0
        %2946 = vmatpush.msra.mxu0 0.0
        %2947 = vmatpush.msra.mxu0 0.0
        %2948 = vmatpush.msra.mxu0 0.0
        %2949 = vmatpush.msra.mxu0 0.0
        %2950 = vmatpush.msra.mxu0 0.0
        %2951 = vmatpush.msra.mxu0 0.0
        %2952 = vmatpush.msra.mxu0 0.0
        %2953 = vmatpush.msra.mxu0 0.0
        %2954 = vmatpush.msra.mxu0 0.0
        %2955 = vmatpush.msra.mxu0 0.0
        %2956 = vmatpush.msra.mxu0 0.0
        %2957 = vmatpush.msra.mxu0 0.0
        %v2958 = vand.u32 %v2898, 4294901760
        %v2959 = vsub.f32 %v2898, %v2958
        %v2960 = vand.u32 %v2959, 4294901760
        %v2961 = vsub.f32 %v2959, %v2960
        %v2962 = vand.u32 %v2961, 4294901760
        %2963 = vmatpush.msra.mxu0 %v2962
        %v2964 = vand.u32 %v2897, 4294901760
        %v2965 = vsub.f32 %v2897, %v2964
        %v2966 = vand.u32 %v2965, 4294901760
        %v2967 = vsub.f32 %v2965, %v2966
        %v2968 = vand.u32 %v2967, 4294901760
        %2969 = vmatpush.msra.mxu0 %v2968
        %v2970 = vand.u32 %v2896, 4294901760
        %v2971 = vsub.f32 %v2896, %v2970
        %v2972 = vand.u32 %v2971, 4294901760
        %v2973 = vsub.f32 %v2971, %v2972
        %v2974 = vand.u32 %v2973, 4294901760
        %2975 = vmatpush.msra.mxu0 %v2974
        %v2976 = vand.u32 %v2895, 4294901760
        %v2977 = vsub.f32 %v2895, %v2976
        %v2978 = vand.u32 %v2977, 4294901760
        %v2979 = vsub.f32 %v2977, %v2978
        %v2980 = vand.u32 %v2979, 4294901760
        %2981 = vmatpush.msra.mxu0 %v2980
        %v2982 = vand.u32 %v2904, 4294901760
        %2983 = vmatmul.f32.gmra.mxu0 %v2982
        %v2984 = vpop.f32.mrf.mxu0
        %v2985 = vadd.f32 %v2936, %v2984
        %v2986 = vand.u32 %v2907, 4294901760
        %2987 = vmatmul.f32.gmra.mxu0 %v2986
        %v2988 = vpop.f32.mrf.mxu0
        %v2989 = vadd.f32 %v2944, %v2988
        %2990 = vdwg.mxu0
        %2991 = vmatpush.msra.mxu0 0.0
        %2992 = vmatpush.msra.mxu0 0.0
        %2993 = vmatpush.msra.mxu0 0.0
        %2994 = vmatpush.msra.mxu0 0.0
        %2995 = vmatpush.msra.mxu0 0.0
        %2996 = vmatpush.msra.mxu0 0.0
        %2997 = vmatpush.msra.mxu0 0.0
        %2998 = vmatpush.msra.mxu0 0.0
        %2999 = vmatpush.msra.mxu0 0.0
        %3000 = vmatpush.msra.mxu0 0.0
        %3001 = vmatpush.msra.mxu0 0.0
        %3002 = vmatpush.msra.mxu0 0.0
        %v3003 = vand.u32 %v2898, 4294901760
        %v3004 = vsub.f32 %v2898, %v3003
        %3005 = vmatpush.msra.mxu0 %v3004
        %v3006 = vand.u32 %v2897, 4294901760
        %v3007 = vsub.f32 %v2897, %v3006
        %3008 = vmatpush.msra.mxu0 %v3007
        %v3009 = vand.u32 %v2896, 4294901760
        %v3010 = vsub.f32 %v2896, %v3009
        %3011 = vmatpush.msra.mxu0 %v3010
        %v3012 = vand.u32 %v2895, 4294901760
        %v3013 = vsub.f32 %v2895, %v3012
        %3014 = vmatpush.msra.mxu0 %v3013
        %v3015 = vand.u32 %v2904, 4294901760
        %v3016 = vsub.f32 %v2904, %v3015
        %3017 = vmatmul.f32.gmra.mxu0 %v3016
        %v3018 = vpop.f32.mrf.mxu0
        %v3019 = vadd.f32 %v2985, %v3018
        %v3020 = vand.u32 %v2907, 4294901760
        %v3021 = vsub.f32 %v2907, %v3020
        %3022 = vmatmul.f32.gmra.mxu0 %v3021
        %v3023 = vpop.f32.mrf.mxu0
        %v3024 = vadd.f32 %v2989, %v3023
        %3025 = vdwg.mxu0
        %3026 = vmatpush.msra.mxu0 0.0
        %3027 = vmatpush.msra.mxu0 0.0
        %3028 = vmatpush.msra.mxu0 0.0
        %3029 = vmatpush.msra.mxu0 0.0
        %3030 = vmatpush.msra.mxu0 0.0
        %3031 = vmatpush.msra.mxu0 0.0
        %3032 = vmatpush.msra.mxu0 0.0
        %3033 = vmatpush.msra.mxu0 0.0
        %3034 = vmatpush.msra.mxu0 0.0
        %3035 = vmatpush.msra.mxu0 0.0
        %3036 = vmatpush.msra.mxu0 0.0
        %3037 = vmatpush.msra.mxu0 0.0
        %v3038 = vand.u32 %v2898, 4294901760
        %3039 = vmatpush.msra.mxu0 %v3038
        %v3040 = vand.u32 %v2897, 4294901760
        %3041 = vmatpush.msra.mxu0 %v3040
        %v3042 = vand.u32 %v2896, 4294901760
        %3043 = vmatpush.msra.mxu0 %v3042
        %v3044 = vand.u32 %v2895, 4294901760
        %3045 = vmatpush.msra.mxu0 %v3044
        %v3046 = vand.u32 %v2904, 4294901760
        %v3047 = vsub.f32 %v2904, %v3046
        %v3048 = vand.u32 %v3047, 4294901760
        %3049 = vmatmul.f32.gmra.mxu0 %v3048
        %v3050 = vpop.f32.mrf.mxu0
        %v3051 = vadd.f32 %v3019, %v3050
        %v3052 = vand.u32 %v2907, 4294901760
        %v3053 = vsub.f32 %v2907, %v3052
        %v3054 = vand.u32 %v3053, 4294901760
        %3055 = vmatmul.f32.gmra.mxu0 %v3054
        %v3056 = vpop.f32.mrf.mxu0
        %v3057 = vadd.f32 %v3024, %v3056
        %3058 = vdwg.mxu0
        %3059 = vmatpush.msra.mxu0 0.0
        %3060 = vmatpush.msra.mxu0 0.0
        %3061 = vmatpush.msra.mxu0 0.0
        %3062 = vmatpush.msra.mxu0 0.0
        %3063 = vmatpush.msra.mxu0 0.0
        %3064 = vmatpush.msra.mxu0 0.0
        %3065 = vmatpush.msra.mxu0 0.0
        %3066 = vmatpush.msra.mxu0 0.0
        %3067 = vmatpush.msra.mxu0 0.0
        %3068 = vmatpush.msra.mxu0 0.0
        %3069 = vmatpush.msra.mxu0 0.0
        %3070 = vmatpush.msra.mxu0 0.0
        %v3071 = vand.u32 %v2898, 4294901760
        %v3072 = vsub.f32 %v2898, %v3071
        %v3073 = vand.u32 %v3072, 4294901760
        %3074 = vmatpush.msra.mxu0 %v3073
        %v3075 = vand.u32 %v2897, 4294901760
        %v3076 = vsub.f32 %v2897, %v3075
        %v3077 = vand.u32 %v3076, 4294901760
        %3078 = vmatpush.msra.mxu0 %v3077
        %v3079 = vand.u32 %v2896, 4294901760
        %v3080 = vsub.f32 %v2896, %v3079
        %v3081 = vand.u32 %v3080, 4294901760
        %3082 = vmatpush.msra.mxu0 %v3081
        %v3083 = vand.u32 %v2895, 4294901760
        %v3084 = vsub.f32 %v2895, %v3083
        %v3085 = vand.u32 %v3084, 4294901760
        %3086 = vmatpush.msra.mxu0 %v3085
        %v3087 = vand.u32 %v2904, 4294901760
        %3088 = vmatmul.f32.gmra.mxu0 %v3087
        %v3089 = vpop.f32.mrf.mxu0
        %v3090 = vadd.f32 %v3051, %v3089
        %v3091 = vand.u32 %v2907, 4294901760
        %3092 = vmatmul.f32.gmra.mxu0 %v3091
        %v3093 = vpop.f32.mrf.mxu0
        %v3094 = vadd.f32 %v3057, %v3093
        %3095 = vdwg.mxu0
        %3096 = vmatpush.msra.mxu0 0.0
        %3097 = vmatpush.msra.mxu0 0.0
        %3098 = vmatpush.msra.mxu0 0.0
        %3099 = vmatpush.msra.mxu0 0.0
        %3100 = vmatpush.msra.mxu0 0.0
        %3101 = vmatpush.msra.mxu0 0.0
        %3102 = vmatpush.msra.mxu0 0.0
        %3103 = vmatpush.msra.mxu0 0.0
        %3104 = vmatpush.msra.mxu0 0.0
        %3105 = vmatpush.msra.mxu0 0.0
        %3106 = vmatpush.msra.mxu0 0.0
        %3107 = vmatpush.msra.mxu0 0.0
        %v3108 = vand.u32 %v2898, 4294901760
        %3109 = vmatpush.msra.mxu0 %v3108
        %v3110 = vand.u32 %v2897, 4294901760
        %3111 = vmatpush.msra.mxu0 %v3110
        %v3112 = vand.u32 %v2896, 4294901760
        %3113 = vmatpush.msra.mxu0 %v3112
        %v3114 = vand.u32 %v2895, 4294901760
        %3115 = vmatpush.msra.mxu0 %v3114
        %v3116 = vand.u32 %v2904, 4294901760
        %3117 = vmatmul.f32.gmra.mxu0 %v3116
        %v3118 = vpop.f32.mrf.mxu0
        %v3119 = vadd.f32 %v3090, %v3118
        %v3120 = vand.u32 %v2907, 4294901760
        %3121 = vmatmul.f32.gmra.mxu0 %v3120
        %v3122 = vpop.f32.mrf.mxu0
        %v3123 = vadd.f32 %v3094, %v3122
        %3124 = vdwg.mxu0
        %v3125 = vmul.f32 %v3119, 0.5
        %v3126 = vmul.f32 %v3123, 0.5
        %v3127 = vmul.f32 %v3119, 0.70710677
        %v3128 = vmul.f32 %v3123, 0.70710677
        %v3129 = vmul.f32 %v3127, %v3127
        %v3130 = vmin.f32 16.0, %v3129
        %v3131 = vmul.f32 %v3130, 2.1237322e-06
        %v3132 = vadd.f32 %v3131, 0.00028619796
        %v3133 = vmul.f32 %v3130, %v3132
        %v3134 = vadd.f32 %v3133, 0.0036580483
        %v3135 = vmul.f32 %v3130, %v3134
        %v3136 = vadd.f32 %v3135, 0.05243302
        %v3137 = vmul.f32 %v3130, %v3136
        %v3138 = vadd.f32 %v3137, 0.18741608
        %v3139 = vmul.f32 %v3130, %v3138
        %v3140 = vadd.f32 %v3139, 1.1283791
        %v3141 = vmul.f32 %v3127, %v3140
        %v3142 = vmul.f32 %v3130, 3.8918573e-05
        %v3143 = vadd.f32 %v3142, 0.001143296
        %v3144 = vmul.f32 %v3130, %v3143
        %v3145 = vadd.f32 %v3144, 0.014752088
        %v3146 = vmul.f32 %v3130, %v3145
        %v3147 = vadd.f32 %v3146, 0.112945676
        %v3148 = vmul.f32 %v3130, %v3147
        %v3149 = vadd.f32 %v3148, 0.4994258
        %v3150 = vmul.f32 %v3130, %v3149
        %v3151 = vadd.f32 %v3150, 1.0
        %v3152 = vrcp.pop %v3151
        %v3153 = vmul.f32 %v3151, %v3152
        %v3154 = vsub.f32 1.0, %v3153
        %v3155 = vmul.f32 %v3152, %v3154
        %v3156 = vadd.f32 %v3152, %v3155
        %vm3157 = vweird.f32 %v3151
        %vm3158 = vweird.f32 %v3152
        %vm3159 = vmor %vm3157, %vm3158
        %v3160 = vsel %vm3159, %v3152, %v3156
        %v3161 = vand.u32 2147483647, %v3151
        %vm3162 = vcmp.eq.f32.partialorder %v3161, 8.507059e+37
        %v3163 = vand.u32 %v3151, 2147483648
        %v3164 = vor.u32 1.1754944e-38, %v3163
        %v3165 = vsel %vm3162, %v3164, %v3160
        %v3166 = vmul.f32 %v3141, %v3165
        %v3167 = vmin.f32 %v3166, 1.0
        %v3168 = vmax.f32 %v3167, -1.0
        %v3169 = vmul.f32 %v3128, %v3128
        %v3170 = vmin.f32 16.0, %v3169
        %v3171 = vmul.f32 %v3170, 2.1237322e-06
        %v3172 = vadd.f32 %v3171, 0.00028619796
        %v3173 = vmul.f32 %v3170, %v3172
        %v3174 = vadd.f32 %v3173, 0.0036580483
        %v3175 = vmul.f32 %v3170, %v3174
        %v3176 = vadd.f32 %v3175, 0.05243302
        %v3177 = vmul.f32 %v3170, %v3176
        %v3178 = vadd.f32 %v3177, 0.18741608
        %v3179 = vmul.f32 %v3170, %v3178
        %v3180 = vadd.f32 %v3179, 1.1283791
        %v3181 = vmul.f32 %v3128, %v3180
        %v3182 = vmul.f32 %v3170, 3.8918573e-05
        %v3183 = vadd.f32 %v3182, 0.001143296
        %v3184 = vmul.f32 %v3170, %v3183
        %v3185 = vadd.f32 %v3184, 0.014752088
        %v3186 = vmul.f32 %v3170, %v3185
        %v3187 = vadd.f32 %v3186, 0.112945676
        %v3188 = vmul.f32 %v3170, %v3187
        %v3189 = vadd.f32 %v3188, 0.4994258
        %v3190 = vmul.f32 %v3170, %v3189
        %v3191 = vadd.f32 %v3190, 1.0
        %v3192 = vrcp.pop %v3191
        %v3193 = vmul.f32 %v3191, %v3192
        %v3194 = vsub.f32 1.0, %v3193
        %v3195 = vmul.f32 %v3192, %v3194
        %v3196 = vadd.f32 %v3192, %v3195
        %vm3197 = vweird.f32 %v3191
        %vm3198 = vweird.f32 %v3192
        %vm3199 = vmor %vm3197, %vm3198
        %v3200 = vsel %vm3199, %v3192, %v3196
        %v3201 = vand.u32 2147483647, %v3191
        %vm3202 = vcmp.eq.f32.partialorder %v3201, 8.507059e+37
        %v3203 = vand.u32 %v3191, 2147483648
        %v3204 = vor.u32 1.1754944e-38, %v3203
        %v3205 = vsel %vm3202, %v3204, %v3200
        %v3206 = vmul.f32 %v3181, %v3205
        %v3207 = vmin.f32 %v3206, 1.0
        %v3208 = vmax.f32 %v3207, -1.0
        %v3209 = vadd.f32 %v3168, 1.0
        %v3210 = vadd.f32 %v3208, 1.0
        %v3211 = vmul.f32 %v3125, %v3209
        %v3212 = vmul.f32 %v3126, %v3210
        %v3213 = vld [vmem:[%s729] sm:$0xff]
        %v3214 = vld [vmem:[%s729 + $0x8] sm:$0xff]
        %v3215 = vld [vmem:[%s729 + $0x10] sm:$0xff]
        %v3216 = vld [vmem:[%s729 + $0x18] sm:$0xff]
        %v3217 = vld [vmem:[%s729 + $0x20] sm:$0xff]
        %v3218 = vld [vmem:[%s729 + $0x28] sm:$0xff]
        %v3219 = vld [vmem:[%s729 + $0x30] sm:$0xff]
        %v3220 = vld [vmem:[%s729 + $0x38] sm:$0xff]
        %v3221 = vld [vmem:[%s732] sm:$0x1]
        %v3223 = vperm.slane %v3221, 0
        %vm3225 = vcmask 523264
        %v3227 = vsel %vm3225, %v3211, 0
        %v3230 = vsel %vm3225, %v3212, 0
        %3232 = vmatpush.msra.mxu0 0.0
        %3233 = vmatpush.msra.mxu0 0.0
        %3234 = vmatpush.msra.mxu0 0.0
        %3235 = vmatpush.msra.mxu0 0.0
        %3236 = vmatpush.msra.mxu0 0.0
        %3237 = vmatpush.msra.mxu0 0.0
        %3238 = vmatpush.msra.mxu0 0.0
        %3239 = vmatpush.msra.mxu0 0.0
        %v3240 = vand.u32 %v3220, 4294901760
        %3241 = vmatpush.msra.mxu0 %v3240
        %v3242 = vand.u32 %v3219, 4294901760
        %3243 = vmatpush.msra.mxu0 %v3242
        %v3244 = vand.u32 %v3218, 4294901760
        %3245 = vmatpush.msra.mxu0 %v3244
        %v3246 = vand.u32 %v3217, 4294901760
        %3247 = vmatpush.msra.mxu0 %v3246
        %v3248 = vand.u32 %v3216, 4294901760
        %3249 = vmatpush.msra.mxu0 %v3248
        %v3250 = vand.u32 %v3215, 4294901760
        %3251 = vmatpush.msra.mxu0 %v3250
        %v3252 = vand.u32 %v3214, 4294901760
        %3253 = vmatpush.msra.mxu0 %v3252
        %v3254 = vand.u32 %v3213, 4294901760
        %3255 = vmatpush.msra.mxu0 %v3254
        %v3256 = vand.u32 %v3227, 4294901760
        %v3257 = vsub.f32 %v3227, %v3256
        %v3258 = vand.u32 %v3257, 4294901760
        %v3259 = vsub.f32 %v3257, %v3258
        %v3260 = vand.u32 %v3259, 4294901760
        %3261 = vmatmul.f32.gmra.mxu0 %v3260
        %v3262 = vpop.f32.mrf.mxu0
        %v3263 = vadd.f32 %v3223, %v3262
        %v3264 = vand.u32 %v3230, 4294901760
        %v3265 = vsub.f32 %v3230, %v3264
        %v3266 = vand.u32 %v3265, 4294901760
        %v3267 = vsub.f32 %v3265, %v3266
        %v3268 = vand.u32 %v3267, 4294901760
        %3269 = vmatmul.f32.gmra.mxu0 %v3268
        %v3270 = vpop.f32.mrf.mxu0
        %v3271 = vadd.f32 %v3223, %v3270
        %3272 = vdwg.mxu0
        %3273 = vmatpush.msra.mxu0 0.0
        %3274 = vmatpush.msra.mxu0 0.0
        %3275 = vmatpush.msra.mxu0 0.0
        %3276 = vmatpush.msra.mxu0 0.0
        %3277 = vmatpush.msra.mxu0 0.0
        %3278 = vmatpush.msra.mxu0 0.0
        %3279 = vmatpush.msra.mxu0 0.0
        %3280 = vmatpush.msra.mxu0 0.0
        %v3281 = vand.u32 %v3220, 4294901760
        %v3282 = vsub.f32 %v3220, %v3281
        %v3283 = vand.u32 %v3282, 4294901760
        %v3284 = vsub.f32 %v3282, %v3283
        %v3285 = vand.u32 %v3284, 4294901760
        %3286 = vmatpush.msra.mxu0 %v3285
        %v3287 = vand.u32 %v3219, 4294901760
        %v3288 = vsub.f32 %v3219, %v3287
        %v3289 = vand.u32 %v3288, 4294901760
        %v3290 = vsub.f32 %v3288, %v3289
        %v3291 = vand.u32 %v3290, 4294901760
        %3292 = vmatpush.msra.mxu0 %v3291
        %v3293 = vand.u32 %v3218, 4294901760
        %v3294 = vsub.f32 %v3218, %v3293
        %v3295 = vand.u32 %v3294, 4294901760
        %v3296 = vsub.f32 %v3294, %v3295
        %v3297 = vand.u32 %v3296, 4294901760
        %3298 = vmatpush.msra.mxu0 %v3297
        %v3299 = vand.u32 %v3217, 4294901760
        %v3300 = vsub.f32 %v3217, %v3299
        %v3301 = vand.u32 %v3300, 4294901760
        %v3302 = vsub.f32 %v3300, %v3301
        %v3303 = vand.u32 %v3302, 4294901760
        %3304 = vmatpush.msra.mxu0 %v3303
        %v3305 = vand.u32 %v3216, 4294901760
        %v3306 = vsub.f32 %v3216, %v3305
        %v3307 = vand.u32 %v3306, 4294901760
        %v3308 = vsub.f32 %v3306, %v3307
        %v3309 = vand.u32 %v3308, 4294901760
        %3310 = vmatpush.msra.mxu0 %v3309
        %v3311 = vand.u32 %v3215, 4294901760
        %v3312 = vsub.f32 %v3215, %v3311
        %v3313 = vand.u32 %v3312, 4294901760
        %v3314 = vsub.f32 %v3312, %v3313
        %v3315 = vand.u32 %v3314, 4294901760
        %3316 = vmatpush.msra.mxu0 %v3315
        %v3317 = vand.u32 %v3214, 4294901760
        %v3318 = vsub.f32 %v3214, %v3317
        %v3319 = vand.u32 %v3318, 4294901760
        %v3320 = vsub.f32 %v3318, %v3319
        %v3321 = vand.u32 %v3320, 4294901760
        %3322 = vmatpush.msra.mxu0 %v3321
        %v3323 = vand.u32 %v3213, 4294901760
        %v3324 = vsub.f32 %v3213, %v3323
        %v3325 = vand.u32 %v3324, 4294901760
        %v3326 = vsub.f32 %v3324, %v3325
        %v3327 = vand.u32 %v3326, 4294901760
        %3328 = vmatpush.msra.mxu0 %v3327
        %v3329 = vand.u32 %v3227, 4294901760
        %3330 = vmatmul.f32.gmra.mxu0 %v3329
        %v3331 = vpop.f32.mrf.mxu0
        %v3332 = vadd.f32 %v3263, %v3331
        %v3333 = vand.u32 %v3230, 4294901760
        %3334 = vmatmul.f32.gmra.mxu0 %v3333
        %v3335 = vpop.f32.mrf.mxu0
        %v3336 = vadd.f32 %v3271, %v3335
        %3337 = vdwg.mxu0
        %3338 = vmatpush.msra.mxu0 0.0
        %3339 = vmatpush.msra.mxu0 0.0
        %3340 = vmatpush.msra.mxu0 0.0
        %3341 = vmatpush.msra.mxu0 0.0
        %3342 = vmatpush.msra.mxu0 0.0
        %3343 = vmatpush.msra.mxu0 0.0
        %3344 = vmatpush.msra.mxu0 0.0
        %3345 = vmatpush.msra.mxu0 0.0
        %v3346 = vand.u32 %v3220, 4294901760
        %v3347 = vsub.f32 %v3220, %v3346
        %3348 = vmatpush.msra.mxu0 %v3347
        %v3349 = vand.u32 %v3219, 4294901760
        %v3350 = vsub.f32 %v3219, %v3349
        %3351 = vmatpush.msra.mxu0 %v3350
        %v3352 = vand.u32 %v3218, 4294901760
        %v3353 = vsub.f32 %v3218, %v3352
        %3354 = vmatpush.msra.mxu0 %v3353
        %v3355 = vand.u32 %v3217, 4294901760
        %v3356 = vsub.f32 %v3217, %v3355
        %3357 = vmatpush.msra.mxu0 %v3356
        %v3358 = vand.u32 %v3216, 4294901760
        %v3359 = vsub.f32 %v3216, %v3358
        %3360 = vmatpush.msra.mxu0 %v3359
        %v3361 = vand.u32 %v3215, 4294901760
        %v3362 = vsub.f32 %v3215, %v3361
        %3363 = vmatpush.msra.mxu0 %v3362
        %v3364 = vand.u32 %v3214, 4294901760
        %v3365 = vsub.f32 %v3214, %v3364
        %3366 = vmatpush.msra.mxu0 %v3365
        %v3367 = vand.u32 %v3213, 4294901760
        %v3368 = vsub.f32 %v3213, %v3367
        %3369 = vmatpush.msra.mxu0 %v3368
        %v3370 = vand.u32 %v3227, 4294901760
        %v3371 = vsub.f32 %v3227, %v3370
        %3372 = vmatmul.f32.gmra.mxu0 %v3371
        %v3373 = vpop.f32.mrf.mxu0
        %v3374 = vadd.f32 %v3332, %v3373
        %v3375 = vand.u32 %v3230, 4294901760
        %v3376 = vsub.f32 %v3230, %v3375
        %3377 = vmatmul.f32.gmra.mxu0 %v3376
        %v3378 = vpop.f32.mrf.mxu0
        %v3379 = vadd.f32 %v3336, %v3378
        %3380 = vdwg.mxu0
        %3381 = vmatpush.msra.mxu0 0.0
        %3382 = vmatpush.msra.mxu0 0.0
        %3383 = vmatpush.msra.mxu0 0.0
        %3384 = vmatpush.msra.mxu0 0.0
        %3385 = vmatpush.msra.mxu0 0.0
        %3386 = vmatpush.msra.mxu0 0.0
        %3387 = vmatpush.msra.mxu0 0.0
        %3388 = vmatpush.msra.mxu0 0.0
        %v3389 = vand.u32 %v3220, 4294901760
        %3390 = vmatpush.msra.mxu0 %v3389
        %v3391 = vand.u32 %v3219, 4294901760
        %3392 = vmatpush.msra.mxu0 %v3391
        %v3393 = vand.u32 %v3218, 4294901760
        %3394 = vmatpush.msra.mxu0 %v3393
        %v3395 = vand.u32 %v3217, 4294901760
        %3396 = vmatpush.msra.mxu0 %v3395
        %v3397 = vand.u32 %v3216, 4294901760
        %3398 = vmatpush.msra.mxu0 %v3397
        %v3399 = vand.u32 %v3215, 4294901760
        %3400 = vmatpush.msra.mxu0 %v3399
        %v3401 = vand.u32 %v3214, 4294901760
        %3402 = vmatpush.msra.mxu0 %v3401
        %v3403 = vand.u32 %v3213, 4294901760
        %3404 = vmatpush.msra.mxu0 %v3403
        %v3405 = vand.u32 %v3227, 4294901760
        %v3406 = vsub.f32 %v3227, %v3405
        %v3407 = vand.u32 %v3406, 4294901760
        %3408 = vmatmul.f32.gmra.mxu0 %v3407
        %v3409 = vpop.f32.mrf.mxu0
        %v3410 = vadd.f32 %v3374, %v3409
        %v3411 = vand.u32 %v3230, 4294901760
        %v3412 = vsub.f32 %v3230, %v3411
        %v3413 = vand.u32 %v3412, 4294901760
        %3414 = vmatmul.f32.gmra.mxu0 %v3413
        %v3415 = vpop.f32.mrf.mxu0
        %v3416 = vadd.f32 %v3379, %v3415
        %3417 = vdwg.mxu0
        %3418 = vmatpush.msra.mxu0 0.0
        %3419 = vmatpush.msra.mxu0 0.0
        %3420 = vmatpush.msra.mxu0 0.0
        %3421 = vmatpush.msra.mxu0 0.0
        %3422 = vmatpush.msra.mxu0 0.0
        %3423 = vmatpush.msra.mxu0 0.0
        %3424 = vmatpush.msra.mxu0 0.0
        %3425 = vmatpush.msra.mxu0 0.0
        %v3426 = vand.u32 %v3220, 4294901760
        %v3427 = vsub.f32 %v3220, %v3426
        %v3428 = vand.u32 %v3427, 4294901760
        %3429 = vmatpush.msra.mxu0 %v3428
        %v3430 = vand.u32 %v3219, 4294901760
        %v3431 = vsub.f32 %v3219, %v3430
        %v3432 = vand.u32 %v3431, 4294901760
        %3433 = vmatpush.msra.mxu0 %v3432
        %v3434 = vand.u32 %v3218, 4294901760
        %v3435 = vsub.f32 %v3218, %v3434
        %v3436 = vand.u32 %v3435, 4294901760
        %3437 = vmatpush.msra.mxu0 %v3436
        %v3438 = vand.u32 %v3217, 4294901760
        %v3439 = vsub.f32 %v3217, %v3438
        %v3440 = vand.u32 %v3439, 4294901760
        %3441 = vmatpush.msra.mxu0 %v3440
        %v3442 = vand.u32 %v3216, 4294901760
        %v3443 = vsub.f32 %v3216, %v3442
        %v3444 = vand.u32 %v3443, 4294901760
        %3445 = vmatpush.msra.mxu0 %v3444
        %v3446 = vand.u32 %v3215, 4294901760
        %v3447 = vsub.f32 %v3215, %v3446
        %v3448 = vand.u32 %v3447, 4294901760
        %3449 = vmatpush.msra.mxu0 %v3448
        %v3450 = vand.u32 %v3214, 4294901760
        %v3451 = vsub.f32 %v3214, %v3450
        %v3452 = vand.u32 %v3451, 4294901760
        %3453 = vmatpush.msra.mxu0 %v3452
        %v3454 = vand.u32 %v3213, 4294901760
        %v3455 = vsub.f32 %v3213, %v3454
        %v3456 = vand.u32 %v3455, 4294901760
        %3457 = vmatpush.msra.mxu0 %v3456
        %v3458 = vand.u32 %v3227, 4294901760
        %3459 = vmatmul.f32.gmra.mxu0 %v3458
        %v3460 = vpop.f32.mrf.mxu0
        %v3461 = vadd.f32 %v3410, %v3460
        %v3462 = vand.u32 %v3230, 4294901760
        %3463 = vmatmul.f32.gmra.mxu0 %v3462
        %v3464 = vpop.f32.mrf.mxu0
        %v3465 = vadd.f32 %v3416, %v3464
        %3466 = vdwg.mxu0
        %3467 = vmatpush.msra.mxu0 0.0
        %3468 = vmatpush.msra.mxu0 0.0
        %3469 = vmatpush.msra.mxu0 0.0
        %3470 = vmatpush.msra.mxu0 0.0
        %3471 = vmatpush.msra.mxu0 0.0
        %3472 = vmatpush.msra.mxu0 0.0
        %3473 = vmatpush.msra.mxu0 0.0
        %3474 = vmatpush.msra.mxu0 0.0
        %v3475 = vand.u32 %v3220, 4294901760
        %3476 = vmatpush.msra.mxu0 %v3475
        %v3477 = vand.u32 %v3219, 4294901760
        %3478 = vmatpush.msra.mxu0 %v3477
        %v3479 = vand.u32 %v3218, 4294901760
        %3480 = vmatpush.msra.mxu0 %v3479
        %v3481 = vand.u32 %v3217, 4294901760
        %3482 = vmatpush.msra.mxu0 %v3481
        %v3483 = vand.u32 %v3216, 4294901760
        %3484 = vmatpush.msra.mxu0 %v3483
        %v3485 = vand.u32 %v3215, 4294901760
        %3486 = vmatpush.msra.mxu0 %v3485
        %v3487 = vand.u32 %v3214, 4294901760
        %3488 = vmatpush.msra.mxu0 %v3487
        %v3489 = vand.u32 %v3213, 4294901760
        %3490 = vmatpush.msra.mxu0 %v3489
        %v3491 = vand.u32 %v3227, 4294901760
        %3492 = vmatmul.f32.gmra.mxu0 %v3491
        %v3493 = vpop.f32.mrf.mxu0
        %v3494 = vadd.f32 %v3461, %v3493
        %v3495 = vand.u32 %v3230, 4294901760
        %3496 = vmatmul.f32.gmra.mxu0 %v3495
        %v3497 = vpop.f32.mrf.mxu0
        %v3498 = vadd.f32 %v3465, %v3497
        %3499 = vdwg.mxu0
        %v3500 = vadd.f32 %v2837, %v3494
        %v3501 = vadd.f32 %v2838, %v3498
        %3502 = vst.msk [vmem:[#allocation2] sm:$0xff] %vm746, %v3500
        %3503 = vst.msk [vmem:[#allocation2 + $0x8] sm:$0xff] %vm746, %v3501
        %p3504 = scmp.eq.s32.totalorder %s29, 1
        // Predicated region
        $region93: #{transformer_forward.1} parent=87 // pred_check
          %p3505 = pneg %p3504
        $region94: #{transformer_forward.1} parent=87 // pred_check_branch
          %3507 = sbr.rel (%p3505) target = $region96
        $region95: #{transformer_forward.1} parent=87 // pred_region
          %v3508 = vld [vmem:[%s15] sm:$0x1]
          %v3509 = vld [vmem:[%s16] sm:$0x1]
          %v3510 = vsel %vm746, %v3500, 0.0
          %3511 = vadd.xlane.f32.xlu0 %v3510
          %v3512 = vpop.xlane.xlu0 %3511
          %v3513 = vsel %vm746, %v3501, 0.0
          %3514 = vadd.xlane.f32.xlu0 %v3513
          %v3515 = vpop.xlane.xlu0 %3514
          %v3516 = vmul.f32 %v3512, %v759
          %v3517 = vmul.f32 %v3515, %v759
          %v3518 = vsub.f32 %v3500, %v3516
          %v3519 = vsub.f32 %v3501, %v3517
          %v3520 = vmul.f32 %v3518, %v3518
          %v3521 = vmul.f32 %v3519, %v3519
          %v3522 = vsel %vm746, %v3520, 0.0
          %3523 = vadd.xlane.f32.xlu0 %v3522
          %v3524 = vpop.xlane.xlu0 %3523
          %v3525 = vsel %vm746, %v3521, 0.0
          %3526 = vadd.xlane.f32.xlu0 %v3525
          %v3527 = vpop.xlane.xlu0 %3526
          %v3528 = vmul.f32 %v3524, %v759
          %v3529 = vmul.f32 %v3527, %v759
          %v3530 = vadd.f32 %v3528, 1e-05
          %v3531 = vadd.f32 %v3529, 1e-05
          %v3532 = vrsqrt.pop %v3530
          %v3533 = vmul.f32 %v3532, %v3530
          %v3534 = vmul.f32 %v3533, %v3532
          %v3535 = vmul.f32 0.5, %v3534
          %v3536 = vsub.f32 1.5, %v3535
          %v3537 = vmul.f32 %v3532, %v3536
          %vm3538 = vweird.f32 %v3530
          %vm3539 = vweird.f32 %v3532
          %vm3540 = vmor %vm3538, %vm3539
          %v3541 = vsel %vm3540, %v3532, %v3537
          %v3542 = vrsqrt.pop %v3531
          %v3543 = vmul.f32 %v3542, %v3531
          %v3544 = vmul.f32 %v3543, %v3542
          %v3545 = vmul.f32 0.5, %v3544
          %v3546 = vsub.f32 1.5, %v3545
          %v3547 = vmul.f32 %v3542, %v3546
          %vm3548 = vweird.f32 %v3531
          %vm3549 = vweird.f32 %v3542
          %vm3550 = vmor %vm3548, %vm3549
          %v3551 = vsel %vm3550, %v3542, %v3547
          %v3552 = vmul.f32 %v3518, %v3541
          %v3553 = vmul.f32 %v3519, %v3551
          %v3555 = vperm.slane %v3508, 0
          %v3557 = vmul.f32 %v3552, %v3555
          %v3558 = vmul.f32 %v3553, %v3555
          %v3560 = vperm.slane %v3509, 0
          %v3562 = vadd.f32 %v3557, %v3560
          %v3563 = vadd.f32 %v3558, %v3560
          %3564 = vst.msk [vmem:[#allocation3] sm:$0xff] %vm746, %v3562
          %3565 = vst.msk [vmem:[#allocation3 + $0x8] sm:$0xff] %vm746, %v3563
        $region96: #{transformer_forward.1} parent=87 // pred_fallthru
          _
        // Predicated region
        $region97: #{transformer_forward.1} parent=87 // pred_check
          %p3566 = pneg %p464
        $region98: #{transformer_forward.1} parent=87 // pred_check_branch
          %3568 = sbr.rel (%p3566) target = $region100
        $region99: #{transformer_forward.1} parent=87 // pred_region
          %3570 = vsyncadd [#allocation4], 0
          %s3571 = sshll.u32 [#allocation3], 4
          %s3572 = int_to_ptr.vmem [resolvable:$true] %s3571
          %s3573 = sshll.u32 %s17, 4
          %s3574 = int_to_ptr.hbm [resolvable:$true] %s3573
          %3579 = dma.vmem_to_hbm [thread:$0]  %s3572, 256, %s3574, [#allocation4], 128, 128, 8
        $region100: #{transformer_forward.1} parent=87 // pred_fallthru
          _
        // Predicated region
        $region101: #{transformer_forward.1} parent=87 // pred_check
          %p3580 = pneg %p464
        $region102: #{transformer_forward.1} parent=87 // pred_check_branch
          %3582 = sbr.rel (%p3580) target = $region104
        $region103: #{transformer_forward.1} parent=87 // pred_region
          %3584 = dma.done [#allocation4], 256
        $region104: #{transformer_forward.1} parent=87 // pred_fallthru
          _
      $region88: #{transformer_forward.1} parent=5 // pred_fallthru
        _
      %p3585 = scmp.le.s32.totalorder 2, %s24
      // Predicated region
      $region105: #{transformer_forward.1} parent=5 // pred_check
        %p3586 = pneg %p3585
      $region106: #{transformer_forward.1} parent=5 // pred_check_branch
        %3588 = sbr.rel (%p3586) target = $region108
      $region107: #{transformer_forward.1} parent=5 // pred_region
        %s3589 = ssub.s32 %s24, 2
      $region108: #{transformer_forward.1} parent=5 // pred_fallthru
        _
    $region6: #{transformer_forward.1} parent=1 // loop_footer
      %s28 = sadd.s32 1, %s24
    $region7: #{transformer_forward.1} parent=1 // loop_footer_branch
      %23 = sbr.rel target = $region3
    $region8: #{transformer_forward.1} parent=1 // loop_exit
      _
    %3590 = vsyncpa [#allocation4], 1
    %s3591 = scalar_lea.sflag [#allocation4], 1
    %3592 = vsyncpa %s3591, 1

</llo_original>
